<compile_context>
chip_gen: v7x
topology: tpu7x:2x2x1
jax: 0.10.0
libtpu: 0.0.40
codegen_flags: <defaults>
</compile_context>

<pallas_src>
import functools

import jax
import jax.numpy as jnp
from jax.experimental import pallas as pl
from jax.experimental.pallas import tpu as pltpu


def _round_up(x, m):
    return (x + m - 1) // m * m


# ---------------------------------------------------------------------------
# Pallas kernel: y = x @ w + b (+ optional ReLU).  M is tiled over the grid;
# the pre-padded weight / bias blocks stay resident across all grid steps.
# ---------------------------------------------------------------------------
def _linear_kernel(x_ref, w_ref, b_ref, o_ref, *, relu):
    acc = jnp.dot(x_ref[...], w_ref[...], preferred_element_type=jnp.float32)
    acc = acc + b_ref[...]
    if relu:
        acc = jnp.maximum(acc, 0.0)
    o_ref[...] = acc.astype(o_ref.dtype)


def linear_pallas(x, w_padded, b_padded, n_out, relu=False, tile_m=1024):
    """x: [M, K] f32; w_padded: [Kp, Np]; b_padded: [1, Np] (both pre-padded
    at init).  Returns [M, n_out] f32.  tile_m bounds per-block VMEM (a
    1024x128 f32 block pair double-buffered stays ~2 MiB, fine on all chips)."""
    M, K = x.shape
    Kp, Np = w_padded.shape
    assert K <= Kp and n_out <= Np

    # Pick the block count first, then the smallest 8-aligned tile covering M:
    # minimal zero padding and at most ceil(M / tile_m) grid steps.
    g = max(1, pl.cdiv(M, tile_m))
    tm = _round_up(pl.cdiv(M, g), 8)
    Mp = g * tm

    if (Mp, Kp) != (M, K):        # only conv1 (K=48), conv2/head (M%8!=0) hit this
        x = jnp.pad(x, ((0, Mp - M), (0, Kp - K)))

    out = pl.pallas_call(
        functools.partial(_linear_kernel, relu=relu),
        out_shape=jax.ShapeDtypeStruct((Mp, Np), jnp.float32),
        grid=(g,),
        in_specs=[
            pl.BlockSpec((tm, Kp), lambda i: (i, 0)),
            pl.BlockSpec((Kp, Np), lambda i: (0, 0)),
            pl.BlockSpec((1, Np), lambda i: (0, 0)),
        ],
        out_specs=pl.BlockSpec((tm, Np), lambda i: (i, 0)),
        compiler_params=pltpu.CompilerParams(
            dimension_semantics=("parallel",)),
    )(x, w_padded, b_padded)

    if (Mp, Np) != (M, n_out):
        out = out[:M, :n_out]
    return out


# ---------------------------------------------------------------------------
# im2col for NHWC, VALID padding.  Feature ordering is (KH, KW, C) with the
# channel dim kept last (lane-dense); weights are flattened to match at init.
# ---------------------------------------------------------------------------
def extract_patches_nhwc(x, k, s):
    B, H, W, C = x.shape
    OH = (H - k) // s + 1
    OW = (W - k) // s + 1
    slabs = []
    for kh in range(k):
        for kw in range(k):
            slabs.append(x[:, kh:kh + s * OH:s, kw:kw + s * OW:s, :])  # [B,OH,OW,C]
    p = jnp.concatenate(slabs, axis=-1)                 # [B, OH, OW, k*k*C]
    return p.reshape(B * OH * OW, k * k * C), OH, OW


# ---------------------------------------------------------------------------
# One-time weight preparation: NHWC-ordered flattening, MXU-aligned zero
# padding (weights AND biases), fused mu/logsigma head.  Runs once.
# Returns (prep_arrays, static_cfg).
# ---------------------------------------------------------------------------
def prepare_params(params):
    convs = []
    out_channels = []
    for i in (1, 2, 3, 4):
        w = params[f"w{i}"].astype(jnp.float32)          # [OC, IC, KH, KW]
        b = params[f"b{i}"].astype(jnp.float32)          # [OC]
        OC, IC, KH, KW = w.shape
        K = KH * KW * IC
        Kp, Np = _round_up(K, 128), _round_up(OC, 128)
        wm = w.transpose(2, 3, 1, 0).reshape(K, OC)      # rows ordered (kh, kw, ic)
        wp = jnp.zeros((Kp, Np), jnp.float32).at[:K, :OC].set(wm)
        bp = jnp.zeros((1, Np), jnp.float32).at[0, :OC].set(b)
        convs.append({"w": wp, "b": bp})
        out_channels.append(OC)

    w_mu = params["w_mu"].astype(jnp.float32)            # [L, C*H*W] (NCHW order)
    w_ls = params["w_ls"].astype(jnp.float32)
    L, F = w_mu.shape
    C = params["w4"].shape[0]
    HW = F // C
    H = int(round(HW ** 0.5))
    W = HW // H

    def to_nhwc_rows(w):                                  # [L, C*H*W] -> [H*W*C, L]
        return w.reshape(L, C, H, W).transpose(0, 2, 3, 1).reshape(L, F).T

    wh = jnp.concatenate([to_nhwc_rows(w_mu), to_nhwc_rows(w_ls)], axis=1)  # [F, 2L]
    Kp, Np = _round_up(F, 128), _round_up(2 * L, 128)
    wh_p = jnp.zeros((Kp, Np), jnp.float32).at[:F, :2 * L].set(wh)
    bh = jnp.concatenate([params["b_mu"], params["b_ls"]]).astype(jnp.float32)
    bh_p = jnp.zeros((1, Np), jnp.float32).at[0, :2 * L].set(bh)

    prep = {"convs": tuple(convs), "w_head": wh_p, "b_head": bh_p}
    cfg = (tuple(out_channels), int(L))                  # hashable, static
    return prep, cfg


# ---------------------------------------------------------------------------
# Encoder forward (mirrors the PyTorch module); jitted end-to-end.
# ---------------------------------------------------------------------------
def _encoder_forward(cfg, prep, x):
    """x: [B, C, H, W] NCHW (PyTorch convention). Returns (mu, logsigma)."""
    out_channels, latent_size = cfg
    x = x.astype(jnp.float32).transpose(0, 2, 3, 1)      # -> NHWC, once
    B = x.shape[0]
    for layer, oc in zip(prep["convs"], out_channels):
        patches, OH, OW = extract_patches_nhwc(x, 4, 2)
        y = linear_pallas(patches, layer["w"], layer["b"], oc, relu=True)
        x = y.reshape(B, OH, OW, oc)
    flat = x.reshape(B, -1)          # NHWC flatten; head weights were permuted to match
    out = linear_pallas(flat, prep["w_head"], prep["b_head"], 2 * latent_size,
                        relu=False)
    return out[:, :latent_size], out[:, latent_size:]


encoder_forward = jax.jit(_encoder_forward, static_argnums=0)


# ---------------------------------------------------------------------------
# Pure-JAX reference (for correctness check only)
# ---------------------------------------------------------------------------
def encoder_reference(params, x):
    def conv(x, w, b):
        y = jax.lax.conv_general_dilated(
            x, w, (2, 2), "VALID",
            dimension_numbers=("NCHW", "OIHW", "NCHW"))
        return jax.nn.relu(y + b[None, :, None, None])

    x = conv(x, params["w1"], params["b1"])
    x = conv(x, params["w2"], params["b2"])
    x = conv(x, params["w3"], params["b3"])
    x = conv(x, params["w4"], params["b4"])
    flat = x.reshape(x.shape[0], -1)
    mu = flat @ params["w_mu"].T + params["b_mu"]
    ls = flat @ params["w_ls"].T + params["b_ls"]
    return mu, ls


def init_params(key, img_channels, latent_size):
    ks = jax.random.split(key, 12)
    s = 0.05
    return {
        "w1": s * jax.random.normal(ks[0], (32, img_channels, 4, 4), jnp.float32),
        "b1": s * jax.random.normal(ks[1], (32,), jnp.float32),
        "w2": s * jax.random.normal(ks[2], (64, 32, 4, 4), jnp.float32),
        "b2": s * jax.random.normal(ks[3], (64,), jnp.float32),
        "w3": s * jax.random.normal(ks[4], (128, 64, 4, 4), jnp.float32),
        "b3": s * jax.random.normal(ks[5], (128,), jnp.float32),
        "w4": s * jax.random.normal(ks[6], (256, 128, 4, 4), jnp.float32),
        "b4": s * jax.random.normal(ks[7], (256,), jnp.float32),
        "w_mu": s * jax.random.normal(ks[8], (latent_size, 2 * 2 * 256), jnp.float32),
        "b_mu": s * jax.random.normal(ks[9], (latent_size,), jnp.float32),
        "w_ls": s * jax.random.normal(ks[10], (latent_size, 2 * 2 * 256), jnp.float32),
        "b_ls": s * jax.random.normal(ks[11], (latent_size,), jnp.float32),
    }


if __name__ == "__main__":
    # 64x64 spatial is required by the module (flatten to 2*2*256 features).
    B, img_channels, latent_size = 2, 3, 32
    key = jax.random.PRNGKey(0)
    pkey, xkey = jax.random.split(key)
    params = init_params(pkey, img_channels, latent_size)
    x = jax.random.normal(xkey, (B, img_channels, 64, 64), jnp.float32)

    prep, cfg = prepare_params(params)                # one-time weight prep
    mu, logsigma = encoder_forward(cfg, prep, x)      # jitted forward
    jax.block_until_ready((mu, logsigma))

    mu_ref, ls_ref = encoder_reference(params, x)
    assert mu.shape == (B, latent_size) and logsigma.shape == (B, latent_size)
    assert jnp.allclose(mu, mu_ref, atol=1e-3, rtol=1e-3)
    assert jnp.allclose(logsigma, ls_ref, atol=1e-3, rtol=1e-3)

    print("KERNEL_OK")
</pallas_src>

<mosaic_0001>
module attributes {stable_mosaic.version = 11 : i64} {
  func.func @_linear_kernel(%arg0: i32, %arg1: memref<968x128xf32, #tpu.memory_space<vmem>>, %arg2: memref<128x128xf32, #tpu.memory_space<vmem>>, %arg3: memref<1x128xf32, #tpu.memory_space<vmem>>, %arg4: memref<968x128xf32, #tpu.memory_space<vmem>>) attributes {dimension_semantics = [#tpu.dimension_semantics<parallel>], iteration_bounds = array<i64: 2>, scalar_prefetch = 0 : i64, scratch_operands = 0 : i64, tpu.core_type = #tpu.core_type<tc>, window_params = [{transform_indices = @transform_0, window_bounds = array<i64: 968, 128>}, {pipeline_mode = #tpu.pipeline_mode<synchronous>, transform_indices = @transform_1, window_bounds = array<i64: 128, 128>}, {pipeline_mode = #tpu.pipeline_mode<synchronous>, transform_indices = @transform_2, window_bounds = array<i64: 1, 128>}, {transform_indices = @transform_3, window_bounds = array<i64: 968, 128>}]} {
    %c0 = arith.constant 0 : index
    %c0_0 = arith.constant 0 : index
    %0 = vector.load %arg1[%c0, %c0_0] : memref<968x128xf32, #tpu.memory_space<vmem>>, vector<968x128xf32>
    %c0_1 = arith.constant 0 : index
    %c0_2 = arith.constant 0 : index
    %1 = vector.load %arg2[%c0_1, %c0_2] : memref<128x128xf32, #tpu.memory_space<vmem>>, vector<128x128xf32>
    %cst = arith.constant dense<0.000000e+00> : vector<968x128xf32>
    %2 = tpu.matmul %0, %1, %cst {dimension_numbers = #tpu.dot_dimension_numbers<[1], [0], [0], [1], [0, 0, 1, 1], [], []>} : vector<968x128xf32>, vector<128x128xf32>, vector<968x128xf32> -> vector<968x128xf32>
    %c0_3 = arith.constant 0 : index
    %c0_4 = arith.constant 0 : index
    %3 = vector.load %arg3[%c0_3, %c0_4] : memref<1x128xf32, #tpu.memory_space<vmem>>, vector<1x128xf32>
    %4 = vector.broadcast %3 : vector<1x128xf32> to vector<968x128xf32>
    %5 = arith.addf %2, %4 : vector<968x128xf32>
    %cst_5 = arith.constant 0.000000e+00 : f32
    %6 = vector.broadcast %cst_5 : f32 to vector<968x128xf32>
    %7 = arith.maximumf %5, %6 : vector<968x128xf32>
    %c0_6 = arith.constant 0 : index
    %c0_7 = arith.constant 0 : index
    %8 = vector.load %arg4[%c0_6, %c0_7] : memref<968x128xf32, #tpu.memory_space<vmem>>, vector<968x128xf32>
    tpu.vector_store %arg4[%c0_6, %c0_7], %7 {strides = array<i32>} : memref<968x128xf32, #tpu.memory_space<vmem>>, vector<968x128xf32>,
    return
  }
  func.func @transform_0(%arg0: i32) -> (i32, i32) {
    %c0_i32 = arith.constant 0 : i32
    %c0_i32_0 = arith.constant 0 : i32
    return %arg0, %c0_i32 : i32, i32
  }
  func.func @transform_1(%arg0: i32) -> (i32, i32) {
    %c0_i32 = arith.constant 0 : i32
    %c0_i32_0 = arith.constant 0 : i32
    %c0_i32_1 = arith.constant 0 : i32
    return %c0_i32, %c0_i32_0 : i32, i32
  }
  func.func @transform_2(%arg0: i32) -> (i32, i32) {
    %c0_i32 = arith.constant 0 : i32
    %c0_i32_0 = arith.constant 0 : i32
    %c0_i32_1 = arith.constant 0 : i32
    return %c0_i32, %c0_i32_0 : i32, i32
  }
  func.func @transform_3(%arg0: i32) -> (i32, i32) {
    %c0_i32 = arith.constant 0 : i32
    %c0_i32_0 = arith.constant 0 : i32
    return %arg0, %c0_i32 : i32, i32
  }
}

module attributes {stable_mosaic.version = 11 : i64} {
  func.func @_linear_kernel(%arg0: i32, %arg1: memref<392x512xf32, #tpu.memory_space<vmem>>, %arg2: memref<512x128xf32, #tpu.memory_space<vmem>>, %arg3: memref<1x128xf32, #tpu.memory_space<vmem>>, %arg4: memref<392x128xf32, #tpu.memory_space<vmem>>) attributes {dimension_semantics = [#tpu.dimension_semantics<parallel>], iteration_bounds = array<i64: 1>, scalar_prefetch = 0 : i64, scratch_operands = 0 : i64, tpu.core_type = #tpu.core_type<tc>, window_params = [{transform_indices = @transform_0, window_bounds = array<i64: 392, 512>}, {pipeline_mode = #tpu.pipeline_mode<synchronous>, transform_indices = @transform_1, window_bounds = array<i64: 512, 128>}, {pipeline_mode = #tpu.pipeline_mode<synchronous>, transform_indices = @transform_2, window_bounds = array<i64: 1, 128>}, {transform_indices = @transform_3, window_bounds = array<i64: 392, 128>}]} {
    %c0 = arith.constant 0 : index
    %c0_0 = arith.constant 0 : index
    %0 = vector.load %arg1[%c0, %c0_0] : memref<392x512xf32, #tpu.memory_space<vmem>>, vector<392x512xf32>
    %c0_1 = arith.constant 0 : index
    %c0_2 = arith.constant 0 : index
    %1 = vector.load %arg2[%c0_1, %c0_2] : memref<512x128xf32, #tpu.memory_space<vmem>>, vector<512x128xf32>
    %cst = arith.constant dense<0.000000e+00> : vector<392x128xf32>
    %2 = tpu.matmul %0, %1, %cst {dimension_numbers = #tpu.dot_dimension_numbers<[1], [0], [0], [1], [0, 0, 1, 1], [], []>} : vector<392x512xf32>, vector<512x128xf32>, vector<392x128xf32> -> vector<392x128xf32>
    %c0_3 = arith.constant 0 : index
    %c0_4 = arith.constant 0 : index
    %3 = vector.load %arg3[%c0_3, %c0_4] : memref<1x128xf32, #tpu.memory_space<vmem>>, vector<1x128xf32>
    %4 = vector.broadcast %3 : vector<1x128xf32> to vector<392x128xf32>
    %5 = arith.addf %2, %4 : vector<392x128xf32>
    %cst_5 = arith.constant 0.000000e+00 : f32
    %6 = vector.broadcast %cst_5 : f32 to vector<392x128xf32>
    %7 = arith.maximumf %5, %6 : vector<392x128xf32>
    %c0_6 = arith.constant 0 : index
    %c0_7 = arith.constant 0 : index
    %8 = vector.load %arg4[%c0_6, %c0_7] : memref<392x128xf32, #tpu.memory_space<vmem>>, vector<392x128xf32>
    tpu.vector_store %arg4[%c0_6, %c0_7], %7 {strides = array<i32>} : memref<392x128xf32, #tpu.memory_space<vmem>>, vector<392x128xf32>,
    return
  }
  func.func @transform_0(%arg0: i32) -> (i32, i32) {
    %c0_i32 = arith.constant 0 : i32
    %c0_i32_0 = arith.constant 0 : i32
    return %arg0, %c0_i32 : i32, i32
  }
  func.func @transform_1(%arg0: i32) -> (i32, i32) {
    %c0_i32 = arith.constant 0 : i32
    %c0_i32_0 = arith.constant 0 : i32
    %c0_i32_1 = arith.constant 0 : i32
    return %c0_i32, %c0_i32_0 : i32, i32
  }
  func.func @transform_2(%arg0: i32) -> (i32, i32) {
    %c0_i32 = arith.constant 0 : i32
    %c0_i32_0 = arith.constant 0 : i32
    %c0_i32_1 = arith.constant 0 : i32
    return %c0_i32, %c0_i32_0 : i32, i32
  }
  func.func @transform_3(%arg0: i32) -> (i32, i32) {
    %c0_i32 = arith.constant 0 : i32
    %c0_i32_0 = arith.constant 0 : i32
    return %arg0, %c0_i32 : i32, i32
  }
}

module attributes {stable_mosaic.version = 11 : i64} {
  func.func @_linear_kernel(%arg0: i32, %arg1: memref<72x1024xf32, #tpu.memory_space<vmem>>, %arg2: memref<1024x128xf32, #tpu.memory_space<vmem>>, %arg3: memref<1x128xf32, #tpu.memory_space<vmem>>, %arg4: memref<72x128xf32, #tpu.memory_space<vmem>>) attributes {dimension_semantics = [#tpu.dimension_semantics<parallel>], iteration_bounds = array<i64: 1>, scalar_prefetch = 0 : i64, scratch_operands = 0 : i64, tpu.core_type = #tpu.core_type<tc>, window_params = [{transform_indices = @transform_0, window_bounds = array<i64: 72, 1024>}, {pipeline_mode = #tpu.pipeline_mode<synchronous>, transform_indices = @transform_1, window_bounds = array<i64: 1024, 128>}, {pipeline_mode = #tpu.pipeline_mode<synchronous>, transform_indices = @transform_2, window_bounds = array<i64: 1, 128>}, {transform_indices = @transform_3, window_bounds = array<i64: 72, 128>}]} {
    %c0 = arith.constant 0 : index
    %c0_0 = arith.constant 0 : index
    %0 = vector.load %arg1[%c0, %c0_0] : memref<72x1024xf32, #tpu.memory_space<vmem>>, vector<72x1024xf32>
    %c0_1 = arith.constant 0 : index
    %c0_2 = arith.constant 0 : index
    %1 = vector.load %arg2[%c0_1, %c0_2] : memref<1024x128xf32, #tpu.memory_space<vmem>>, vector<1024x128xf32>
    %cst = arith.constant dense<0.000000e+00> : vector<72x128xf32>
    %2 = tpu.matmul %0, %1, %cst {dimension_numbers = #tpu.dot_dimension_numbers<[1], [0], [0], [1], [0, 0, 1, 1], [], []>} : vector<72x1024xf32>, vector<1024x128xf32>, vector<72x128xf32> -> vector<72x128xf32>
    %c0_3 = arith.constant 0 : index
    %c0_4 = arith.constant 0 : index
    %3 = vector.load %arg3[%c0_3, %c0_4] : memref<1x128xf32, #tpu.memory_space<vmem>>, vector<1x128xf32>
    %4 = vector.broadcast %3 : vector<1x128xf32> to vector<72x128xf32>
    %5 = arith.addf %2, %4 : vector<72x128xf32>
    %cst_5 = arith.constant 0.000000e+00 : f32
    %6 = vector.broadcast %cst_5 : f32 to vector<72x128xf32>
    %7 = arith.maximumf %5, %6 : vector<72x128xf32>
    %c0_6 = arith.constant 0 : index
    %c0_7 = arith.constant 0 : index
    %8 = vector.load %arg4[%c0_6, %c0_7] : memref<72x128xf32, #tpu.memory_space<vmem>>, vector<72x128xf32>
    tpu.vector_store %arg4[%c0_6, %c0_7], %7 {strides = array<i32>} : memref<72x128xf32, #tpu.memory_space<vmem>>, vector<72x128xf32>,
    return
  }
  func.func @transform_0(%arg0: i32) -> (i32, i32) {
    %c0_i32 = arith.constant 0 : i32
    %c0_i32_0 = arith.constant 0 : i32
    return %arg0, %c0_i32 : i32, i32
  }
  func.func @transform_1(%arg0: i32) -> (i32, i32) {
    %c0_i32 = arith.constant 0 : i32
    %c0_i32_0 = arith.constant 0 : i32
    %c0_i32_1 = arith.constant 0 : i32
    return %c0_i32, %c0_i32_0 : i32, i32
  }
  func.func @transform_2(%arg0: i32) -> (i32, i32) {
    %c0_i32 = arith.constant 0 : i32
    %c0_i32_0 = arith.constant 0 : i32
    %c0_i32_1 = arith.constant 0 : i32
    return %c0_i32, %c0_i32_0 : i32, i32
  }
  func.func @transform_3(%arg0: i32) -> (i32, i32) {
    %c0_i32 = arith.constant 0 : i32
    %c0_i32_0 = arith.constant 0 : i32
    return %arg0, %c0_i32 : i32, i32
  }
}

module attributes {stable_mosaic.version = 11 : i64} {
  func.func @_linear_kernel(%arg0: i32, %arg1: memref<8x2048xf32, #tpu.memory_space<vmem>>, %arg2: memref<2048x256xf32, #tpu.memory_space<vmem>>, %arg3: memref<1x256xf32, #tpu.memory_space<vmem>>, %arg4: memref<8x256xf32, #tpu.memory_space<vmem>>) attributes {dimension_semantics = [#tpu.dimension_semantics<parallel>], iteration_bounds = array<i64: 1>, scalar_prefetch = 0 : i64, scratch_operands = 0 : i64, tpu.core_type = #tpu.core_type<tc>, window_params = [{transform_indices = @transform_0, window_bounds = array<i64: 8, 2048>}, {pipeline_mode = #tpu.pipeline_mode<synchronous>, transform_indices = @transform_1, window_bounds = array<i64: 2048, 256>}, {pipeline_mode = #tpu.pipeline_mode<synchronous>, transform_indices = @transform_2, window_bounds = array<i64: 1, 256>}, {transform_indices = @transform_3, window_bounds = array<i64: 8, 256>}]} {
    %c0 = arith.constant 0 : index
    %c0_0 = arith.constant 0 : index
    %0 = vector.load %arg1[%c0, %c0_0] : memref<8x2048xf32, #tpu.memory_space<vmem>>, vector<8x2048xf32>
    %c0_1 = arith.constant 0 : index
    %c0_2 = arith.constant 0 : index
    %1 = vector.load %arg2[%c0_1, %c0_2] : memref<2048x256xf32, #tpu.memory_space<vmem>>, vector<2048x256xf32>
    %cst = arith.constant dense<0.000000e+00> : vector<8x256xf32>
    %2 = tpu.matmul %0, %1, %cst {dimension_numbers = #tpu.dot_dimension_numbers<[1], [0], [0], [1], [0, 0, 1, 1], [], []>} : vector<8x2048xf32>, vector<2048x256xf32>, vector<8x256xf32> -> vector<8x256xf32>
    %c0_3 = arith.constant 0 : index
    %c0_4 = arith.constant 0 : index
    %3 = vector.load %arg3[%c0_3, %c0_4] : memref<1x256xf32, #tpu.memory_space<vmem>>, vector<1x256xf32>
    %4 = vector.broadcast %3 : vector<1x256xf32> to vector<8x256xf32>
    %5 = arith.addf %2, %4 : vector<8x256xf32>
    %cst_5 = arith.constant 0.000000e+00 : f32
    %6 = vector.broadcast %cst_5 : f32 to vector<8x256xf32>
    %7 = arith.maximumf %5, %6 : vector<8x256xf32>
    %c0_6 = arith.constant 0 : index
    %c0_7 = arith.constant 0 : index
    %8 = vector.load %arg4[%c0_6, %c0_7] : memref<8x256xf32, #tpu.memory_space<vmem>>, vector<8x256xf32>
    tpu.vector_store %arg4[%c0_6, %c0_7], %7 {strides = array<i32>} : memref<8x256xf32, #tpu.memory_space<vmem>>, vector<8x256xf32>,
    return
  }
  func.func @transform_0(%arg0: i32) -> (i32, i32) {
    %c0_i32 = arith.constant 0 : i32
    %c0_i32_0 = arith.constant 0 : i32
    return %arg0, %c0_i32 : i32, i32
  }
  func.func @transform_1(%arg0: i32) -> (i32, i32) {
    %c0_i32 = arith.constant 0 : i32
    %c0_i32_0 = arith.constant 0 : i32
    %c0_i32_1 = arith.constant 0 : i32
    return %c0_i32, %c0_i32_0 : i32, i32
  }
  func.func @transform_2(%arg0: i32) -> (i32, i32) {
    %c0_i32 = arith.constant 0 : i32
    %c0_i32_0 = arith.constant 0 : i32
    %c0_i32_1 = arith.constant 0 : i32
    return %c0_i32, %c0_i32_0 : i32, i32
  }
  func.func @transform_3(%arg0: i32) -> (i32, i32) {
    %c0_i32 = arith.constant 0 : i32
    %c0_i32_0 = arith.constant 0 : i32
    return %arg0, %c0_i32 : i32, i32
  }
}

module attributes {stable_mosaic.version = 11 : i64} {
  func.func @_linear_kernel(%arg0: i32, %arg1: memref<8x1024xf32, #tpu.memory_space<vmem>>, %arg2: memref<1024x128xf32, #tpu.memory_space<vmem>>, %arg3: memref<1x128xf32, #tpu.memory_space<vmem>>, %arg4: memref<8x128xf32, #tpu.memory_space<vmem>>) attributes {dimension_semantics = [#tpu.dimension_semantics<parallel>], iteration_bounds = array<i64: 1>, scalar_prefetch = 0 : i64, scratch_operands = 0 : i64, tpu.core_type = #tpu.core_type<tc>, window_params = [{transform_indices = @transform_0, window_bounds = array<i64: 8, 1024>}, {pipeline_mode = #tpu.pipeline_mode<synchronous>, transform_indices = @transform_1, window_bounds = array<i64: 1024, 128>}, {pipeline_mode = #tpu.pipeline_mode<synchronous>, transform_indices = @transform_2, window_bounds = array<i64: 1, 128>}, {transform_indices = @transform_3, window_bounds = array<i64: 8, 128>}]} {
    %c0 = arith.constant 0 : index
    %c0_0 = arith.constant 0 : index
    %0 = vector.load %arg1[%c0, %c0_0] : memref<8x1024xf32, #tpu.memory_space<vmem>>, vector<8x1024xf32>
    %c0_1 = arith.constant 0 : index
    %c0_2 = arith.constant 0 : index
    %1 = vector.load %arg2[%c0_1, %c0_2] : memref<1024x128xf32, #tpu.memory_space<vmem>>, vector<1024x128xf32>
    %cst = arith.constant dense<0.000000e+00> : vector<8x128xf32>
    %2 = tpu.matmul %0, %1, %cst {dimension_numbers = #tpu.dot_dimension_numbers<[1], [0], [0], [1], [0, 0, 1, 1], [], []>} : vector<8x1024xf32>, vector<1024x128xf32>, vector<8x128xf32> -> vector<8x128xf32>
    %c0_3 = arith.constant 0 : index
    %c0_4 = arith.constant 0 : index
    %3 = vector.load %arg3[%c0_3, %c0_4] : memref<1x128xf32, #tpu.memory_space<vmem>>, vector<1x128xf32>
    %4 = vector.broadcast %3 : vector<1x128xf32> to vector<8x128xf32>
    %5 = arith.addf %2, %4 : vector<8x128xf32>
    %c0_5 = arith.constant 0 : index
    %c0_6 = arith.constant 0 : index
    %6 = vector.load %arg4[%c0_5, %c0_6] : memref<8x128xf32, #tpu.memory_space<vmem>>, vector<8x128xf32>
    tpu.vector_store %arg4[%c0_5, %c0_6], %5 {strides = array<i32>} : memref<8x128xf32, #tpu.memory_space<vmem>>, vector<8x128xf32>,
    return
  }
  func.func @transform_0(%arg0: i32) -> (i32, i32) {
    %c0_i32 = arith.constant 0 : i32
    %c0_i32_0 = arith.constant 0 : i32
    return %arg0, %c0_i32 : i32, i32
  }
  func.func @transform_1(%arg0: i32) -> (i32, i32) {
    %c0_i32 = arith.constant 0 : i32
    %c0_i32_0 = arith.constant 0 : i32
    %c0_i32_1 = arith.constant 0 : i32
    return %c0_i32, %c0_i32_0 : i32, i32
  }
  func.func @transform_2(%arg0: i32) -> (i32, i32) {
    %c0_i32 = arith.constant 0 : i32
    %c0_i32_0 = arith.constant 0 : i32
    %c0_i32_1 = arith.constant 0 : i32
    return %c0_i32, %c0_i32_0 : i32, i32
  }
  func.func @transform_3(%arg0: i32) -> (i32, i32) {
    %c0_i32 = arith.constant 0 : i32
    %c0_i32_0 = arith.constant 0 : i32
    return %arg0, %c0_i32 : i32, i32
  }
}

</mosaic_0001>

<llo_original>
// kernel: _encoder_forward.5
$region0: #{_encoder_forward.5}
  #allocation0 [shape = 'u32[]', space=smem, size = 0x4, offset = 0x4, fixed_abs, tag = 'smem constant byte address 0x4 - core index']
  #allocation1 [shape = 'u32[144,128]{1,0:T(1,128)}', space=vmem, size = 0x12000, scoped, tag = 'internal scratch']
  %s0 = inlined_call_operand.vmem [shape: f32[1936,128], index: 0, kind: input, shape index: {}]
  %s1 = inlined_call_operand.vmem [shape: f32[128,128], index: 1, kind: input, shape index: {}]
  %s2 = inlined_call_operand.vmem [shape: f32[1,128], index: 2, kind: input, shape index: {}]
  %s3 = inlined_call_operand.vmem [shape: f32[1936,128], index: 3, kind: output, shape index: {}]
  %s4 = sld [smem:[#allocation0]]
  $region45: #{_encoder_forward.5} parent=0
    _
  %s6 = ssub.s32 1, %s4
  %s7 = scalar_select 0, %s6, %s4
  loop: start=0, step=1, limit=4
  $region2: #{_encoder_forward.5} parent=0 // loop_pre_header
    _
  $region3: #{_encoder_forward.5} parent=0 // loop_header
    %s9 = sphi 0, %s13
    %p10 = scmp.ge.s32.totalorder %s9, 4
    %s19 = sphi 0, %s21
    %s22 = sphi 0, %s19
    %s23 = sphi 0, %s22
    %s39 = sphi 0, %s23
    %s43 = sphi 0, %s43
    %s45 = sphi 0, %s43
    %s46 = sphi 0, %s45
    %s60 = sphi 0, %s46
    %s64 = sphi 0, %s64
    %s66 = sphi 0, %s64
    %s67 = sphi 0, %s66
    %s81 = sphi 0, %s67
    %s87 = sphi 0, %s89
    %s90 = sphi 0, %s87
    %s91 = sphi 0, %s90
    %s107 = sphi 0, %s91
  $region4: #{_encoder_forward.5} parent=0 // loop_header_branch
    %12 = sbr.rel (%p10) target = $region8
  $region5: #{_encoder_forward.5} parent=0 // loop_body
    %s14 = ssub.s32 %s9, 1
    %s15 = ssub.s32 %s9, 2
    %s16 = sadd.s32 %s9, 1
    %s17 = ssub.s32 %s9, %s16
    %p18 = scmp.eq.s32.totalorder %s17, 0
    %s20 = sadd.s32 %s19, 1
    %s21 = scalar_select %p18, %s19, %s20
    %p24 = pneg %p18
    %p25 = scmp.eq.s32.totalorder %s9, 1
    %p26 = por %p24, %p25
    %p27 = scmp.ne.s32.totalorder %s19, %s22
    %p28 = scmp.eq.s32.totalorder %s9, 0
    %p29 = por %p27, %p28
    %p30 = scmp.ne.s32.totalorder %s19, %s22
    %p31 = scmp.eq.s32.totalorder %s14, 1
    %p32 = por %p30, %p31
    %p33 = scmp.ne.s32.totalorder %s22, %s23
    %p34 = scmp.eq.s32.totalorder %s14, 0
    %p35 = por %p33, %p34
    %p36 = scmp.ne.s32.totalorder %s22, %s23
    %p37 = scmp.eq.s32.totalorder %s15, 1
    %p38 = por %p36, %p37
    %p40 = scmp.ne.s32.totalorder %s23, %s39
    %p41 = scmp.eq.s32.totalorder %s15, 0
    %p42 = por %p40, %p41
    %s44 = sadd.s32 %s43, 1
    %p47 = scmp.eq.s32.totalorder %s9, 1
    %p48 = scmp.ne.s32.totalorder %s43, %s45
    %p49 = scmp.eq.s32.totalorder %s9, 0
    %p50 = por %p48, %p49
    %p51 = scmp.ne.s32.totalorder %s43, %s45
    %p52 = scmp.eq.s32.totalorder %s14, 1
    %p53 = por %p51, %p52
    %p54 = scmp.ne.s32.totalorder %s45, %s46
    %p55 = scmp.eq.s32.totalorder %s14, 0
    %p56 = por %p54, %p55
    %p57 = scmp.ne.s32.totalorder %s45, %s46
    %p58 = scmp.eq.s32.totalorder %s15, 1
    %p59 = por %p57, %p58
    %p61 = scmp.ne.s32.totalorder %s46, %s60
    %p62 = scmp.eq.s32.totalorder %s15, 0
    %p63 = por %p61, %p62
    %s65 = sadd.s32 %s64, 1
    %p68 = scmp.eq.s32.totalorder %s9, 1
    %p69 = scmp.ne.s32.totalorder %s64, %s66
    %p70 = scmp.eq.s32.totalorder %s9, 0
    %p71 = por %p69, %p70
    %p72 = scmp.ne.s32.totalorder %s64, %s66
    %p73 = scmp.eq.s32.totalorder %s14, 1
    %p74 = por %p72, %p73
    %p75 = scmp.ne.s32.totalorder %s66, %s67
    %p76 = scmp.eq.s32.totalorder %s14, 0
    %p77 = por %p75, %p76
    %p78 = scmp.ne.s32.totalorder %s66, %s67
    %p79 = scmp.eq.s32.totalorder %s15, 1
    %p80 = por %p78, %p79
    %p82 = scmp.ne.s32.totalorder %s67, %s81
    %p83 = scmp.eq.s32.totalorder %s15, 0
    %p84 = por %p82, %p83
    %s85 = ssub.s32 %s9, %s16
    %p86 = scmp.eq.s32.totalorder %s85, 0
    %s88 = sadd.s32 %s87, 1
    %s89 = scalar_select %p86, %s87, %s88
    %p92 = pneg %p86
    %p93 = scmp.eq.s32.totalorder %s9, 1
    %p94 = por %p92, %p93
    %p95 = scmp.ne.s32.totalorder %s87, %s90
    %p96 = scmp.eq.s32.totalorder %s9, 0
    %p97 = por %p95, %p96
    %p98 = scmp.ne.s32.totalorder %s87, %s90
    %p99 = scmp.eq.s32.totalorder %s14, 1
    %p100 = por %p98, %p99
    %p101 = scmp.ne.s32.totalorder %s90, %s91
    %p102 = scmp.eq.s32.totalorder %s14, 0
    %p103 = por %p101, %p102
    %p104 = scmp.ne.s32.totalorder %s90, %s91
    %p105 = scmp.eq.s32.totalorder %s15, 1
    %p106 = por %p104, %p105
    %p108 = scmp.ne.s32.totalorder %s91, %s107
    %p109 = scmp.eq.s32.totalorder %s15, 0
    %p110 = por %p108, %p109
    %p111 = scmp.le.s32.totalorder 1, %s9
    %p112 = scmp.lt.s32.totalorder %s9, 3
    %p113 = pnand %p111, %p112
    %p114 = pneg %p113
    // Predicated region
    $region9: #{_encoder_forward.5} parent=5 // pred_check
      _
    $region10: #{_encoder_forward.5} parent=5 // pred_check_branch
      %116 = sbr.rel (%p113) target = $region12
    $region11: #{_encoder_forward.5} parent=5 // pred_region
      %s117 = ssub.s32 %s9, 1
      // Predicated region
      $region13: #{_encoder_forward.5} parent=11 // pred_check
        %p118 = pneg %p56
      $region14: #{_encoder_forward.5} parent=11 // pred_check_branch
        %120 = sbr.rel (%p118) target = $region16
      $region15: #{_encoder_forward.5} parent=11 // pred_region
        _
      $region16: #{_encoder_forward.5} parent=11 // pred_fallthru
        _
      // Predicated region
      $region17: #{_encoder_forward.5} parent=11 // pred_check
        %p121 = pneg %p77
      $region18: #{_encoder_forward.5} parent=11 // pred_check_branch
        %123 = sbr.rel (%p121) target = $region20
      $region19: #{_encoder_forward.5} parent=11 // pred_region
        _
      $region20: #{_encoder_forward.5} parent=11 // pred_fallthru
        _
    $region12: #{_encoder_forward.5} parent=5 // pred_fallthru
      _
    %p124 = scmp.lt.s32.totalorder %s9, 2
    // Predicated region
    $region21: #{_encoder_forward.5} parent=5 // pred_check
      %p125 = pneg %p124
    $region22: #{_encoder_forward.5} parent=5 // pred_check_branch
      %127 = sbr.rel (%p125) target = $region24
    $region23: #{_encoder_forward.5} parent=5 // pred_region
      // Predicated region
      $region25: #{_encoder_forward.5} parent=23 // pred_check
        %p128 = pneg %p29
      $region26: #{_encoder_forward.5} parent=23 // pred_check_branch
        %130 = sbr.rel (%p128) target = $region28
      $region27: #{_encoder_forward.5} parent=23 // pred_region
        %s131 = smul.u32 121, %s9
        %p132 = scmp.lt.s32.totalorder %s131, 241
        %s133 = scalar_select %p132, %s131, 241
        %s134 = smul.addr %s133, 8
        %s135 = scalar_lea.vmem %s0, %s134
        %s136 = smul.u32 121, %s9
      $region28: #{_encoder_forward.5} parent=23 // pred_fallthru
        _
    $region24: #{_encoder_forward.5} parent=5 // pred_fallthru
      _
    %p137 = scmp.le.s32.totalorder 1, %s9
    %p138 = scmp.lt.s32.totalorder %s9, 3
    %p139 = pnand %p137, %p138
    %p140 = pneg %p139
    // Predicated region
    $region29: #{_encoder_forward.5} parent=5 // pred_check
      _
    $region30: #{_encoder_forward.5} parent=5 // pred_check_branch
      %142 = sbr.rel (%p139) target = $region32
    $region31: #{_encoder_forward.5} parent=5 // pred_region
      %s143 = ssub.s32 %s9, 1
      %s144 = smul.u32 121, %s14
      %p145 = scmp.lt.s32.totalorder %s144, 241
      %s146 = scalar_select %p145, %s144, 241
      %s147 = smul.addr %s146, 8
      %s148 = scalar_lea.vmem %s0, %s147
      %p149 = pneg %p35
      %p150 = pneg %p32
      %p151 = pneg %p56
      %p152 = pneg %p53
      %p153 = pneg %p77
      %p154 = pneg %p74
      %p155 = pneg %p103
      %p156 = pneg %p100
      %s157 = smul.u32 121, %s14
      %p158 = scmp.lt.s32.totalorder %s157, 241
      %s159 = scalar_select %p158, %s157, 241
      %s160 = smul.addr %s159, 8
      %s161 = scalar_lea.vmem %s3, %s160
      %s162 = smul.u32 121, %s14
      %p163 = scmp.lt.s32.totalorder %s162, 241
      %s164 = scalar_select %p163, %s162, 241
      %s165 = smul.addr %s164, 8
      %s166 = scalar_lea.vmem %s0, %s165
      %s167 = smul.u32 121, %s14
      %s168 = smul.u32 121, %s14
      %p169 = scmp.lt.s32.totalorder %s168, 241
      %s170 = scalar_select %p169, %s168, 241
      %s171 = smul.addr %s170, 8
      %s172 = scalar_lea.vmem %s3, %s171
      %s173 = smul.u32 121, %s14
      %v174 = vld [vmem:[%s166] sm:$0xff]
      %v175 = vld [vmem:[%s166 + $0x8] sm:$0xff]
      %v176 = vld [vmem:[%s166 + $0x10] sm:$0xff]
      %v177 = vld [vmem:[%s166 + $0x18] sm:$0xff]
      %v178 = vld [vmem:[%s166 + $0x20] sm:$0xff]
      %v179 = vld [vmem:[%s166 + $0x28] sm:$0xff]
      %v180 = vld [vmem:[%s166 + $0x30] sm:$0xff]
      %v181 = vld [vmem:[%s166 + $0x38] sm:$0xff]
      %v182 = vld [vmem:[%s166 + $0x40] sm:$0xff]
      %v183 = vld [vmem:[%s166 + $0x48] sm:$0xff]
      %v184 = vld [vmem:[%s166 + $0x50] sm:$0xff]
      %v185 = vld [vmem:[%s166 + $0x58] sm:$0xff]
      %v186 = vld [vmem:[%s166 + $0x60] sm:$0xff]
      %v187 = vld [vmem:[%s166 + $0x68] sm:$0xff]
      %v188 = vld [vmem:[%s166 + $0x70] sm:$0xff]
      %v189 = vld [vmem:[%s166 + $0x78] sm:$0xff]
      %v190 = vld [vmem:[%s166 + $0x80] sm:$0xff]
      %v191 = vld [vmem:[%s166 + $0x88] sm:$0xff]
      %v192 = vld [vmem:[%s166 + $0x90] sm:$0xff]
      %v193 = vld [vmem:[%s166 + $0x98] sm:$0xff]
      %v194 = vld [vmem:[%s166 + $0xa0] sm:$0xff]
      %v195 = vld [vmem:[%s166 + $0xa8] sm:$0xff]
      %v196 = vld [vmem:[%s166 + $0xb0] sm:$0xff]
      %v197 = vld [vmem:[%s166 + $0xb8] sm:$0xff]
      %v198 = vld [vmem:[%s166 + $0xc0] sm:$0xff]
      %v199 = vld [vmem:[%s166 + $0xc8] sm:$0xff]
      %v200 = vld [vmem:[%s166 + $0xd0] sm:$0xff]
      %v201 = vld [vmem:[%s166 + $0xd8] sm:$0xff]
      %v202 = vld [vmem:[%s166 + $0xe0] sm:$0xff]
      %v203 = vld [vmem:[%s166 + $0xe8] sm:$0xff]
      %v204 = vld [vmem:[%s166 + $0xf0] sm:$0xff]
      %v205 = vld [vmem:[%s166 + $0xf8] sm:$0xff]
      %v206 = vld [vmem:[%s166 + $0x100] sm:$0xff]
      %v207 = vld [vmem:[%s166 + $0x108] sm:$0xff]
      %v208 = vld [vmem:[%s166 + $0x110] sm:$0xff]
      %v209 = vld [vmem:[%s166 + $0x118] sm:$0xff]
      %v210 = vld [vmem:[%s166 + $0x120] sm:$0xff]
      %v211 = vld [vmem:[%s166 + $0x128] sm:$0xff]
      %v212 = vld [vmem:[%s166 + $0x130] sm:$0xff]
      %v213 = vld [vmem:[%s166 + $0x138] sm:$0xff]
      %v214 = vld [vmem:[%s166 + $0x140] sm:$0xff]
      %v215 = vld [vmem:[%s166 + $0x148] sm:$0xff]
      %v216 = vld [vmem:[%s166 + $0x150] sm:$0xff]
      %v217 = vld [vmem:[%s166 + $0x158] sm:$0xff]
      %v218 = vld [vmem:[%s166 + $0x160] sm:$0xff]
      %v219 = vld [vmem:[%s166 + $0x168] sm:$0xff]
      %v220 = vld [vmem:[%s166 + $0x170] sm:$0xff]
      %v221 = vld [vmem:[%s166 + $0x178] sm:$0xff]
      %v222 = vld [vmem:[%s166 + $0x180] sm:$0xff]
      %v223 = vld [vmem:[%s166 + $0x188] sm:$0xff]
      %v224 = vld [vmem:[%s166 + $0x190] sm:$0xff]
      %v225 = vld [vmem:[%s166 + $0x198] sm:$0xff]
      %v226 = vld [vmem:[%s166 + $0x1a0] sm:$0xff]
      %v227 = vld [vmem:[%s166 + $0x1a8] sm:$0xff]
      %v228 = vld [vmem:[%s166 + $0x1b0] sm:$0xff]
      %v229 = vld [vmem:[%s166 + $0x1b8] sm:$0xff]
      %v230 = vld [vmem:[%s166 + $0x1c0] sm:$0xff]
      %v231 = vld [vmem:[%s166 + $0x1c8] sm:$0xff]
      %v232 = vld [vmem:[%s166 + $0x1d0] sm:$0xff]
      %v233 = vld [vmem:[%s166 + $0x1d8] sm:$0xff]
      %v234 = vld [vmem:[%s166 + $0x1e0] sm:$0xff]
      %v235 = vld [vmem:[%s166 + $0x1e8] sm:$0xff]
      %v236 = vld [vmem:[%s166 + $0x1f0] sm:$0xff]
      %v237 = vld [vmem:[%s166 + $0x1f8] sm:$0xff]
      %v238 = vld [vmem:[%s166 + $0x200] sm:$0xff]
      %v239 = vld [vmem:[%s166 + $0x208] sm:$0xff]
      %v240 = vld [vmem:[%s166 + $0x210] sm:$0xff]
      %v241 = vld [vmem:[%s166 + $0x218] sm:$0xff]
      %v242 = vld [vmem:[%s166 + $0x220] sm:$0xff]
      %v243 = vld [vmem:[%s166 + $0x228] sm:$0xff]
      %v244 = vld [vmem:[%s166 + $0x230] sm:$0xff]
      %v245 = vld [vmem:[%s166 + $0x238] sm:$0xff]
      %v246 = vld [vmem:[%s166 + $0x240] sm:$0xff]
      %v247 = vld [vmem:[%s166 + $0x248] sm:$0xff]
      %v248 = vld [vmem:[%s166 + $0x250] sm:$0xff]
      %v249 = vld [vmem:[%s166 + $0x258] sm:$0xff]
      %v250 = vld [vmem:[%s166 + $0x260] sm:$0xff]
      %v251 = vld [vmem:[%s166 + $0x268] sm:$0xff]
      %v252 = vld [vmem:[%s166 + $0x270] sm:$0xff]
      %v253 = vld [vmem:[%s166 + $0x278] sm:$0xff]
      %v254 = vld [vmem:[%s166 + $0x280] sm:$0xff]
      %v255 = vld [vmem:[%s166 + $0x288] sm:$0xff]
      %v256 = vld [vmem:[%s166 + $0x290] sm:$0xff]
      %v257 = vld [vmem:[%s166 + $0x298] sm:$0xff]
      %v258 = vld [vmem:[%s166 + $0x2a0] sm:$0xff]
      %v259 = vld [vmem:[%s166 + $0x2a8] sm:$0xff]
      %v260 = vld [vmem:[%s166 + $0x2b0] sm:$0xff]
      %v261 = vld [vmem:[%s166 + $0x2b8] sm:$0xff]
      %v262 = vld [vmem:[%s166 + $0x2c0] sm:$0xff]
      %v263 = vld [vmem:[%s166 + $0x2c8] sm:$0xff]
      %v264 = vld [vmem:[%s166 + $0x2d0] sm:$0xff]
      %v265 = vld [vmem:[%s166 + $0x2d8] sm:$0xff]
      %v266 = vld [vmem:[%s166 + $0x2e0] sm:$0xff]
      %v267 = vld [vmem:[%s166 + $0x2e8] sm:$0xff]
      %v268 = vld [vmem:[%s166 + $0x2f0] sm:$0xff]
      %v269 = vld [vmem:[%s166 + $0x2f8] sm:$0xff]
      %v270 = vld [vmem:[%s166 + $0x300] sm:$0xff]
      %v271 = vld [vmem:[%s166 + $0x308] sm:$0xff]
      %v272 = vld [vmem:[%s166 + $0x310] sm:$0xff]
      %v273 = vld [vmem:[%s166 + $0x318] sm:$0xff]
      %v274 = vld [vmem:[%s166 + $0x320] sm:$0xff]
      %v275 = vld [vmem:[%s166 + $0x328] sm:$0xff]
      %v276 = vld [vmem:[%s166 + $0x330] sm:$0xff]
      %v277 = vld [vmem:[%s166 + $0x338] sm:$0xff]
      %v278 = vld [vmem:[%s166 + $0x340] sm:$0xff]
      %v279 = vld [vmem:[%s166 + $0x348] sm:$0xff]
      %v280 = vld [vmem:[%s166 + $0x350] sm:$0xff]
      %v281 = vld [vmem:[%s166 + $0x358] sm:$0xff]
      %v282 = vld [vmem:[%s166 + $0x360] sm:$0xff]
      %v283 = vld [vmem:[%s166 + $0x368] sm:$0xff]
      %v284 = vld [vmem:[%s166 + $0x370] sm:$0xff]
      %v285 = vld [vmem:[%s166 + $0x378] sm:$0xff]
      %v286 = vld [vmem:[%s166 + $0x380] sm:$0xff]
      %v287 = vld [vmem:[%s166 + $0x388] sm:$0xff]
      %v288 = vld [vmem:[%s166 + $0x390] sm:$0xff]
      %v289 = vld [vmem:[%s166 + $0x398] sm:$0xff]
      %v290 = vld [vmem:[%s166 + $0x3a0] sm:$0xff]
      %v291 = vld [vmem:[%s166 + $0x3a8] sm:$0xff]
      %v292 = vld [vmem:[%s166 + $0x3b0] sm:$0xff]
      %v293 = vld [vmem:[%s166 + $0x3b8] sm:$0xff]
      %v294 = vld [vmem:[%s166 + $0x3c0] sm:$0xff]
      %v295 = vld [vmem:[%s1] sm:$0xff]
      %v296 = vld [vmem:[%s1 + $0x8] sm:$0xff]
      %v297 = vld [vmem:[%s1 + $0x10] sm:$0xff]
      %v298 = vld [vmem:[%s1 + $0x18] sm:$0xff]
      %v299 = vld [vmem:[%s1 + $0x20] sm:$0xff]
      %v300 = vld [vmem:[%s1 + $0x28] sm:$0xff]
      %v301 = vld [vmem:[%s1 + $0x30] sm:$0xff]
      %v302 = vld [vmem:[%s1 + $0x38] sm:$0xff]
      %v303 = vld [vmem:[%s1 + $0x40] sm:$0xff]
      %v304 = vld [vmem:[%s1 + $0x48] sm:$0xff]
      %v305 = vld [vmem:[%s1 + $0x50] sm:$0xff]
      %v306 = vld [vmem:[%s1 + $0x58] sm:$0xff]
      %v307 = vld [vmem:[%s1 + $0x60] sm:$0xff]
      %v308 = vld [vmem:[%s1 + $0x68] sm:$0xff]
      %v309 = vld [vmem:[%s1 + $0x70] sm:$0xff]
      %v310 = vld [vmem:[%s1 + $0x78] sm:$0xff]
      %v311 = vld [vmem:[%s2] sm:$0x1]
      %v313 = vlaneseq
      %v314 = vshrl.u32 %v313, 7
      %v315 = vsub.s32 0, %v314
      %v316 = vrot.slane %v311, %v315
      %318 = vmatprep.subr.mxu0 0.0
      %319 = vmatpush1.msra.mxu0 %v295
      %320 = vmatprep.subr.mxu0 0.0
      %321 = vmatpush1.msra.mxu0 %v296
      %322 = vmatprep.subr.mxu0 0.0
      %323 = vmatpush1.msra.mxu0 %v297
      %324 = vmatprep.subr.mxu0 0.0
      %325 = vmatpush1.msra.mxu0 %v298
      %326 = vmatprep.subr.mxu0 0.0
      %327 = vmatpush1.msra.mxu0 %v299
      %328 = vmatprep.subr.mxu0 0.0
      %329 = vmatpush1.msra.mxu0 %v300
      %330 = vmatprep.subr.mxu0 0.0
      %331 = vmatpush1.msra.mxu0 %v301
      %332 = vmatprep.subr.mxu0 0.0
      %333 = vmatpush1.msra.mxu0 %v302
      %334 = vmatprep.subr.mxu0 0.0
      %335 = vmatpush1.msra.mxu0 %v303
      %336 = vmatprep.subr.mxu0 0.0
      %337 = vmatpush1.msra.mxu0 %v304
      %338 = vmatprep.subr.mxu0 0.0
      %339 = vmatpush1.msra.mxu0 %v305
      %340 = vmatprep.subr.mxu0 0.0
      %341 = vmatpush1.msra.mxu0 %v306
      %342 = vmatprep.subr.mxu0 0.0
      %343 = vmatpush1.msra.mxu0 %v307
      %344 = vmatprep.subr.mxu0 0.0
      %345 = vmatpush1.msra.mxu0 %v308
      %346 = vmatprep.subr.mxu0 0.0
      %347 = vmatpush1.msra.mxu0 %v309
      %348 = vmatprep.subr.mxu0 0.0
      %349 = vmatpush1.msra.mxu0 %v310
      %350 = vmatprep.subr.mxu0 0.0
      %351 = vmatpush1.msra.mxu0 0.0
      %352 = vmatprep.subr.mxu0 0.0
      %353 = vmatpush1.msra.mxu0 0.0
      %354 = vmatprep.subr.mxu0 0.0
      %355 = vmatpush1.msra.mxu0 0.0
      %356 = vmatprep.subr.mxu0 0.0
      %357 = vmatpush1.msra.mxu0 0.0
      %358 = vmatprep.subr.mxu0 0.0
      %359 = vmatpush1.msra.mxu0 0.0
      %360 = vmatprep.subr.mxu0 0.0
      %361 = vmatpush1.msra.mxu0 0.0
      %362 = vmatprep.subr.mxu0 0.0
      %363 = vmatpush1.msra.mxu0 0.0
      %364 = vmatprep.subr.mxu0 0.0
      %365 = vmatpush1.msra.mxu0 0.0
      %366 = vmatprep.subr.mxu0 0.0
      %367 = vmatpush1.msra.mxu0 0.0
      %368 = vmatprep.subr.mxu0 0.0
      %369 = vmatpush1.msra.mxu0 0.0
      %370 = vmatprep.subr.mxu0 0.0
      %371 = vmatpush1.msra.mxu0 0.0
      %372 = vmatprep.subr.mxu0 0.0
      %373 = vmatpush1.msra.mxu0 0.0
      %374 = vmatprep.subr.mxu0 0.0
      %375 = vmatpush1.msra.mxu0 0.0
      %376 = vmatprep.subr.mxu0 0.0
      %377 = vmatpush1.msra.mxu0 0.0
      %378 = vmatprep.subr.mxu0 0.0
      %379 = vmatpush1.msra.mxu0 0.0
      %380 = vmatprep.subr.mxu0 0.0
      %381 = vmatpush1.msra.mxu0 0.0
      %382 = vmatprep.mubr.f32.mxu0 0.0
      %383 = vmatmul.mubr.f32.gmra.mrb[0].mxu0 %v174
      %v384 = vpop.f32.mrb[0].mxu0
      %v385 = vadd.f32 %v316, %v384
      %v386 = vpop.f32.mrb[0].mxu0
      %387 = vmatprep.mubr.f32.mxu0 0.0
      %388 = vmatmul.mubr.f32.gmra.mrb[0].mxu0 %v175
      %v389 = vpop.f32.mrb[0].mxu0
      %v390 = vadd.f32 %v316, %v389
      %v391 = vpop.f32.mrb[0].mxu0
      %392 = vmatprep.mubr.f32.mxu0 0.0
      %393 = vmatmul.mubr.f32.gmra.mrb[0].mxu0 %v176
      %v394 = vpop.f32.mrb[0].mxu0
      %v395 = vadd.f32 %v316, %v394
      %v396 = vpop.f32.mrb[0].mxu0
      %397 = vmatprep.mubr.f32.mxu0 0.0
      %398 = vmatmul.mubr.f32.gmra.mrb[0].mxu0 %v177
      %v399 = vpop.f32.mrb[0].mxu0
      %v400 = vadd.f32 %v316, %v399
      %v401 = vpop.f32.mrb[0].mxu0
      %402 = vmatprep.mubr.f32.mxu0 0.0
      %403 = vmatmul.mubr.f32.gmra.mrb[0].mxu0 %v178
      %v404 = vpop.f32.mrb[0].mxu0
      %v405 = vadd.f32 %v316, %v404
      %v406 = vpop.f32.mrb[0].mxu0
      %407 = vmatprep.mubr.f32.mxu0 0.0
      %408 = vmatmul.mubr.f32.gmra.mrb[0].mxu0 %v179
      %v409 = vpop.f32.mrb[0].mxu0
      %v410 = vadd.f32 %v316, %v409
      %v411 = vpop.f32.mrb[0].mxu0
      %412 = vmatprep.mubr.f32.mxu0 0.0
      %413 = vmatmul.mubr.f32.gmra.mrb[0].mxu0 %v180
      %v414 = vpop.f32.mrb[0].mxu0
      %v415 = vadd.f32 %v316, %v414
      %v416 = vpop.f32.mrb[0].mxu0
      %417 = vmatprep.mubr.f32.mxu0 0.0
      %418 = vmatmul.mubr.f32.gmra.mrb[0].mxu0 %v181
      %v419 = vpop.f32.mrb[0].mxu0
      %v420 = vadd.f32 %v316, %v419
      %v421 = vpop.f32.mrb[0].mxu0
      %422 = vmatprep.mubr.f32.mxu0 0.0
      %423 = vmatmul.mubr.f32.gmra.mrb[0].mxu0 %v182
      %v424 = vpop.f32.mrb[0].mxu0
      %v425 = vadd.f32 %v316, %v424
      %v426 = vpop.f32.mrb[0].mxu0
      %427 = vmatprep.mubr.f32.mxu0 0.0
      %428 = vmatmul.mubr.f32.gmra.mrb[0].mxu0 %v183
      %v429 = vpop.f32.mrb[0].mxu0
      %v430 = vadd.f32 %v316, %v429
      %v431 = vpop.f32.mrb[0].mxu0
      %432 = vmatprep.mubr.f32.mxu0 0.0
      %433 = vmatmul.mubr.f32.gmra.mrb[0].mxu0 %v184
      %v434 = vpop.f32.mrb[0].mxu0
      %v435 = vadd.f32 %v316, %v434
      %v436 = vpop.f32.mrb[0].mxu0
      %437 = vmatprep.mubr.f32.mxu0 0.0
      %438 = vmatmul.mubr.f32.gmra.mrb[0].mxu0 %v185
      %v439 = vpop.f32.mrb[0].mxu0
      %v440 = vadd.f32 %v316, %v439
      %v441 = vpop.f32.mrb[0].mxu0
      %442 = vmatprep.mubr.f32.mxu0 0.0
      %443 = vmatmul.mubr.f32.gmra.mrb[0].mxu0 %v186
      %v444 = vpop.f32.mrb[0].mxu0
      %v445 = vadd.f32 %v316, %v444
      %v446 = vpop.f32.mrb[0].mxu0
      %447 = vmatprep.mubr.f32.mxu0 0.0
      %448 = vmatmul.mubr.f32.gmra.mrb[0].mxu0 %v187
      %v449 = vpop.f32.mrb[0].mxu0
      %v450 = vadd.f32 %v316, %v449
      %v451 = vpop.f32.mrb[0].mxu0
      %452 = vmatprep.mubr.f32.mxu0 0.0
      %453 = vmatmul.mubr.f32.gmra.mrb[0].mxu0 %v188
      %v454 = vpop.f32.mrb[0].mxu0
      %v455 = vadd.f32 %v316, %v454
      %v456 = vpop.f32.mrb[0].mxu0
      %457 = vmatprep.mubr.f32.mxu0 0.0
      %458 = vmatmul.mubr.f32.gmra.mrb[0].mxu0 %v189
      %v459 = vpop.f32.mrb[0].mxu0
      %v460 = vadd.f32 %v316, %v459
      %v461 = vpop.f32.mrb[0].mxu0
      %462 = vmatprep.mubr.f32.mxu0 0.0
      %463 = vmatmul.mubr.f32.gmra.mrb[0].mxu0 %v190
      %v464 = vpop.f32.mrb[0].mxu0
      %v465 = vadd.f32 %v316, %v464
      %v466 = vpop.f32.mrb[0].mxu0
      %467 = vmatprep.mubr.f32.mxu0 0.0
      %468 = vmatmul.mubr.f32.gmra.mrb[0].mxu0 %v191
      %v469 = vpop.f32.mrb[0].mxu0
      %v470 = vadd.f32 %v316, %v469
      %v471 = vpop.f32.mrb[0].mxu0
      %472 = vmatprep.mubr.f32.mxu0 0.0
      %473 = vmatmul.mubr.f32.gmra.mrb[0].mxu0 %v192
      %v474 = vpop.f32.mrb[0].mxu0
      %v475 = vadd.f32 %v316, %v474
      %v476 = vpop.f32.mrb[0].mxu0
      %477 = vmatprep.mubr.f32.mxu0 0.0
      %478 = vmatmul.mubr.f32.gmra.mrb[0].mxu0 %v193
      %v479 = vpop.f32.mrb[0].mxu0
      %v480 = vadd.f32 %v316, %v479
      %v481 = vpop.f32.mrb[0].mxu0
      %482 = vmatprep.mubr.f32.mxu0 0.0
      %483 = vmatmul.mubr.f32.gmra.mrb[0].mxu0 %v194
      %v484 = vpop.f32.mrb[0].mxu0
      %v485 = vadd.f32 %v316, %v484
      %v486 = vpop.f32.mrb[0].mxu0
      %487 = vmatprep.mubr.f32.mxu0 0.0
      %488 = vmatmul.mubr.f32.gmra.mrb[0].mxu0 %v195
      %v489 = vpop.f32.mrb[0].mxu0
      %v490 = vadd.f32 %v316, %v489
      %v491 = vpop.f32.mrb[0].mxu0
      %492 = vmatprep.mubr.f32.mxu0 0.0
      %493 = vmatmul.mubr.f32.gmra.mrb[0].mxu0 %v196
      %v494 = vpop.f32.mrb[0].mxu0
      %v495 = vadd.f32 %v316, %v494
      %v496 = vpop.f32.mrb[0].mxu0
      %497 = vmatprep.mubr.f32.mxu0 0.0
      %498 = vmatmul.mubr.f32.gmra.mrb[0].mxu0 %v197
      %v499 = vpop.f32.mrb[0].mxu0
      %v500 = vadd.f32 %v316, %v499
      %v501 = vpop.f32.mrb[0].mxu0
      %502 = vmatprep.mubr.f32.mxu0 0.0
      %503 = vmatmul.mubr.f32.gmra.mrb[0].mxu0 %v198
      %v504 = vpop.f32.mrb[0].mxu0
      %v505 = vadd.f32 %v316, %v504
      %v506 = vpop.f32.mrb[0].mxu0
      %507 = vmatprep.mubr.f32.mxu0 0.0
      %508 = vmatmul.mubr.f32.gmra.mrb[0].mxu0 %v199
      %v509 = vpop.f32.mrb[0].mxu0
      %v510 = vadd.f32 %v316, %v509
      %v511 = vpop.f32.mrb[0].mxu0
      %512 = vmatprep.mubr.f32.mxu0 0.0
      %513 = vmatmul.mubr.f32.gmra.mrb[0].mxu0 %v200
      %v514 = vpop.f32.mrb[0].mxu0
      %v515 = vadd.f32 %v316, %v514
      %v516 = vpop.f32.mrb[0].mxu0
      %517 = vmatprep.mubr.f32.mxu0 0.0
      %518 = vmatmul.mubr.f32.gmra.mrb[0].mxu0 %v201
      %v519 = vpop.f32.mrb[0].mxu0
      %v520 = vadd.f32 %v316, %v519
      %v521 = vpop.f32.mrb[0].mxu0
      %522 = vmatprep.mubr.f32.mxu0 0.0
      %523 = vmatmul.mubr.f32.gmra.mrb[0].mxu0 %v202
      %v524 = vpop.f32.mrb[0].mxu0
      %v525 = vadd.f32 %v316, %v524
      %v526 = vpop.f32.mrb[0].mxu0
      %527 = vmatprep.mubr.f32.mxu0 0.0
      %528 = vmatmul.mubr.f32.gmra.mrb[0].mxu0 %v203
      %v529 = vpop.f32.mrb[0].mxu0
      %v530 = vadd.f32 %v316, %v529
      %v531 = vpop.f32.mrb[0].mxu0
      %532 = vmatprep.mubr.f32.mxu0 0.0
      %533 = vmatmul.mubr.f32.gmra.mrb[0].mxu0 %v204
      %v534 = vpop.f32.mrb[0].mxu0
      %v535 = vadd.f32 %v316, %v534
      %v536 = vpop.f32.mrb[0].mxu0
      %537 = vmatprep.mubr.f32.mxu0 0.0
      %538 = vmatmul.mubr.f32.gmra.mrb[0].mxu0 %v205
      %v539 = vpop.f32.mrb[0].mxu0
      %v540 = vadd.f32 %v316, %v539
      %v541 = vpop.f32.mrb[0].mxu0
      %542 = vmatprep.mubr.f32.mxu0 0.0
      %543 = vmatmul.mubr.f32.gmra.mrb[0].mxu0 %v206
      %v544 = vpop.f32.mrb[0].mxu0
      %v545 = vadd.f32 %v316, %v544
      %v546 = vpop.f32.mrb[0].mxu0
      %547 = vmatprep.mubr.f32.mxu0 0.0
      %548 = vmatmul.mubr.f32.gmra.mrb[0].mxu0 %v207
      %v549 = vpop.f32.mrb[0].mxu0
      %v550 = vadd.f32 %v316, %v549
      %v551 = vpop.f32.mrb[0].mxu0
      %552 = vmatprep.mubr.f32.mxu0 0.0
      %553 = vmatmul.mubr.f32.gmra.mrb[0].mxu0 %v208
      %v554 = vpop.f32.mrb[0].mxu0
      %v555 = vadd.f32 %v316, %v554
      %v556 = vpop.f32.mrb[0].mxu0
      %557 = vmatprep.mubr.f32.mxu0 0.0
      %558 = vmatmul.mubr.f32.gmra.mrb[0].mxu0 %v209
      %v559 = vpop.f32.mrb[0].mxu0
      %v560 = vadd.f32 %v316, %v559
      %v561 = vpop.f32.mrb[0].mxu0
      %562 = vmatprep.mubr.f32.mxu0 0.0
      %563 = vmatmul.mubr.f32.gmra.mrb[0].mxu0 %v210
      %v564 = vpop.f32.mrb[0].mxu0
      %v565 = vadd.f32 %v316, %v564
      %v566 = vpop.f32.mrb[0].mxu0
      %567 = vmatprep.mubr.f32.mxu0 0.0
      %568 = vmatmul.mubr.f32.gmra.mrb[0].mxu0 %v211
      %v569 = vpop.f32.mrb[0].mxu0
      %v570 = vadd.f32 %v316, %v569
      %v571 = vpop.f32.mrb[0].mxu0
      %572 = vmatprep.mubr.f32.mxu0 0.0
      %573 = vmatmul.mubr.f32.gmra.mrb[0].mxu0 %v212
      %v574 = vpop.f32.mrb[0].mxu0
      %v575 = vadd.f32 %v316, %v574
      %v576 = vpop.f32.mrb[0].mxu0
      %577 = vmatprep.mubr.f32.mxu0 0.0
      %578 = vmatmul.mubr.f32.gmra.mrb[0].mxu0 %v213
      %v579 = vpop.f32.mrb[0].mxu0
      %v580 = vadd.f32 %v316, %v579
      %v581 = vpop.f32.mrb[0].mxu0
      %582 = vmatprep.mubr.f32.mxu0 0.0
      %583 = vmatmul.mubr.f32.gmra.mrb[0].mxu0 %v214
      %v584 = vpop.f32.mrb[0].mxu0
      %v585 = vadd.f32 %v316, %v584
      %v586 = vpop.f32.mrb[0].mxu0
      %587 = vmatprep.mubr.f32.mxu0 0.0
      %588 = vmatmul.mubr.f32.gmra.mrb[0].mxu0 %v215
      %v589 = vpop.f32.mrb[0].mxu0
      %v590 = vadd.f32 %v316, %v589
      %v591 = vpop.f32.mrb[0].mxu0
      %592 = vmatprep.mubr.f32.mxu0 0.0
      %593 = vmatmul.mubr.f32.gmra.mrb[0].mxu0 %v216
      %v594 = vpop.f32.mrb[0].mxu0
      %v595 = vadd.f32 %v316, %v594
      %v596 = vpop.f32.mrb[0].mxu0
      %597 = vmatprep.mubr.f32.mxu0 0.0
      %598 = vmatmul.mubr.f32.gmra.mrb[0].mxu0 %v217
      %v599 = vpop.f32.mrb[0].mxu0
      %v600 = vadd.f32 %v316, %v599
      %v601 = vpop.f32.mrb[0].mxu0
      %602 = vmatprep.mubr.f32.mxu0 0.0
      %603 = vmatmul.mubr.f32.gmra.mrb[0].mxu0 %v218
      %v604 = vpop.f32.mrb[0].mxu0
      %v605 = vadd.f32 %v316, %v604
      %v606 = vpop.f32.mrb[0].mxu0
      %607 = vmatprep.mubr.f32.mxu0 0.0
      %608 = vmatmul.mubr.f32.gmra.mrb[0].mxu0 %v219
      %v609 = vpop.f32.mrb[0].mxu0
      %v610 = vadd.f32 %v316, %v609
      %v611 = vpop.f32.mrb[0].mxu0
      %612 = vmatprep.mubr.f32.mxu0 0.0
      %613 = vmatmul.mubr.f32.gmra.mrb[0].mxu0 %v220
      %v614 = vpop.f32.mrb[0].mxu0
      %v615 = vadd.f32 %v316, %v614
      %v616 = vpop.f32.mrb[0].mxu0
      %617 = vmatprep.mubr.f32.mxu0 0.0
      %618 = vmatmul.mubr.f32.gmra.mrb[0].mxu0 %v221
      %v619 = vpop.f32.mrb[0].mxu0
      %v620 = vadd.f32 %v316, %v619
      %v621 = vpop.f32.mrb[0].mxu0
      %622 = vmatprep.mubr.f32.mxu0 0.0
      %623 = vmatmul.mubr.f32.gmra.mrb[0].mxu0 %v222
      %v624 = vpop.f32.mrb[0].mxu0
      %v625 = vadd.f32 %v316, %v624
      %v626 = vpop.f32.mrb[0].mxu0
      %627 = vmatprep.mubr.f32.mxu0 0.0
      %628 = vmatmul.mubr.f32.gmra.mrb[0].mxu0 %v223
      %v629 = vpop.f32.mrb[0].mxu0
      %v630 = vadd.f32 %v316, %v629
      %v631 = vpop.f32.mrb[0].mxu0
      %632 = vmatprep.mubr.f32.mxu0 0.0
      %633 = vmatmul.mubr.f32.gmra.mrb[0].mxu0 %v224
      %v634 = vpop.f32.mrb[0].mxu0
      %v635 = vadd.f32 %v316, %v634
      %v636 = vpop.f32.mrb[0].mxu0
      %637 = vmatprep.mubr.f32.mxu0 0.0
      %638 = vmatmul.mubr.f32.gmra.mrb[0].mxu0 %v225
      %v639 = vpop.f32.mrb[0].mxu0
      %v640 = vadd.f32 %v316, %v639
      %v641 = vpop.f32.mrb[0].mxu0
      %642 = vmatprep.mubr.f32.mxu0 0.0
      %643 = vmatmul.mubr.f32.gmra.mrb[0].mxu0 %v226
      %v644 = vpop.f32.mrb[0].mxu0
      %v645 = vadd.f32 %v316, %v644
      %v646 = vpop.f32.mrb[0].mxu0
      %647 = vmatprep.mubr.f32.mxu0 0.0
      %648 = vmatmul.mubr.f32.gmra.mrb[0].mxu0 %v227
      %v649 = vpop.f32.mrb[0].mxu0
      %v650 = vadd.f32 %v316, %v649
      %v651 = vpop.f32.mrb[0].mxu0
      %652 = vmatprep.mubr.f32.mxu0 0.0
      %653 = vmatmul.mubr.f32.gmra.mrb[0].mxu0 %v228
      %v654 = vpop.f32.mrb[0].mxu0
      %v655 = vadd.f32 %v316, %v654
      %v656 = vpop.f32.mrb[0].mxu0
      %657 = vmatprep.mubr.f32.mxu0 0.0
      %658 = vmatmul.mubr.f32.gmra.mrb[0].mxu0 %v229
      %v659 = vpop.f32.mrb[0].mxu0
      %v660 = vadd.f32 %v316, %v659
      %v661 = vpop.f32.mrb[0].mxu0
      %662 = vmatprep.mubr.f32.mxu0 0.0
      %663 = vmatmul.mubr.f32.gmra.mrb[0].mxu0 %v230
      %v664 = vpop.f32.mrb[0].mxu0
      %v665 = vadd.f32 %v316, %v664
      %v666 = vpop.f32.mrb[0].mxu0
      %667 = vmatprep.mubr.f32.mxu0 0.0
      %668 = vmatmul.mubr.f32.gmra.mrb[0].mxu0 %v231
      %v669 = vpop.f32.mrb[0].mxu0
      %v670 = vadd.f32 %v316, %v669
      %v671 = vpop.f32.mrb[0].mxu0
      %672 = vmatprep.mubr.f32.mxu0 0.0
      %673 = vmatmul.mubr.f32.gmra.mrb[0].mxu0 %v232
      %v674 = vpop.f32.mrb[0].mxu0
      %v675 = vadd.f32 %v316, %v674
      %v676 = vpop.f32.mrb[0].mxu0
      %677 = vmatprep.mubr.f32.mxu0 0.0
      %678 = vmatmul.mubr.f32.gmra.mrb[0].mxu0 %v233
      %v679 = vpop.f32.mrb[0].mxu0
      %v680 = vadd.f32 %v316, %v679
      %v681 = vpop.f32.mrb[0].mxu0
      %682 = vmatprep.mubr.f32.mxu0 0.0
      %683 = vmatmul.mubr.f32.gmra.mrb[0].mxu0 %v234
      %v684 = vpop.f32.mrb[0].mxu0
      %v685 = vadd.f32 %v316, %v684
      %v686 = vpop.f32.mrb[0].mxu0
      %687 = vmatprep.mubr.f32.mxu0 0.0
      %688 = vmatmul.mubr.f32.gmra.mrb[0].mxu0 %v235
      %v689 = vpop.f32.mrb[0].mxu0
      %v690 = vadd.f32 %v316, %v689
      %v691 = vpop.f32.mrb[0].mxu0
      %692 = vmatprep.mubr.f32.mxu0 0.0
      %693 = vmatmul.mubr.f32.gmra.mrb[0].mxu0 %v236
      %v694 = vpop.f32.mrb[0].mxu0
      %v695 = vadd.f32 %v316, %v694
      %v696 = vpop.f32.mrb[0].mxu0
      %697 = vmatprep.mubr.f32.mxu0 0.0
      %698 = vmatmul.mubr.f32.gmra.mrb[0].mxu0 %v237
      %v699 = vpop.f32.mrb[0].mxu0
      %v700 = vadd.f32 %v316, %v699
      %v701 = vpop.f32.mrb[0].mxu0
      %702 = vmatprep.mubr.f32.mxu0 0.0
      %703 = vmatmul.mubr.f32.gmra.mrb[0].mxu0 %v238
      %v704 = vpop.f32.mrb[0].mxu0
      %v705 = vadd.f32 %v316, %v704
      %v706 = vpop.f32.mrb[0].mxu0
      %707 = vmatprep.mubr.f32.mxu0 0.0
      %708 = vmatmul.mubr.f32.gmra.mrb[0].mxu0 %v239
      %v709 = vpop.f32.mrb[0].mxu0
      %v710 = vadd.f32 %v316, %v709
      %v711 = vpop.f32.mrb[0].mxu0
      %712 = vmatprep.mubr.f32.mxu0 0.0
      %713 = vmatmul.mubr.f32.gmra.mrb[0].mxu0 %v240
      %v714 = vpop.f32.mrb[0].mxu0
      %v715 = vadd.f32 %v316, %v714
      %v716 = vpop.f32.mrb[0].mxu0
      %717 = vmatprep.mubr.f32.mxu0 0.0
      %718 = vmatmul.mubr.f32.gmra.mrb[0].mxu0 %v241
      %v719 = vpop.f32.mrb[0].mxu0
      %v720 = vadd.f32 %v316, %v719
      %v721 = vpop.f32.mrb[0].mxu0
      %722 = vmatprep.mubr.f32.mxu0 0.0
      %723 = vmatmul.mubr.f32.gmra.mrb[0].mxu0 %v242
      %v724 = vpop.f32.mrb[0].mxu0
      %v725 = vadd.f32 %v316, %v724
      %v726 = vpop.f32.mrb[0].mxu0
      %727 = vmatprep.mubr.f32.mxu0 0.0
      %728 = vmatmul.mubr.f32.gmra.mrb[0].mxu0 %v243
      %v729 = vpop.f32.mrb[0].mxu0
      %v730 = vadd.f32 %v316, %v729
      %v731 = vpop.f32.mrb[0].mxu0
      %732 = vmatprep.mubr.f32.mxu0 0.0
      %733 = vmatmul.mubr.f32.gmra.mrb[0].mxu0 %v244
      %v734 = vpop.f32.mrb[0].mxu0
      %v735 = vadd.f32 %v316, %v734
      %v736 = vpop.f32.mrb[0].mxu0
      %737 = vmatprep.mubr.f32.mxu0 0.0
      %738 = vmatmul.mubr.f32.gmra.mrb[0].mxu0 %v245
      %v739 = vpop.f32.mrb[0].mxu0
      %v740 = vadd.f32 %v316, %v739
      %v741 = vpop.f32.mrb[0].mxu0
      %742 = vmatprep.mubr.f32.mxu0 0.0
      %743 = vmatmul.mubr.f32.gmra.mrb[0].mxu0 %v246
      %v744 = vpop.f32.mrb[0].mxu0
      %v745 = vadd.f32 %v316, %v744
      %v746 = vpop.f32.mrb[0].mxu0
      %747 = vmatprep.mubr.f32.mxu0 0.0
      %748 = vmatmul.mubr.f32.gmra.mrb[0].mxu0 %v247
      %v749 = vpop.f32.mrb[0].mxu0
      %v750 = vadd.f32 %v316, %v749
      %v751 = vpop.f32.mrb[0].mxu0
      %752 = vmatprep.mubr.f32.mxu0 0.0
      %753 = vmatmul.mubr.f32.gmra.mrb[0].mxu0 %v248
      %v754 = vpop.f32.mrb[0].mxu0
      %v755 = vadd.f32 %v316, %v754
      %v756 = vpop.f32.mrb[0].mxu0
      %757 = vmatprep.mubr.f32.mxu0 0.0
      %758 = vmatmul.mubr.f32.gmra.mrb[0].mxu0 %v249
      %v759 = vpop.f32.mrb[0].mxu0
      %v760 = vadd.f32 %v316, %v759
      %v761 = vpop.f32.mrb[0].mxu0
      %762 = vmatprep.mubr.f32.mxu0 0.0
      %763 = vmatmul.mubr.f32.gmra.mrb[0].mxu0 %v250
      %v764 = vpop.f32.mrb[0].mxu0
      %v765 = vadd.f32 %v316, %v764
      %v766 = vpop.f32.mrb[0].mxu0
      %767 = vmatprep.mubr.f32.mxu0 0.0
      %768 = vmatmul.mubr.f32.gmra.mrb[0].mxu0 %v251
      %v769 = vpop.f32.mrb[0].mxu0
      %v770 = vadd.f32 %v316, %v769
      %v771 = vpop.f32.mrb[0].mxu0
      %772 = vmatprep.mubr.f32.mxu0 0.0
      %773 = vmatmul.mubr.f32.gmra.mrb[0].mxu0 %v252
      %v774 = vpop.f32.mrb[0].mxu0
      %v775 = vadd.f32 %v316, %v774
      %v776 = vpop.f32.mrb[0].mxu0
      %777 = vmatprep.mubr.f32.mxu0 0.0
      %778 = vmatmul.mubr.f32.gmra.mrb[0].mxu0 %v253
      %v779 = vpop.f32.mrb[0].mxu0
      %v780 = vadd.f32 %v316, %v779
      %v781 = vpop.f32.mrb[0].mxu0
      %782 = vmatprep.mubr.f32.mxu0 0.0
      %783 = vmatmul.mubr.f32.gmra.mrb[0].mxu0 %v254
      %v784 = vpop.f32.mrb[0].mxu0
      %v785 = vadd.f32 %v316, %v784
      %v786 = vpop.f32.mrb[0].mxu0
      %787 = vmatprep.mubr.f32.mxu0 0.0
      %788 = vmatmul.mubr.f32.gmra.mrb[0].mxu0 %v255
      %v789 = vpop.f32.mrb[0].mxu0
      %v790 = vadd.f32 %v316, %v789
      %v791 = vpop.f32.mrb[0].mxu0
      %792 = vmatprep.mubr.f32.mxu0 0.0
      %793 = vmatmul.mubr.f32.gmra.mrb[0].mxu0 %v256
      %v794 = vpop.f32.mrb[0].mxu0
      %v795 = vadd.f32 %v316, %v794
      %v796 = vpop.f32.mrb[0].mxu0
      %797 = vmatprep.mubr.f32.mxu0 0.0
      %798 = vmatmul.mubr.f32.gmra.mrb[0].mxu0 %v257
      %v799 = vpop.f32.mrb[0].mxu0
      %v800 = vadd.f32 %v316, %v799
      %v801 = vpop.f32.mrb[0].mxu0
      %802 = vmatprep.mubr.f32.mxu0 0.0
      %803 = vmatmul.mubr.f32.gmra.mrb[0].mxu0 %v258
      %v804 = vpop.f32.mrb[0].mxu0
      %v805 = vadd.f32 %v316, %v804
      %v806 = vpop.f32.mrb[0].mxu0
      %807 = vmatprep.mubr.f32.mxu0 0.0
      %808 = vmatmul.mubr.f32.gmra.mrb[0].mxu0 %v259
      %v809 = vpop.f32.mrb[0].mxu0
      %v810 = vadd.f32 %v316, %v809
      %v811 = vpop.f32.mrb[0].mxu0
      %812 = vmatprep.mubr.f32.mxu0 0.0
      %813 = vmatmul.mubr.f32.gmra.mrb[0].mxu0 %v260
      %v814 = vpop.f32.mrb[0].mxu0
      %v815 = vadd.f32 %v316, %v814
      %v816 = vpop.f32.mrb[0].mxu0
      %817 = vmatprep.mubr.f32.mxu0 0.0
      %818 = vmatmul.mubr.f32.gmra.mrb[0].mxu0 %v261
      %v819 = vpop.f32.mrb[0].mxu0
      %v820 = vadd.f32 %v316, %v819
      %v821 = vpop.f32.mrb[0].mxu0
      %822 = vmatprep.mubr.f32.mxu0 0.0
      %823 = vmatmul.mubr.f32.gmra.mrb[0].mxu0 %v262
      %v824 = vpop.f32.mrb[0].mxu0
      %v825 = vadd.f32 %v316, %v824
      %v826 = vpop.f32.mrb[0].mxu0
      %827 = vmatprep.mubr.f32.mxu0 0.0
      %828 = vmatmul.mubr.f32.gmra.mrb[0].mxu0 %v263
      %v829 = vpop.f32.mrb[0].mxu0
      %v830 = vadd.f32 %v316, %v829
      %v831 = vpop.f32.mrb[0].mxu0
      %832 = vmatprep.mubr.f32.mxu0 0.0
      %833 = vmatmul.mubr.f32.gmra.mrb[0].mxu0 %v264
      %v834 = vpop.f32.mrb[0].mxu0
      %v835 = vadd.f32 %v316, %v834
      %v836 = vpop.f32.mrb[0].mxu0
      %837 = vmatprep.mubr.f32.mxu0 0.0
      %838 = vmatmul.mubr.f32.gmra.mrb[0].mxu0 %v265
      %v839 = vpop.f32.mrb[0].mxu0
      %v840 = vadd.f32 %v316, %v839
      %v841 = vpop.f32.mrb[0].mxu0
      %842 = vmatprep.mubr.f32.mxu0 0.0
      %843 = vmatmul.mubr.f32.gmra.mrb[0].mxu0 %v266
      %v844 = vpop.f32.mrb[0].mxu0
      %v845 = vadd.f32 %v316, %v844
      %v846 = vpop.f32.mrb[0].mxu0
      %847 = vmatprep.mubr.f32.mxu0 0.0
      %848 = vmatmul.mubr.f32.gmra.mrb[0].mxu0 %v267
      %v849 = vpop.f32.mrb[0].mxu0
      %v850 = vadd.f32 %v316, %v849
      %v851 = vpop.f32.mrb[0].mxu0
      %852 = vmatprep.mubr.f32.mxu0 0.0
      %853 = vmatmul.mubr.f32.gmra.mrb[0].mxu0 %v268
      %v854 = vpop.f32.mrb[0].mxu0
      %v855 = vadd.f32 %v316, %v854
      %v856 = vpop.f32.mrb[0].mxu0
      %857 = vmatprep.mubr.f32.mxu0 0.0
      %858 = vmatmul.mubr.f32.gmra.mrb[0].mxu0 %v269
      %v859 = vpop.f32.mrb[0].mxu0
      %v860 = vadd.f32 %v316, %v859
      %v861 = vpop.f32.mrb[0].mxu0
      %862 = vmatprep.mubr.f32.mxu0 0.0
      %863 = vmatmul.mubr.f32.gmra.mrb[0].mxu0 %v270
      %v864 = vpop.f32.mrb[0].mxu0
      %v865 = vadd.f32 %v316, %v864
      %v866 = vpop.f32.mrb[0].mxu0
      %867 = vmatprep.mubr.f32.mxu0 0.0
      %868 = vmatmul.mubr.f32.gmra.mrb[0].mxu0 %v271
      %v869 = vpop.f32.mrb[0].mxu0
      %v870 = vadd.f32 %v316, %v869
      %v871 = vpop.f32.mrb[0].mxu0
      %872 = vmatprep.mubr.f32.mxu0 0.0
      %873 = vmatmul.mubr.f32.gmra.mrb[0].mxu0 %v272
      %v874 = vpop.f32.mrb[0].mxu0
      %v875 = vadd.f32 %v316, %v874
      %v876 = vpop.f32.mrb[0].mxu0
      %877 = vmatprep.mubr.f32.mxu0 0.0
      %878 = vmatmul.mubr.f32.gmra.mrb[0].mxu0 %v273
      %v879 = vpop.f32.mrb[0].mxu0
      %v880 = vadd.f32 %v316, %v879
      %v881 = vpop.f32.mrb[0].mxu0
      %882 = vmatprep.mubr.f32.mxu0 0.0
      %883 = vmatmul.mubr.f32.gmra.mrb[0].mxu0 %v274
      %v884 = vpop.f32.mrb[0].mxu0
      %v885 = vadd.f32 %v316, %v884
      %v886 = vpop.f32.mrb[0].mxu0
      %887 = vmatprep.mubr.f32.mxu0 0.0
      %888 = vmatmul.mubr.f32.gmra.mrb[0].mxu0 %v275
      %v889 = vpop.f32.mrb[0].mxu0
      %v890 = vadd.f32 %v316, %v889
      %v891 = vpop.f32.mrb[0].mxu0
      %892 = vmatprep.mubr.f32.mxu0 0.0
      %893 = vmatmul.mubr.f32.gmra.mrb[0].mxu0 %v276
      %v894 = vpop.f32.mrb[0].mxu0
      %v895 = vadd.f32 %v316, %v894
      %v896 = vpop.f32.mrb[0].mxu0
      %897 = vmatprep.mubr.f32.mxu0 0.0
      %898 = vmatmul.mubr.f32.gmra.mrb[0].mxu0 %v277
      %v899 = vpop.f32.mrb[0].mxu0
      %v900 = vadd.f32 %v316, %v899
      %v901 = vpop.f32.mrb[0].mxu0
      %902 = vmatprep.mubr.f32.mxu0 0.0
      %903 = vmatmul.mubr.f32.gmra.mrb[0].mxu0 %v278
      %v904 = vpop.f32.mrb[0].mxu0
      %v905 = vadd.f32 %v316, %v904
      %v906 = vpop.f32.mrb[0].mxu0
      %907 = vmatprep.mubr.f32.mxu0 0.0
      %908 = vmatmul.mubr.f32.gmra.mrb[0].mxu0 %v279
      %v909 = vpop.f32.mrb[0].mxu0
      %v910 = vadd.f32 %v316, %v909
      %v911 = vpop.f32.mrb[0].mxu0
      %912 = vmatprep.mubr.f32.mxu0 0.0
      %913 = vmatmul.mubr.f32.gmra.mrb[0].mxu0 %v280
      %v914 = vpop.f32.mrb[0].mxu0
      %v915 = vadd.f32 %v316, %v914
      %v916 = vpop.f32.mrb[0].mxu0
      %917 = vmatprep.mubr.f32.mxu0 0.0
      %918 = vmatmul.mubr.f32.gmra.mrb[0].mxu0 %v281
      %v919 = vpop.f32.mrb[0].mxu0
      %v920 = vadd.f32 %v316, %v919
      %v921 = vpop.f32.mrb[0].mxu0
      %922 = vmatprep.mubr.f32.mxu0 0.0
      %923 = vmatmul.mubr.f32.gmra.mrb[0].mxu0 %v282
      %v924 = vpop.f32.mrb[0].mxu0
      %v925 = vadd.f32 %v316, %v924
      %v926 = vpop.f32.mrb[0].mxu0
      %927 = vmatprep.mubr.f32.mxu0 0.0
      %928 = vmatmul.mubr.f32.gmra.mrb[0].mxu0 %v283
      %v929 = vpop.f32.mrb[0].mxu0
      %v930 = vadd.f32 %v316, %v929
      %v931 = vpop.f32.mrb[0].mxu0
      %932 = vmatprep.mubr.f32.mxu0 0.0
      %933 = vmatmul.mubr.f32.gmra.mrb[0].mxu0 %v284
      %v934 = vpop.f32.mrb[0].mxu0
      %v935 = vadd.f32 %v316, %v934
      %v936 = vpop.f32.mrb[0].mxu0
      %937 = vmatprep.mubr.f32.mxu0 0.0
      %938 = vmatmul.mubr.f32.gmra.mrb[0].mxu0 %v285
      %v939 = vpop.f32.mrb[0].mxu0
      %v940 = vadd.f32 %v316, %v939
      %v941 = vpop.f32.mrb[0].mxu0
      %942 = vmatprep.mubr.f32.mxu0 0.0
      %943 = vmatmul.mubr.f32.gmra.mrb[0].mxu0 %v286
      %v944 = vpop.f32.mrb[0].mxu0
      %v945 = vadd.f32 %v316, %v944
      %v946 = vpop.f32.mrb[0].mxu0
      %947 = vmatprep.mubr.f32.mxu0 0.0
      %948 = vmatmul.mubr.f32.gmra.mrb[0].mxu0 %v287
      %v949 = vpop.f32.mrb[0].mxu0
      %v950 = vadd.f32 %v316, %v949
      %v951 = vpop.f32.mrb[0].mxu0
      %952 = vmatprep.mubr.f32.mxu0 0.0
      %953 = vmatmul.mubr.f32.gmra.mrb[0].mxu0 %v288
      %v954 = vpop.f32.mrb[0].mxu0
      %v955 = vadd.f32 %v316, %v954
      %v956 = vpop.f32.mrb[0].mxu0
      %957 = vmatprep.mubr.f32.mxu0 0.0
      %958 = vmatmul.mubr.f32.gmra.mrb[0].mxu0 %v289
      %v959 = vpop.f32.mrb[0].mxu0
      %v960 = vadd.f32 %v316, %v959
      %v961 = vpop.f32.mrb[0].mxu0
      %962 = vmatprep.mubr.f32.mxu0 0.0
      %963 = vmatmul.mubr.f32.gmra.mrb[0].mxu0 %v290
      %v964 = vpop.f32.mrb[0].mxu0
      %v965 = vadd.f32 %v316, %v964
      %v966 = vpop.f32.mrb[0].mxu0
      %967 = vmatprep.mubr.f32.mxu0 0.0
      %968 = vmatmul.mubr.f32.gmra.mrb[0].mxu0 %v291
      %v969 = vpop.f32.mrb[0].mxu0
      %v970 = vadd.f32 %v316, %v969
      %v971 = vpop.f32.mrb[0].mxu0
      %972 = vmatprep.mubr.f32.mxu0 0.0
      %973 = vmatmul.mubr.f32.gmra.mrb[0].mxu0 %v292
      %v974 = vpop.f32.mrb[0].mxu0
      %v975 = vadd.f32 %v316, %v974
      %v976 = vpop.f32.mrb[0].mxu0
      %977 = vmatprep.mubr.f32.mxu0 0.0
      %978 = vmatmul.mubr.f32.gmra.mrb[0].mxu0 %v293
      %v979 = vpop.f32.mrb[0].mxu0
      %v980 = vadd.f32 %v316, %v979
      %v981 = vpop.f32.mrb[0].mxu0
      %982 = vmatprep.mubr.f32.mxu0 0.0
      %983 = vmatmul.mubr.f32.gmra.mrb[0].mxu0 %v294
      %v984 = vpop.f32.mrb[0].mxu0
      %v985 = vadd.f32 %v316, %v984
      %v986 = vpop.f32.mrb[0].mxu0
      %987 = vdwg.mxu0
      %v988 = vmax.f32 %v385, 0.0
      %v989 = vmax.f32 %v390, 0.0
      %v990 = vmax.f32 %v395, 0.0
      %v991 = vmax.f32 %v400, 0.0
      %v992 = vmax.f32 %v405, 0.0
      %v993 = vmax.f32 %v410, 0.0
      %v994 = vmax.f32 %v415, 0.0
      %v995 = vmax.f32 %v420, 0.0
      %v996 = vmax.f32 %v425, 0.0
      %v997 = vmax.f32 %v430, 0.0
      %v998 = vmax.f32 %v435, 0.0
      %v999 = vmax.f32 %v440, 0.0
      %v1000 = vmax.f32 %v445, 0.0
      %v1001 = vmax.f32 %v450, 0.0
      %v1002 = vmax.f32 %v455, 0.0
      %v1003 = vmax.f32 %v460, 0.0
      %v1004 = vmax.f32 %v465, 0.0
      %v1005 = vmax.f32 %v470, 0.0
      %v1006 = vmax.f32 %v475, 0.0
      %v1007 = vmax.f32 %v480, 0.0
      %v1008 = vmax.f32 %v485, 0.0
      %v1009 = vmax.f32 %v490, 0.0
      %v1010 = vmax.f32 %v495, 0.0
      %v1011 = vmax.f32 %v500, 0.0
      %v1012 = vmax.f32 %v505, 0.0
      %v1013 = vmax.f32 %v510, 0.0
      %v1014 = vmax.f32 %v515, 0.0
      %v1015 = vmax.f32 %v520, 0.0
      %v1016 = vmax.f32 %v525, 0.0
      %v1017 = vmax.f32 %v530, 0.0
      %v1018 = vmax.f32 %v535, 0.0
      %v1019 = vmax.f32 %v540, 0.0
      %v1020 = vmax.f32 %v545, 0.0
      %v1021 = vmax.f32 %v550, 0.0
      %v1022 = vmax.f32 %v555, 0.0
      %v1023 = vmax.f32 %v560, 0.0
      %v1024 = vmax.f32 %v565, 0.0
      %v1025 = vmax.f32 %v570, 0.0
      %v1026 = vmax.f32 %v575, 0.0
      %v1027 = vmax.f32 %v580, 0.0
      %v1028 = vmax.f32 %v585, 0.0
      %v1029 = vmax.f32 %v590, 0.0
      %v1030 = vmax.f32 %v595, 0.0
      %v1031 = vmax.f32 %v600, 0.0
      %v1032 = vmax.f32 %v605, 0.0
      %v1033 = vmax.f32 %v610, 0.0
      %v1034 = vmax.f32 %v615, 0.0
      %v1035 = vmax.f32 %v620, 0.0
      %v1036 = vmax.f32 %v625, 0.0
      %v1037 = vmax.f32 %v630, 0.0
      %v1038 = vmax.f32 %v635, 0.0
      %v1039 = vmax.f32 %v640, 0.0
      %v1040 = vmax.f32 %v645, 0.0
      %v1041 = vmax.f32 %v650, 0.0
      %v1042 = vmax.f32 %v655, 0.0
      %v1043 = vmax.f32 %v660, 0.0
      %v1044 = vmax.f32 %v665, 0.0
      %v1045 = vmax.f32 %v670, 0.0
      %v1046 = vmax.f32 %v675, 0.0
      %v1047 = vmax.f32 %v680, 0.0
      %v1048 = vmax.f32 %v685, 0.0
      %v1049 = vmax.f32 %v690, 0.0
      %v1050 = vmax.f32 %v695, 0.0
      %v1051 = vmax.f32 %v700, 0.0
      %v1052 = vmax.f32 %v705, 0.0
      %v1053 = vmax.f32 %v710, 0.0
      %v1054 = vmax.f32 %v715, 0.0
      %v1055 = vmax.f32 %v720, 0.0
      %v1056 = vmax.f32 %v725, 0.0
      %v1057 = vmax.f32 %v730, 0.0
      %v1058 = vmax.f32 %v735, 0.0
      %v1059 = vmax.f32 %v740, 0.0
      %v1060 = vmax.f32 %v745, 0.0
      %v1061 = vmax.f32 %v750, 0.0
      %v1062 = vmax.f32 %v755, 0.0
      %v1063 = vmax.f32 %v760, 0.0
      %v1064 = vmax.f32 %v765, 0.0
      %v1065 = vmax.f32 %v770, 0.0
      %v1066 = vmax.f32 %v775, 0.0
      %v1067 = vmax.f32 %v780, 0.0
      %v1068 = vmax.f32 %v785, 0.0
      %v1069 = vmax.f32 %v790, 0.0
      %v1070 = vmax.f32 %v795, 0.0
      %v1071 = vmax.f32 %v800, 0.0
      %v1072 = vmax.f32 %v805, 0.0
      %v1073 = vmax.f32 %v810, 0.0
      %v1074 = vmax.f32 %v815, 0.0
      %v1075 = vmax.f32 %v820, 0.0
      %v1076 = vmax.f32 %v825, 0.0
      %v1077 = vmax.f32 %v830, 0.0
      %v1078 = vmax.f32 %v835, 0.0
      %v1079 = vmax.f32 %v840, 0.0
      %v1080 = vmax.f32 %v845, 0.0
      %v1081 = vmax.f32 %v850, 0.0
      %v1082 = vmax.f32 %v855, 0.0
      %v1083 = vmax.f32 %v860, 0.0
      %v1084 = vmax.f32 %v865, 0.0
      %v1085 = vmax.f32 %v870, 0.0
      %v1086 = vmax.f32 %v875, 0.0
      %v1087 = vmax.f32 %v880, 0.0
      %v1088 = vmax.f32 %v885, 0.0
      %v1089 = vmax.f32 %v890, 0.0
      %v1090 = vmax.f32 %v895, 0.0
      %v1091 = vmax.f32 %v900, 0.0
      %v1092 = vmax.f32 %v905, 0.0
      %v1093 = vmax.f32 %v910, 0.0
      %v1094 = vmax.f32 %v915, 0.0
      %v1095 = vmax.f32 %v920, 0.0
      %v1096 = vmax.f32 %v925, 0.0
      %v1097 = vmax.f32 %v930, 0.0
      %v1098 = vmax.f32 %v935, 0.0
      %v1099 = vmax.f32 %v940, 0.0
      %v1100 = vmax.f32 %v945, 0.0
      %v1101 = vmax.f32 %v950, 0.0
      %v1102 = vmax.f32 %v955, 0.0
      %v1103 = vmax.f32 %v960, 0.0
      %v1104 = vmax.f32 %v965, 0.0
      %v1105 = vmax.f32 %v970, 0.0
      %v1106 = vmax.f32 %v975, 0.0
      %v1107 = vmax.f32 %v980, 0.0
      %v1108 = vmax.f32 %v985, 0.0
      %1109 = vst [vmem:[%s172] sm:$0xff] %v988
      %1110 = vst [vmem:[%s172 + $0x8] sm:$0xff] %v989
      %1111 = vst [vmem:[%s172 + $0x10] sm:$0xff] %v990
      %1112 = vst [vmem:[%s172 + $0x18] sm:$0xff] %v991
      %1113 = vst [vmem:[%s172 + $0x20] sm:$0xff] %v992
      %1114 = vst [vmem:[%s172 + $0x28] sm:$0xff] %v993
      %1115 = vst [vmem:[%s172 + $0x30] sm:$0xff] %v994
      %1116 = vst [vmem:[%s172 + $0x38] sm:$0xff] %v995
      %1117 = vst [vmem:[%s172 + $0x40] sm:$0xff] %v996
      %1118 = vst [vmem:[%s172 + $0x48] sm:$0xff] %v997
      %1119 = vst [vmem:[%s172 + $0x50] sm:$0xff] %v998
      %1120 = vst [vmem:[%s172 + $0x58] sm:$0xff] %v999
      %1121 = vst [vmem:[%s172 + $0x60] sm:$0xff] %v1000
      %1122 = vst [vmem:[%s172 + $0x68] sm:$0xff] %v1001
      %1123 = vst [vmem:[%s172 + $0x70] sm:$0xff] %v1002
      %1124 = vst [vmem:[%s172 + $0x78] sm:$0xff] %v1003
      %1125 = vst [vmem:[%s172 + $0x80] sm:$0xff] %v1004
      %1126 = vst [vmem:[%s172 + $0x88] sm:$0xff] %v1005
      %1127 = vst [vmem:[%s172 + $0x90] sm:$0xff] %v1006
      %1128 = vst [vmem:[%s172 + $0x98] sm:$0xff] %v1007
      %1129 = vst [vmem:[%s172 + $0xa0] sm:$0xff] %v1008
      %1130 = vst [vmem:[%s172 + $0xa8] sm:$0xff] %v1009
      %1131 = vst [vmem:[%s172 + $0xb0] sm:$0xff] %v1010
      %1132 = vst [vmem:[%s172 + $0xb8] sm:$0xff] %v1011
      %1133 = vst [vmem:[%s172 + $0xc0] sm:$0xff] %v1012
      %1134 = vst [vmem:[%s172 + $0xc8] sm:$0xff] %v1013
      %1135 = vst [vmem:[%s172 + $0xd0] sm:$0xff] %v1014
      %1136 = vst [vmem:[%s172 + $0xd8] sm:$0xff] %v1015
      %1137 = vst [vmem:[%s172 + $0xe0] sm:$0xff] %v1016
      %1138 = vst [vmem:[%s172 + $0xe8] sm:$0xff] %v1017
      %1139 = vst [vmem:[%s172 + $0xf0] sm:$0xff] %v1018
      %1140 = vst [vmem:[%s172 + $0xf8] sm:$0xff] %v1019
      %1141 = vst [vmem:[%s172 + $0x100] sm:$0xff] %v1020
      %1142 = vst [vmem:[%s172 + $0x108] sm:$0xff] %v1021
      %1143 = vst [vmem:[%s172 + $0x110] sm:$0xff] %v1022
      %1144 = vst [vmem:[%s172 + $0x118] sm:$0xff] %v1023
      %1145 = vst [vmem:[%s172 + $0x120] sm:$0xff] %v1024
      %1146 = vst [vmem:[%s172 + $0x128] sm:$0xff] %v1025
      %1147 = vst [vmem:[%s172 + $0x130] sm:$0xff] %v1026
      %1148 = vst [vmem:[%s172 + $0x138] sm:$0xff] %v1027
      %1149 = vst [vmem:[%s172 + $0x140] sm:$0xff] %v1028
      %1150 = vst [vmem:[%s172 + $0x148] sm:$0xff] %v1029
      %1151 = vst [vmem:[%s172 + $0x150] sm:$0xff] %v1030
      %1152 = vst [vmem:[%s172 + $0x158] sm:$0xff] %v1031
      %1153 = vst [vmem:[%s172 + $0x160] sm:$0xff] %v1032
      %1154 = vst [vmem:[%s172 + $0x168] sm:$0xff] %v1033
      %1155 = vst [vmem:[%s172 + $0x170] sm:$0xff] %v1034
      %1156 = vst [vmem:[%s172 + $0x178] sm:$0xff] %v1035
      %1157 = vst [vmem:[%s172 + $0x180] sm:$0xff] %v1036
      %1158 = vst [vmem:[%s172 + $0x188] sm:$0xff] %v1037
      %1159 = vst [vmem:[%s172 + $0x190] sm:$0xff] %v1038
      %1160 = vst [vmem:[%s172 + $0x198] sm:$0xff] %v1039
      %1161 = vst [vmem:[%s172 + $0x1a0] sm:$0xff] %v1040
      %1162 = vst [vmem:[%s172 + $0x1a8] sm:$0xff] %v1041
      %1163 = vst [vmem:[%s172 + $0x1b0] sm:$0xff] %v1042
      %1164 = vst [vmem:[%s172 + $0x1b8] sm:$0xff] %v1043
      %1165 = vst [vmem:[%s172 + $0x1c0] sm:$0xff] %v1044
      %1166 = vst [vmem:[%s172 + $0x1c8] sm:$0xff] %v1045
      %1167 = vst [vmem:[%s172 + $0x1d0] sm:$0xff] %v1046
      %1168 = vst [vmem:[%s172 + $0x1d8] sm:$0xff] %v1047
      %1169 = vst [vmem:[%s172 + $0x1e0] sm:$0xff] %v1048
      %1170 = vst [vmem:[%s172 + $0x1e8] sm:$0xff] %v1049
      %1171 = vst [vmem:[%s172 + $0x1f0] sm:$0xff] %v1050
      %1172 = vst [vmem:[%s172 + $0x1f8] sm:$0xff] %v1051
      %1173 = vst [vmem:[%s172 + $0x200] sm:$0xff] %v1052
      %1174 = vst [vmem:[%s172 + $0x208] sm:$0xff] %v1053
      %1175 = vst [vmem:[%s172 + $0x210] sm:$0xff] %v1054
      %1176 = vst [vmem:[%s172 + $0x218] sm:$0xff] %v1055
      %1177 = vst [vmem:[%s172 + $0x220] sm:$0xff] %v1056
      %1178 = vst [vmem:[%s172 + $0x228] sm:$0xff] %v1057
      %1179 = vst [vmem:[%s172 + $0x230] sm:$0xff] %v1058
      %1180 = vst [vmem:[%s172 + $0x238] sm:$0xff] %v1059
      %1181 = vst [vmem:[%s172 + $0x240] sm:$0xff] %v1060
      %1182 = vst [vmem:[%s172 + $0x248] sm:$0xff] %v1061
      %1183 = vst [vmem:[%s172 + $0x250] sm:$0xff] %v1062
      %1184 = vst [vmem:[%s172 + $0x258] sm:$0xff] %v1063
      %1185 = vst [vmem:[%s172 + $0x260] sm:$0xff] %v1064
      %1186 = vst [vmem:[%s172 + $0x268] sm:$0xff] %v1065
      %1187 = vst [vmem:[%s172 + $0x270] sm:$0xff] %v1066
      %1188 = vst [vmem:[%s172 + $0x278] sm:$0xff] %v1067
      %1189 = vst [vmem:[%s172 + $0x280] sm:$0xff] %v1068
      %1190 = vst [vmem:[%s172 + $0x288] sm:$0xff] %v1069
      %1191 = vst [vmem:[%s172 + $0x290] sm:$0xff] %v1070
      %1192 = vst [vmem:[%s172 + $0x298] sm:$0xff] %v1071
      %1193 = vst [vmem:[%s172 + $0x2a0] sm:$0xff] %v1072
      %1194 = vst [vmem:[%s172 + $0x2a8] sm:$0xff] %v1073
      %1195 = vst [vmem:[%s172 + $0x2b0] sm:$0xff] %v1074
      %1196 = vst [vmem:[%s172 + $0x2b8] sm:$0xff] %v1075
      %1197 = vst [vmem:[%s172 + $0x2c0] sm:$0xff] %v1076
      %1198 = vst [vmem:[%s172 + $0x2c8] sm:$0xff] %v1077
      %1199 = vst [vmem:[%s172 + $0x2d0] sm:$0xff] %v1078
      %1200 = vst [vmem:[%s172 + $0x2d8] sm:$0xff] %v1079
      %1201 = vst [vmem:[%s172 + $0x2e0] sm:$0xff] %v1080
      %1202 = vst [vmem:[%s172 + $0x2e8] sm:$0xff] %v1081
      %1203 = vst [vmem:[%s172 + $0x2f0] sm:$0xff] %v1082
      %1204 = vst [vmem:[%s172 + $0x2f8] sm:$0xff] %v1083
      %1205 = vst [vmem:[%s172 + $0x300] sm:$0xff] %v1084
      %1206 = vst [vmem:[%s172 + $0x308] sm:$0xff] %v1085
      %1207 = vst [vmem:[%s172 + $0x310] sm:$0xff] %v1086
      %1208 = vst [vmem:[%s172 + $0x318] sm:$0xff] %v1087
      %1209 = vst [vmem:[%s172 + $0x320] sm:$0xff] %v1088
      %1210 = vst [vmem:[%s172 + $0x328] sm:$0xff] %v1089
      %1211 = vst [vmem:[%s172 + $0x330] sm:$0xff] %v1090
      %1212 = vst [vmem:[%s172 + $0x338] sm:$0xff] %v1091
      %1213 = vst [vmem:[%s172 + $0x340] sm:$0xff] %v1092
      %1214 = vst [vmem:[%s172 + $0x348] sm:$0xff] %v1093
      %1215 = vst [vmem:[%s172 + $0x350] sm:$0xff] %v1094
      %1216 = vst [vmem:[%s172 + $0x358] sm:$0xff] %v1095
      %1217 = vst [vmem:[%s172 + $0x360] sm:$0xff] %v1096
      %1218 = vst [vmem:[%s172 + $0x368] sm:$0xff] %v1097
      %1219 = vst [vmem:[%s172 + $0x370] sm:$0xff] %v1098
      %1220 = vst [vmem:[%s172 + $0x378] sm:$0xff] %v1099
      %1221 = vst [vmem:[%s172 + $0x380] sm:$0xff] %v1100
      %1222 = vst [vmem:[%s172 + $0x388] sm:$0xff] %v1101
      %1223 = vst [vmem:[%s172 + $0x390] sm:$0xff] %v1102
      %1224 = vst [vmem:[%s172 + $0x398] sm:$0xff] %v1103
      %1225 = vst [vmem:[%s172 + $0x3a0] sm:$0xff] %v1104
      %1226 = vst [vmem:[%s172 + $0x3a8] sm:$0xff] %v1105
      %1227 = vst [vmem:[%s172 + $0x3b0] sm:$0xff] %v1106
      %1228 = vst [vmem:[%s172 + $0x3b8] sm:$0xff] %v1107
      %1229 = vst [vmem:[%s172 + $0x3c0] sm:$0xff] %v1108
      %s1230 = smul.u32 121, %s14
      %p1231 = scmp.lt.s32.totalorder %s1230, 241
      %s1232 = scalar_select %p1231, %s1230, 241
      %s1233 = smul.addr %s1232, 8
      %s1234 = scalar_lea.vmem %s3, %s1233
      // Predicated region
      $region33: #{_encoder_forward.5} parent=31 // pred_check
        %p1235 = pneg %p100
      $region34: #{_encoder_forward.5} parent=31 // pred_check_branch
        %1237 = sbr.rel (%p1235) target = $region36
      $region35: #{_encoder_forward.5} parent=31 // pred_region
        %s1238 = smul.u32 121, %s14
      $region36: #{_encoder_forward.5} parent=31 // pred_fallthru
        _
    $region32: #{_encoder_forward.5} parent=5 // pred_fallthru
      _
    %p1239 = scmp.le.s32.totalorder 2, %s9
    // Predicated region
    $region37: #{_encoder_forward.5} parent=5 // pred_check
      %p1240 = pneg %p1239
    $region38: #{_encoder_forward.5} parent=5 // pred_check_branch
      %1242 = sbr.rel (%p1240) target = $region40
    $region39: #{_encoder_forward.5} parent=5 // pred_region
      %s1243 = ssub.s32 %s9, 2
      // Predicated region
      $region41: #{_encoder_forward.5} parent=39 // pred_check
        %p1244 = pneg %p106
      $region42: #{_encoder_forward.5} parent=39 // pred_check_branch
        %1246 = sbr.rel (%p1244) target = $region44
      $region43: #{_encoder_forward.5} parent=39 // pred_region
        %s1247 = smul.u32 121, %s15
        %p1248 = scmp.lt.s32.totalorder %s1247, 241
        %s1249 = scalar_select %p1248, %s1247, 241
        %s1250 = smul.addr %s1249, 8
        %s1251 = scalar_lea.vmem %s3, %s1250
      $region44: #{_encoder_forward.5} parent=39 // pred_fallthru
        _
    $region40: #{_encoder_forward.5} parent=5 // pred_fallthru
      _
  $region6: #{_encoder_forward.5} parent=0 // loop_footer
    %s13 = sadd.s32 1, %s9
  $region7: #{_encoder_forward.5} parent=0 // loop_footer_branch
    %8 = sbr.rel target = $region3
  $region8: #{_encoder_forward.5} parent=0 // loop_exit
    _

// kernel: _encoder_forward.6
$region0: #{_encoder_forward.6}
  #allocation0 [shape = 'u32[]', space=smem, size = 0x4, offset = 0x4, fixed_abs, tag = 'smem constant byte address 0x4 - core index']
  #allocation1 [shape = 'u32[144,128]{1,0:T(1,128)}', space=vmem, size = 0x12000, scoped, tag = 'internal scratch']
  %s0 = inlined_call_operand.vmem [shape: f32[392,512], index: 0, kind: input, shape index: {}]
  %s1 = inlined_call_operand.vmem [shape: f32[512,128], index: 1, kind: input, shape index: {}]
  %s2 = inlined_call_operand.vmem [shape: f32[1,128], index: 2, kind: input, shape index: {}]
  %s3 = inlined_call_operand.vmem [shape: f32[392,128], index: 3, kind: output, shape index: {}]
  %s4 = sld [smem:[#allocation0]]
  $region22: #{_encoder_forward.6} parent=0
    _
  %s6 = ssub.s32 1, %s4
  %s7 = scalar_select 0, %s6, %s4
  // Predicated region
  $region2: #{_encoder_forward.6} parent=0 // pred_check
    _
  $region3: #{_encoder_forward.6} parent=0 // pred_check_branch
    %9 = sbr.rel (0) target = $region5
  $region4: #{_encoder_forward.6} parent=0 // pred_region
    _
  $region5: #{_encoder_forward.6} parent=0 // pred_fallthru
    _
  // Predicated region
  $region6: #{_encoder_forward.6} parent=0 // pred_check
    _
  $region7: #{_encoder_forward.6} parent=0 // pred_check_branch
    %11 = sbr.rel (0) target = $region9
  $region8: #{_encoder_forward.6} parent=0 // pred_region
    _
  $region9: #{_encoder_forward.6} parent=0 // pred_fallthru
    _
  // Predicated region
  $region10: #{_encoder_forward.6} parent=0 // pred_check
    _
  $region11: #{_encoder_forward.6} parent=0 // pred_check_branch
    %13 = sbr.rel (0) target = $region13
  $region12: #{_encoder_forward.6} parent=0 // pred_region
    _
  $region13: #{_encoder_forward.6} parent=0 // pred_fallthru
    _
  %v14 = vld [vmem:[%s0] sm:$0xff]
  %v15 = vld [vmem:[%s0 + $0x8] sm:$0xff]
  %v16 = vld [vmem:[%s0 + $0x10] sm:$0xff]
  %v17 = vld [vmem:[%s0 + $0x18] sm:$0xff]
  %v18 = vld [vmem:[%s0 + $0x20] sm:$0xff]
  %v19 = vld [vmem:[%s0 + $0x28] sm:$0xff]
  %v20 = vld [vmem:[%s0 + $0x30] sm:$0xff]
  %v21 = vld [vmem:[%s0 + $0x38] sm:$0xff]
  %v22 = vld [vmem:[%s0 + $0x40] sm:$0xff]
  %v23 = vld [vmem:[%s0 + $0x48] sm:$0xff]
  %v24 = vld [vmem:[%s0 + $0x50] sm:$0xff]
  %v25 = vld [vmem:[%s0 + $0x58] sm:$0xff]
  %v26 = vld [vmem:[%s0 + $0x60] sm:$0xff]
  %v27 = vld [vmem:[%s0 + $0x68] sm:$0xff]
  %v28 = vld [vmem:[%s0 + $0x70] sm:$0xff]
  %v29 = vld [vmem:[%s0 + $0x78] sm:$0xff]
  %v30 = vld [vmem:[%s0 + $0x80] sm:$0xff]
  %v31 = vld [vmem:[%s0 + $0x88] sm:$0xff]
  %v32 = vld [vmem:[%s0 + $0x90] sm:$0xff]
  %v33 = vld [vmem:[%s0 + $0x98] sm:$0xff]
  %v34 = vld [vmem:[%s0 + $0xa0] sm:$0xff]
  %v35 = vld [vmem:[%s0 + $0xa8] sm:$0xff]
  %v36 = vld [vmem:[%s0 + $0xb0] sm:$0xff]
  %v37 = vld [vmem:[%s0 + $0xb8] sm:$0xff]
  %v38 = vld [vmem:[%s0 + $0xc0] sm:$0xff]
  %v39 = vld [vmem:[%s0 + $0xc8] sm:$0xff]
  %v40 = vld [vmem:[%s0 + $0xd0] sm:$0xff]
  %v41 = vld [vmem:[%s0 + $0xd8] sm:$0xff]
  %v42 = vld [vmem:[%s0 + $0xe0] sm:$0xff]
  %v43 = vld [vmem:[%s0 + $0xe8] sm:$0xff]
  %v44 = vld [vmem:[%s0 + $0xf0] sm:$0xff]
  %v45 = vld [vmem:[%s0 + $0xf8] sm:$0xff]
  %v46 = vld [vmem:[%s0 + $0x100] sm:$0xff]
  %v47 = vld [vmem:[%s0 + $0x108] sm:$0xff]
  %v48 = vld [vmem:[%s0 + $0x110] sm:$0xff]
  %v49 = vld [vmem:[%s0 + $0x118] sm:$0xff]
  %v50 = vld [vmem:[%s0 + $0x120] sm:$0xff]
  %v51 = vld [vmem:[%s0 + $0x128] sm:$0xff]
  %v52 = vld [vmem:[%s0 + $0x130] sm:$0xff]
  %v53 = vld [vmem:[%s0 + $0x138] sm:$0xff]
  %v54 = vld [vmem:[%s0 + $0x140] sm:$0xff]
  %v55 = vld [vmem:[%s0 + $0x148] sm:$0xff]
  %v56 = vld [vmem:[%s0 + $0x150] sm:$0xff]
  %v57 = vld [vmem:[%s0 + $0x158] sm:$0xff]
  %v58 = vld [vmem:[%s0 + $0x160] sm:$0xff]
  %v59 = vld [vmem:[%s0 + $0x168] sm:$0xff]
  %v60 = vld [vmem:[%s0 + $0x170] sm:$0xff]
  %v61 = vld [vmem:[%s0 + $0x178] sm:$0xff]
  %v62 = vld [vmem:[%s0 + $0x180] sm:$0xff]
  %v63 = vld [vmem:[%s0 + $0x188] sm:$0xff]
  %v64 = vld [vmem:[%s0 + $0x190] sm:$0xff]
  %v65 = vld [vmem:[%s0 + $0x198] sm:$0xff]
  %v66 = vld [vmem:[%s0 + $0x1a0] sm:$0xff]
  %v67 = vld [vmem:[%s0 + $0x1a8] sm:$0xff]
  %v68 = vld [vmem:[%s0 + $0x1b0] sm:$0xff]
  %v69 = vld [vmem:[%s0 + $0x1b8] sm:$0xff]
  %v70 = vld [vmem:[%s0 + $0x1c0] sm:$0xff]
  %v71 = vld [vmem:[%s0 + $0x1c8] sm:$0xff]
  %v72 = vld [vmem:[%s0 + $0x1d0] sm:$0xff]
  %v73 = vld [vmem:[%s0 + $0x1d8] sm:$0xff]
  %v74 = vld [vmem:[%s0 + $0x1e0] sm:$0xff]
  %v75 = vld [vmem:[%s0 + $0x1e8] sm:$0xff]
  %v76 = vld [vmem:[%s0 + $0x1f0] sm:$0xff]
  %v77 = vld [vmem:[%s0 + $0x1f8] sm:$0xff]
  %v78 = vld [vmem:[%s0 + $0x200] sm:$0xff]
  %v79 = vld [vmem:[%s0 + $0x208] sm:$0xff]
  %v80 = vld [vmem:[%s0 + $0x210] sm:$0xff]
  %v81 = vld [vmem:[%s0 + $0x218] sm:$0xff]
  %v82 = vld [vmem:[%s0 + $0x220] sm:$0xff]
  %v83 = vld [vmem:[%s0 + $0x228] sm:$0xff]
  %v84 = vld [vmem:[%s0 + $0x230] sm:$0xff]
  %v85 = vld [vmem:[%s0 + $0x238] sm:$0xff]
  %v86 = vld [vmem:[%s0 + $0x240] sm:$0xff]
  %v87 = vld [vmem:[%s0 + $0x248] sm:$0xff]
  %v88 = vld [vmem:[%s0 + $0x250] sm:$0xff]
  %v89 = vld [vmem:[%s0 + $0x258] sm:$0xff]
  %v90 = vld [vmem:[%s0 + $0x260] sm:$0xff]
  %v91 = vld [vmem:[%s0 + $0x268] sm:$0xff]
  %v92 = vld [vmem:[%s0 + $0x270] sm:$0xff]
  %v93 = vld [vmem:[%s0 + $0x278] sm:$0xff]
  %v94 = vld [vmem:[%s0 + $0x280] sm:$0xff]
  %v95 = vld [vmem:[%s0 + $0x288] sm:$0xff]
  %v96 = vld [vmem:[%s0 + $0x290] sm:$0xff]
  %v97 = vld [vmem:[%s0 + $0x298] sm:$0xff]
  %v98 = vld [vmem:[%s0 + $0x2a0] sm:$0xff]
  %v99 = vld [vmem:[%s0 + $0x2a8] sm:$0xff]
  %v100 = vld [vmem:[%s0 + $0x2b0] sm:$0xff]
  %v101 = vld [vmem:[%s0 + $0x2b8] sm:$0xff]
  %v102 = vld [vmem:[%s0 + $0x2c0] sm:$0xff]
  %v103 = vld [vmem:[%s0 + $0x2c8] sm:$0xff]
  %v104 = vld [vmem:[%s0 + $0x2d0] sm:$0xff]
  %v105 = vld [vmem:[%s0 + $0x2d8] sm:$0xff]
  %v106 = vld [vmem:[%s0 + $0x2e0] sm:$0xff]
  %v107 = vld [vmem:[%s0 + $0x2e8] sm:$0xff]
  %v108 = vld [vmem:[%s0 + $0x2f0] sm:$0xff]
  %v109 = vld [vmem:[%s0 + $0x2f8] sm:$0xff]
  %v110 = vld [vmem:[%s0 + $0x300] sm:$0xff]
  %v111 = vld [vmem:[%s0 + $0x308] sm:$0xff]
  %v112 = vld [vmem:[%s0 + $0x310] sm:$0xff]
  %v113 = vld [vmem:[%s0 + $0x318] sm:$0xff]
  %v114 = vld [vmem:[%s0 + $0x320] sm:$0xff]
  %v115 = vld [vmem:[%s0 + $0x328] sm:$0xff]
  %v116 = vld [vmem:[%s0 + $0x330] sm:$0xff]
  %v117 = vld [vmem:[%s0 + $0x338] sm:$0xff]
  %v118 = vld [vmem:[%s0 + $0x340] sm:$0xff]
  %v119 = vld [vmem:[%s0 + $0x348] sm:$0xff]
  %v120 = vld [vmem:[%s0 + $0x350] sm:$0xff]
  %v121 = vld [vmem:[%s0 + $0x358] sm:$0xff]
  %v122 = vld [vmem:[%s0 + $0x360] sm:$0xff]
  %v123 = vld [vmem:[%s0 + $0x368] sm:$0xff]
  %v124 = vld [vmem:[%s0 + $0x370] sm:$0xff]
  %v125 = vld [vmem:[%s0 + $0x378] sm:$0xff]
  %v126 = vld [vmem:[%s0 + $0x380] sm:$0xff]
  %v127 = vld [vmem:[%s0 + $0x388] sm:$0xff]
  %v128 = vld [vmem:[%s0 + $0x390] sm:$0xff]
  %v129 = vld [vmem:[%s0 + $0x398] sm:$0xff]
  %v130 = vld [vmem:[%s0 + $0x3a0] sm:$0xff]
  %v131 = vld [vmem:[%s0 + $0x3a8] sm:$0xff]
  %v132 = vld [vmem:[%s0 + $0x3b0] sm:$0xff]
  %v133 = vld [vmem:[%s0 + $0x3b8] sm:$0xff]
  %v134 = vld [vmem:[%s0 + $0x3c0] sm:$0xff]
  %v135 = vld [vmem:[%s0 + $0x3c8] sm:$0xff]
  %v136 = vld [vmem:[%s0 + $0x3d0] sm:$0xff]
  %v137 = vld [vmem:[%s0 + $0x3d8] sm:$0xff]
  %v138 = vld [vmem:[%s0 + $0x3e0] sm:$0xff]
  %v139 = vld [vmem:[%s0 + $0x3e8] sm:$0xff]
  %v140 = vld [vmem:[%s0 + $0x3f0] sm:$0xff]
  %v141 = vld [vmem:[%s0 + $0x3f8] sm:$0xff]
  %v142 = vld [vmem:[%s0 + $0x400] sm:$0xff]
  %v143 = vld [vmem:[%s0 + $0x408] sm:$0xff]
  %v144 = vld [vmem:[%s0 + $0x410] sm:$0xff]
  %v145 = vld [vmem:[%s0 + $0x418] sm:$0xff]
  %v146 = vld [vmem:[%s0 + $0x420] sm:$0xff]
  %v147 = vld [vmem:[%s0 + $0x428] sm:$0xff]
  %v148 = vld [vmem:[%s0 + $0x430] sm:$0xff]
  %v149 = vld [vmem:[%s0 + $0x438] sm:$0xff]
  %v150 = vld [vmem:[%s0 + $0x440] sm:$0xff]
  %v151 = vld [vmem:[%s0 + $0x448] sm:$0xff]
  %v152 = vld [vmem:[%s0 + $0x450] sm:$0xff]
  %v153 = vld [vmem:[%s0 + $0x458] sm:$0xff]
  %v154 = vld [vmem:[%s0 + $0x460] sm:$0xff]
  %v155 = vld [vmem:[%s0 + $0x468] sm:$0xff]
  %v156 = vld [vmem:[%s0 + $0x470] sm:$0xff]
  %v157 = vld [vmem:[%s0 + $0x478] sm:$0xff]
  %v158 = vld [vmem:[%s0 + $0x480] sm:$0xff]
  %v159 = vld [vmem:[%s0 + $0x488] sm:$0xff]
  %v160 = vld [vmem:[%s0 + $0x490] sm:$0xff]
  %v161 = vld [vmem:[%s0 + $0x498] sm:$0xff]
  %v162 = vld [vmem:[%s0 + $0x4a0] sm:$0xff]
  %v163 = vld [vmem:[%s0 + $0x4a8] sm:$0xff]
  %v164 = vld [vmem:[%s0 + $0x4b0] sm:$0xff]
  %v165 = vld [vmem:[%s0 + $0x4b8] sm:$0xff]
  %v166 = vld [vmem:[%s0 + $0x4c0] sm:$0xff]
  %v167 = vld [vmem:[%s0 + $0x4c8] sm:$0xff]
  %v168 = vld [vmem:[%s0 + $0x4d0] sm:$0xff]
  %v169 = vld [vmem:[%s0 + $0x4d8] sm:$0xff]
  %v170 = vld [vmem:[%s0 + $0x4e0] sm:$0xff]
  %v171 = vld [vmem:[%s0 + $0x4e8] sm:$0xff]
  %v172 = vld [vmem:[%s0 + $0x4f0] sm:$0xff]
  %v173 = vld [vmem:[%s0 + $0x4f8] sm:$0xff]
  %v174 = vld [vmem:[%s0 + $0x500] sm:$0xff]
  %v175 = vld [vmem:[%s0 + $0x508] sm:$0xff]
  %v176 = vld [vmem:[%s0 + $0x510] sm:$0xff]
  %v177 = vld [vmem:[%s0 + $0x518] sm:$0xff]
  %v178 = vld [vmem:[%s0 + $0x520] sm:$0xff]
  %v179 = vld [vmem:[%s0 + $0x528] sm:$0xff]
  %v180 = vld [vmem:[%s0 + $0x530] sm:$0xff]
  %v181 = vld [vmem:[%s0 + $0x538] sm:$0xff]
  %v182 = vld [vmem:[%s0 + $0x540] sm:$0xff]
  %v183 = vld [vmem:[%s0 + $0x548] sm:$0xff]
  %v184 = vld [vmem:[%s0 + $0x550] sm:$0xff]
  %v185 = vld [vmem:[%s0 + $0x558] sm:$0xff]
  %v186 = vld [vmem:[%s0 + $0x560] sm:$0xff]
  %v187 = vld [vmem:[%s0 + $0x568] sm:$0xff]
  %v188 = vld [vmem:[%s0 + $0x570] sm:$0xff]
  %v189 = vld [vmem:[%s0 + $0x578] sm:$0xff]
  %v190 = vld [vmem:[%s0 + $0x580] sm:$0xff]
  %v191 = vld [vmem:[%s0 + $0x588] sm:$0xff]
  %v192 = vld [vmem:[%s0 + $0x590] sm:$0xff]
  %v193 = vld [vmem:[%s0 + $0x598] sm:$0xff]
  %v194 = vld [vmem:[%s0 + $0x5a0] sm:$0xff]
  %v195 = vld [vmem:[%s0 + $0x5a8] sm:$0xff]
  %v196 = vld [vmem:[%s0 + $0x5b0] sm:$0xff]
  %v197 = vld [vmem:[%s0 + $0x5b8] sm:$0xff]
  %v198 = vld [vmem:[%s0 + $0x5c0] sm:$0xff]
  %v199 = vld [vmem:[%s0 + $0x5c8] sm:$0xff]
  %v200 = vld [vmem:[%s0 + $0x5d0] sm:$0xff]
  %v201 = vld [vmem:[%s0 + $0x5d8] sm:$0xff]
  %v202 = vld [vmem:[%s0 + $0x5e0] sm:$0xff]
  %v203 = vld [vmem:[%s0 + $0x5e8] sm:$0xff]
  %v204 = vld [vmem:[%s0 + $0x5f0] sm:$0xff]
  %v205 = vld [vmem:[%s0 + $0x5f8] sm:$0xff]
  %v206 = vld [vmem:[%s0 + $0x600] sm:$0xff]
  %v207 = vld [vmem:[%s0 + $0x608] sm:$0xff]
  %v208 = vld [vmem:[%s0 + $0x610] sm:$0xff]
  %v209 = vld [vmem:[%s0 + $0x618] sm:$0xff]
  %v210 = vld [vmem:[%s1] sm:$0xff]
  %v211 = vld [vmem:[%s1 + $0x8] sm:$0xff]
  %v212 = vld [vmem:[%s1 + $0x10] sm:$0xff]
  %v213 = vld [vmem:[%s1 + $0x18] sm:$0xff]
  %v214 = vld [vmem:[%s1 + $0x20] sm:$0xff]
  %v215 = vld [vmem:[%s1 + $0x28] sm:$0xff]
  %v216 = vld [vmem:[%s1 + $0x30] sm:$0xff]
  %v217 = vld [vmem:[%s1 + $0x38] sm:$0xff]
  %v218 = vld [vmem:[%s1 + $0x40] sm:$0xff]
  %v219 = vld [vmem:[%s1 + $0x48] sm:$0xff]
  %v220 = vld [vmem:[%s1 + $0x50] sm:$0xff]
  %v221 = vld [vmem:[%s1 + $0x58] sm:$0xff]
  %v222 = vld [vmem:[%s1 + $0x60] sm:$0xff]
  %v223 = vld [vmem:[%s1 + $0x68] sm:$0xff]
  %v224 = vld [vmem:[%s1 + $0x70] sm:$0xff]
  %v225 = vld [vmem:[%s1 + $0x78] sm:$0xff]
  %v226 = vld [vmem:[%s1 + $0x80] sm:$0xff]
  %v227 = vld [vmem:[%s1 + $0x88] sm:$0xff]
  %v228 = vld [vmem:[%s1 + $0x90] sm:$0xff]
  %v229 = vld [vmem:[%s1 + $0x98] sm:$0xff]
  %v230 = vld [vmem:[%s1 + $0xa0] sm:$0xff]
  %v231 = vld [vmem:[%s1 + $0xa8] sm:$0xff]
  %v232 = vld [vmem:[%s1 + $0xb0] sm:$0xff]
  %v233 = vld [vmem:[%s1 + $0xb8] sm:$0xff]
  %v234 = vld [vmem:[%s1 + $0xc0] sm:$0xff]
  %v235 = vld [vmem:[%s1 + $0xc8] sm:$0xff]
  %v236 = vld [vmem:[%s1 + $0xd0] sm:$0xff]
  %v237 = vld [vmem:[%s1 + $0xd8] sm:$0xff]
  %v238 = vld [vmem:[%s1 + $0xe0] sm:$0xff]
  %v239 = vld [vmem:[%s1 + $0xe8] sm:$0xff]
  %v240 = vld [vmem:[%s1 + $0xf0] sm:$0xff]
  %v241 = vld [vmem:[%s1 + $0xf8] sm:$0xff]
  %v242 = vld [vmem:[%s1 + $0x100] sm:$0xff]
  %v243 = vld [vmem:[%s1 + $0x108] sm:$0xff]
  %v244 = vld [vmem:[%s1 + $0x110] sm:$0xff]
  %v245 = vld [vmem:[%s1 + $0x118] sm:$0xff]
  %v246 = vld [vmem:[%s1 + $0x120] sm:$0xff]
  %v247 = vld [vmem:[%s1 + $0x128] sm:$0xff]
  %v248 = vld [vmem:[%s1 + $0x130] sm:$0xff]
  %v249 = vld [vmem:[%s1 + $0x138] sm:$0xff]
  %v250 = vld [vmem:[%s1 + $0x140] sm:$0xff]
  %v251 = vld [vmem:[%s1 + $0x148] sm:$0xff]
  %v252 = vld [vmem:[%s1 + $0x150] sm:$0xff]
  %v253 = vld [vmem:[%s1 + $0x158] sm:$0xff]
  %v254 = vld [vmem:[%s1 + $0x160] sm:$0xff]
  %v255 = vld [vmem:[%s1 + $0x168] sm:$0xff]
  %v256 = vld [vmem:[%s1 + $0x170] sm:$0xff]
  %v257 = vld [vmem:[%s1 + $0x178] sm:$0xff]
  %v258 = vld [vmem:[%s1 + $0x180] sm:$0xff]
  %v259 = vld [vmem:[%s1 + $0x188] sm:$0xff]
  %v260 = vld [vmem:[%s1 + $0x190] sm:$0xff]
  %v261 = vld [vmem:[%s1 + $0x198] sm:$0xff]
  %v262 = vld [vmem:[%s1 + $0x1a0] sm:$0xff]
  %v263 = vld [vmem:[%s1 + $0x1a8] sm:$0xff]
  %v264 = vld [vmem:[%s1 + $0x1b0] sm:$0xff]
  %v265 = vld [vmem:[%s1 + $0x1b8] sm:$0xff]
  %v266 = vld [vmem:[%s1 + $0x1c0] sm:$0xff]
  %v267 = vld [vmem:[%s1 + $0x1c8] sm:$0xff]
  %v268 = vld [vmem:[%s1 + $0x1d0] sm:$0xff]
  %v269 = vld [vmem:[%s1 + $0x1d8] sm:$0xff]
  %v270 = vld [vmem:[%s1 + $0x1e0] sm:$0xff]
  %v271 = vld [vmem:[%s1 + $0x1e8] sm:$0xff]
  %v272 = vld [vmem:[%s1 + $0x1f0] sm:$0xff]
  %v273 = vld [vmem:[%s1 + $0x1f8] sm:$0xff]
  %v274 = vld [vmem:[%s2] sm:$0x1]
  %v276 = vlaneseq
  %v277 = vshrl.u32 %v276, 7
  %v278 = vsub.s32 0, %v277
  %v279 = vrot.slane %v274, %v278
  %281 = vmatprep.subr.mxu0 0.0
  %282 = vmatpush1.msra.mxu0 %v210
  %283 = vmatprep.subr.mxu0 0.0
  %284 = vmatpush1.msra.mxu0 %v211
  %285 = vmatprep.subr.mxu0 0.0
  %286 = vmatpush1.msra.mxu0 %v212
  %287 = vmatprep.subr.mxu0 0.0
  %288 = vmatpush1.msra.mxu0 %v213
  %289 = vmatprep.subr.mxu0 0.0
  %290 = vmatpush1.msra.mxu0 %v214
  %291 = vmatprep.subr.mxu0 0.0
  %292 = vmatpush1.msra.mxu0 %v215
  %293 = vmatprep.subr.mxu0 0.0
  %294 = vmatpush1.msra.mxu0 %v216
  %295 = vmatprep.subr.mxu0 0.0
  %296 = vmatpush1.msra.mxu0 %v217
  %297 = vmatprep.subr.mxu0 0.0
  %298 = vmatpush1.msra.mxu0 %v218
  %299 = vmatprep.subr.mxu0 0.0
  %300 = vmatpush1.msra.mxu0 %v219
  %301 = vmatprep.subr.mxu0 0.0
  %302 = vmatpush1.msra.mxu0 %v220
  %303 = vmatprep.subr.mxu0 0.0
  %304 = vmatpush1.msra.mxu0 %v221
  %305 = vmatprep.subr.mxu0 0.0
  %306 = vmatpush1.msra.mxu0 %v222
  %307 = vmatprep.subr.mxu0 0.0
  %308 = vmatpush1.msra.mxu0 %v223
  %309 = vmatprep.subr.mxu0 0.0
  %310 = vmatpush1.msra.mxu0 %v224
  %311 = vmatprep.subr.mxu0 0.0
  %312 = vmatpush1.msra.mxu0 %v225
  %313 = vmatprep.subr.mxu0 0.0
  %314 = vmatpush1.msra.mxu0 %v226
  %315 = vmatprep.subr.mxu0 0.0
  %316 = vmatpush1.msra.mxu0 %v227
  %317 = vmatprep.subr.mxu0 0.0
  %318 = vmatpush1.msra.mxu0 %v228
  %319 = vmatprep.subr.mxu0 0.0
  %320 = vmatpush1.msra.mxu0 %v229
  %321 = vmatprep.subr.mxu0 0.0
  %322 = vmatpush1.msra.mxu0 %v230
  %323 = vmatprep.subr.mxu0 0.0
  %324 = vmatpush1.msra.mxu0 %v231
  %325 = vmatprep.subr.mxu0 0.0
  %326 = vmatpush1.msra.mxu0 %v232
  %327 = vmatprep.subr.mxu0 0.0
  %328 = vmatpush1.msra.mxu0 %v233
  %329 = vmatprep.subr.mxu0 0.0
  %330 = vmatpush1.msra.mxu0 %v234
  %331 = vmatprep.subr.mxu0 0.0
  %332 = vmatpush1.msra.mxu0 %v235
  %333 = vmatprep.subr.mxu0 0.0
  %334 = vmatpush1.msra.mxu0 %v236
  %335 = vmatprep.subr.mxu0 0.0
  %336 = vmatpush1.msra.mxu0 %v237
  %337 = vmatprep.subr.mxu0 0.0
  %338 = vmatpush1.msra.mxu0 %v238
  %339 = vmatprep.subr.mxu0 0.0
  %340 = vmatpush1.msra.mxu0 %v239
  %341 = vmatprep.subr.mxu0 0.0
  %342 = vmatpush1.msra.mxu0 %v240
  %343 = vmatprep.subr.mxu0 0.0
  %344 = vmatpush1.msra.mxu0 %v241
  %345 = vmatprep.mubr.f32.mxu0 %v15
  %346 = vmatmul.mubr.f32.gmra.mrb[0].mxu0 %v14
  %v347 = vpop.f32.mrb[0].mxu0
  %v348 = vadd.f32 %v279, %v347
  %v349 = vpop.f32.mrb[0].mxu0
  %350 = vmatprep.mubr.f32.mxu0 %v19
  %351 = vmatmul.mubr.f32.gmra.mrb[0].mxu0 %v18
  %v352 = vpop.f32.mrb[0].mxu0
  %v353 = vadd.f32 %v279, %v352
  %v354 = vpop.f32.mrb[0].mxu0
  %355 = vmatprep.mubr.f32.mxu0 %v23
  %356 = vmatmul.mubr.f32.gmra.mrb[0].mxu0 %v22
  %v357 = vpop.f32.mrb[0].mxu0
  %v358 = vadd.f32 %v279, %v357
  %v359 = vpop.f32.mrb[0].mxu0
  %360 = vmatprep.mubr.f32.mxu0 %v27
  %361 = vmatmul.mubr.f32.gmra.mrb[0].mxu0 %v26
  %v362 = vpop.f32.mrb[0].mxu0
  %v363 = vadd.f32 %v279, %v362
  %v364 = vpop.f32.mrb[0].mxu0
  %365 = vmatprep.mubr.f32.mxu0 %v31
  %366 = vmatmul.mubr.f32.gmra.mrb[0].mxu0 %v30
  %v367 = vpop.f32.mrb[0].mxu0
  %v368 = vadd.f32 %v279, %v367
  %v369 = vpop.f32.mrb[0].mxu0
  %370 = vmatprep.mubr.f32.mxu0 %v35
  %371 = vmatmul.mubr.f32.gmra.mrb[0].mxu0 %v34
  %v372 = vpop.f32.mrb[0].mxu0
  %v373 = vadd.f32 %v279, %v372
  %v374 = vpop.f32.mrb[0].mxu0
  %375 = vmatprep.mubr.f32.mxu0 %v39
  %376 = vmatmul.mubr.f32.gmra.mrb[0].mxu0 %v38
  %v377 = vpop.f32.mrb[0].mxu0
  %v378 = vadd.f32 %v279, %v377
  %v379 = vpop.f32.mrb[0].mxu0
  %380 = vmatprep.mubr.f32.mxu0 %v43
  %381 = vmatmul.mubr.f32.gmra.mrb[0].mxu0 %v42
  %v382 = vpop.f32.mrb[0].mxu0
  %v383 = vadd.f32 %v279, %v382
  %v384 = vpop.f32.mrb[0].mxu0
  %385 = vmatprep.mubr.f32.mxu0 %v47
  %386 = vmatmul.mubr.f32.gmra.mrb[0].mxu0 %v46
  %v387 = vpop.f32.mrb[0].mxu0
  %v388 = vadd.f32 %v279, %v387
  %v389 = vpop.f32.mrb[0].mxu0
  %390 = vmatprep.mubr.f32.mxu0 %v51
  %391 = vmatmul.mubr.f32.gmra.mrb[0].mxu0 %v50
  %v392 = vpop.f32.mrb[0].mxu0
  %v393 = vadd.f32 %v279, %v392
  %v394 = vpop.f32.mrb[0].mxu0
  %395 = vmatprep.mubr.f32.mxu0 %v55
  %396 = vmatmul.mubr.f32.gmra.mrb[0].mxu0 %v54
  %v397 = vpop.f32.mrb[0].mxu0
  %v398 = vadd.f32 %v279, %v397
  %v399 = vpop.f32.mrb[0].mxu0
  %400 = vmatprep.mubr.f32.mxu0 %v59
  %401 = vmatmul.mubr.f32.gmra.mrb[0].mxu0 %v58
  %v402 = vpop.f32.mrb[0].mxu0
  %v403 = vadd.f32 %v279, %v402
  %v404 = vpop.f32.mrb[0].mxu0
  %405 = vmatprep.mubr.f32.mxu0 %v63
  %406 = vmatmul.mubr.f32.gmra.mrb[0].mxu0 %v62
  %v407 = vpop.f32.mrb[0].mxu0
  %v408 = vadd.f32 %v279, %v407
  %v409 = vpop.f32.mrb[0].mxu0
  %410 = vmatprep.mubr.f32.mxu0 %v67
  %411 = vmatmul.mubr.f32.gmra.mrb[0].mxu0 %v66
  %v412 = vpop.f32.mrb[0].mxu0
  %v413 = vadd.f32 %v279, %v412
  %v414 = vpop.f32.mrb[0].mxu0
  %415 = vmatprep.mubr.f32.mxu0 %v71
  %416 = vmatmul.mubr.f32.gmra.mrb[0].mxu0 %v70
  %v417 = vpop.f32.mrb[0].mxu0
  %v418 = vadd.f32 %v279, %v417
  %v419 = vpop.f32.mrb[0].mxu0
  %420 = vmatprep.mubr.f32.mxu0 %v75
  %421 = vmatmul.mubr.f32.gmra.mrb[0].mxu0 %v74
  %v422 = vpop.f32.mrb[0].mxu0
  %v423 = vadd.f32 %v279, %v422
  %v424 = vpop.f32.mrb[0].mxu0
  %425 = vmatprep.mubr.f32.mxu0 %v79
  %426 = vmatmul.mubr.f32.gmra.mrb[0].mxu0 %v78
  %v427 = vpop.f32.mrb[0].mxu0
  %v428 = vadd.f32 %v279, %v427
  %v429 = vpop.f32.mrb[0].mxu0
  %430 = vmatprep.mubr.f32.mxu0 %v83
  %431 = vmatmul.mubr.f32.gmra.mrb[0].mxu0 %v82
  %v432 = vpop.f32.mrb[0].mxu0
  %v433 = vadd.f32 %v279, %v432
  %v434 = vpop.f32.mrb[0].mxu0
  %435 = vmatprep.mubr.f32.mxu0 %v87
  %436 = vmatmul.mubr.f32.gmra.mrb[0].mxu0 %v86
  %v437 = vpop.f32.mrb[0].mxu0
  %v438 = vadd.f32 %v279, %v437
  %v439 = vpop.f32.mrb[0].mxu0
  %440 = vmatprep.mubr.f32.mxu0 %v91
  %441 = vmatmul.mubr.f32.gmra.mrb[0].mxu0 %v90
  %v442 = vpop.f32.mrb[0].mxu0
  %v443 = vadd.f32 %v279, %v442
  %v444 = vpop.f32.mrb[0].mxu0
  %445 = vmatprep.mubr.f32.mxu0 %v95
  %446 = vmatmul.mubr.f32.gmra.mrb[0].mxu0 %v94
  %v447 = vpop.f32.mrb[0].mxu0
  %v448 = vadd.f32 %v279, %v447
  %v449 = vpop.f32.mrb[0].mxu0
  %450 = vmatprep.mubr.f32.mxu0 %v99
  %451 = vmatmul.mubr.f32.gmra.mrb[0].mxu0 %v98
  %v452 = vpop.f32.mrb[0].mxu0
  %v453 = vadd.f32 %v279, %v452
  %v454 = vpop.f32.mrb[0].mxu0
  %455 = vmatprep.mubr.f32.mxu0 %v103
  %456 = vmatmul.mubr.f32.gmra.mrb[0].mxu0 %v102
  %v457 = vpop.f32.mrb[0].mxu0
  %v458 = vadd.f32 %v279, %v457
  %v459 = vpop.f32.mrb[0].mxu0
  %460 = vmatprep.mubr.f32.mxu0 %v107
  %461 = vmatmul.mubr.f32.gmra.mrb[0].mxu0 %v106
  %v462 = vpop.f32.mrb[0].mxu0
  %v463 = vadd.f32 %v279, %v462
  %v464 = vpop.f32.mrb[0].mxu0
  %465 = vmatprep.mubr.f32.mxu0 %v111
  %466 = vmatmul.mubr.f32.gmra.mrb[0].mxu0 %v110
  %v467 = vpop.f32.mrb[0].mxu0
  %v468 = vadd.f32 %v279, %v467
  %v469 = vpop.f32.mrb[0].mxu0
  %470 = vmatprep.mubr.f32.mxu0 %v115
  %471 = vmatmul.mubr.f32.gmra.mrb[0].mxu0 %v114
  %v472 = vpop.f32.mrb[0].mxu0
  %v473 = vadd.f32 %v279, %v472
  %v474 = vpop.f32.mrb[0].mxu0
  %475 = vmatprep.mubr.f32.mxu0 %v119
  %476 = vmatmul.mubr.f32.gmra.mrb[0].mxu0 %v118
  %v477 = vpop.f32.mrb[0].mxu0
  %v478 = vadd.f32 %v279, %v477
  %v479 = vpop.f32.mrb[0].mxu0
  %480 = vmatprep.mubr.f32.mxu0 %v123
  %481 = vmatmul.mubr.f32.gmra.mrb[0].mxu0 %v122
  %v482 = vpop.f32.mrb[0].mxu0
  %v483 = vadd.f32 %v279, %v482
  %v484 = vpop.f32.mrb[0].mxu0
  %485 = vmatprep.mubr.f32.mxu0 %v127
  %486 = vmatmul.mubr.f32.gmra.mrb[0].mxu0 %v126
  %v487 = vpop.f32.mrb[0].mxu0
  %v488 = vadd.f32 %v279, %v487
  %v489 = vpop.f32.mrb[0].mxu0
  %490 = vmatprep.mubr.f32.mxu0 %v131
  %491 = vmatmul.mubr.f32.gmra.mrb[0].mxu0 %v130
  %v492 = vpop.f32.mrb[0].mxu0
  %v493 = vadd.f32 %v279, %v492
  %v494 = vpop.f32.mrb[0].mxu0
  %495 = vmatprep.mubr.f32.mxu0 %v135
  %496 = vmatmul.mubr.f32.gmra.mrb[0].mxu0 %v134
  %v497 = vpop.f32.mrb[0].mxu0
  %v498 = vadd.f32 %v279, %v497
  %v499 = vpop.f32.mrb[0].mxu0
  %500 = vmatprep.mubr.f32.mxu0 %v139
  %501 = vmatmul.mubr.f32.gmra.mrb[0].mxu0 %v138
  %v502 = vpop.f32.mrb[0].mxu0
  %v503 = vadd.f32 %v279, %v502
  %v504 = vpop.f32.mrb[0].mxu0
  %505 = vmatprep.mubr.f32.mxu0 %v143
  %506 = vmatmul.mubr.f32.gmra.mrb[0].mxu0 %v142
  %v507 = vpop.f32.mrb[0].mxu0
  %v508 = vadd.f32 %v279, %v507
  %v509 = vpop.f32.mrb[0].mxu0
  %510 = vmatprep.mubr.f32.mxu0 %v147
  %511 = vmatmul.mubr.f32.gmra.mrb[0].mxu0 %v146
  %v512 = vpop.f32.mrb[0].mxu0
  %v513 = vadd.f32 %v279, %v512
  %v514 = vpop.f32.mrb[0].mxu0
  %515 = vmatprep.mubr.f32.mxu0 %v151
  %516 = vmatmul.mubr.f32.gmra.mrb[0].mxu0 %v150
  %v517 = vpop.f32.mrb[0].mxu0
  %v518 = vadd.f32 %v279, %v517
  %v519 = vpop.f32.mrb[0].mxu0
  %520 = vmatprep.mubr.f32.mxu0 %v155
  %521 = vmatmul.mubr.f32.gmra.mrb[0].mxu0 %v154
  %v522 = vpop.f32.mrb[0].mxu0
  %v523 = vadd.f32 %v279, %v522
  %v524 = vpop.f32.mrb[0].mxu0
  %525 = vmatprep.mubr.f32.mxu0 %v159
  %526 = vmatmul.mubr.f32.gmra.mrb[0].mxu0 %v158
  %v527 = vpop.f32.mrb[0].mxu0
  %v528 = vadd.f32 %v279, %v527
  %v529 = vpop.f32.mrb[0].mxu0
  %530 = vmatprep.mubr.f32.mxu0 %v163
  %531 = vmatmul.mubr.f32.gmra.mrb[0].mxu0 %v162
  %v532 = vpop.f32.mrb[0].mxu0
  %v533 = vadd.f32 %v279, %v532
  %v534 = vpop.f32.mrb[0].mxu0
  %535 = vmatprep.mubr.f32.mxu0 %v167
  %536 = vmatmul.mubr.f32.gmra.mrb[0].mxu0 %v166
  %v537 = vpop.f32.mrb[0].mxu0
  %v538 = vadd.f32 %v279, %v537
  %v539 = vpop.f32.mrb[0].mxu0
  %540 = vmatprep.mubr.f32.mxu0 %v171
  %541 = vmatmul.mubr.f32.gmra.mrb[0].mxu0 %v170
  %v542 = vpop.f32.mrb[0].mxu0
  %v543 = vadd.f32 %v279, %v542
  %v544 = vpop.f32.mrb[0].mxu0
  %545 = vmatprep.mubr.f32.mxu0 %v175
  %546 = vmatmul.mubr.f32.gmra.mrb[0].mxu0 %v174
  %v547 = vpop.f32.mrb[0].mxu0
  %v548 = vadd.f32 %v279, %v547
  %v549 = vpop.f32.mrb[0].mxu0
  %550 = vmatprep.mubr.f32.mxu0 %v179
  %551 = vmatmul.mubr.f32.gmra.mrb[0].mxu0 %v178
  %v552 = vpop.f32.mrb[0].mxu0
  %v553 = vadd.f32 %v279, %v552
  %v554 = vpop.f32.mrb[0].mxu0
  %555 = vmatprep.mubr.f32.mxu0 %v183
  %556 = vmatmul.mubr.f32.gmra.mrb[0].mxu0 %v182
  %v557 = vpop.f32.mrb[0].mxu0
  %v558 = vadd.f32 %v279, %v557
  %v559 = vpop.f32.mrb[0].mxu0
  %560 = vmatprep.mubr.f32.mxu0 %v187
  %561 = vmatmul.mubr.f32.gmra.mrb[0].mxu0 %v186
  %v562 = vpop.f32.mrb[0].mxu0
  %v563 = vadd.f32 %v279, %v562
  %v564 = vpop.f32.mrb[0].mxu0
  %565 = vmatprep.mubr.f32.mxu0 %v191
  %566 = vmatmul.mubr.f32.gmra.mrb[0].mxu0 %v190
  %v567 = vpop.f32.mrb[0].mxu0
  %v568 = vadd.f32 %v279, %v567
  %v569 = vpop.f32.mrb[0].mxu0
  %570 = vmatprep.mubr.f32.mxu0 %v195
  %571 = vmatmul.mubr.f32.gmra.mrb[0].mxu0 %v194
  %v572 = vpop.f32.mrb[0].mxu0
  %v573 = vadd.f32 %v279, %v572
  %v574 = vpop.f32.mrb[0].mxu0
  %575 = vmatprep.mubr.f32.mxu0 %v199
  %576 = vmatmul.mubr.f32.gmra.mrb[0].mxu0 %v198
  %v577 = vpop.f32.mrb[0].mxu0
  %v578 = vadd.f32 %v279, %v577
  %v579 = vpop.f32.mrb[0].mxu0
  %580 = vmatprep.mubr.f32.mxu0 %v203
  %581 = vmatmul.mubr.f32.gmra.mrb[0].mxu0 %v202
  %v582 = vpop.f32.mrb[0].mxu0
  %v583 = vadd.f32 %v279, %v582
  %v584 = vpop.f32.mrb[0].mxu0
  %585 = vmatprep.mubr.f32.mxu0 %v207
  %586 = vmatmul.mubr.f32.gmra.mrb[0].mxu0 %v206
  %v587 = vpop.f32.mrb[0].mxu0
  %v588 = vadd.f32 %v279, %v587
  %v589 = vpop.f32.mrb[0].mxu0
  %590 = vdwg.mxu0
  %591 = vmatprep.subr.mxu0 0.0
  %592 = vmatpush1.msra.mxu0 %v242
  %593 = vmatprep.subr.mxu0 0.0
  %594 = vmatpush1.msra.mxu0 %v243
  %595 = vmatprep.subr.mxu0 0.0
  %596 = vmatpush1.msra.mxu0 %v244
  %597 = vmatprep.subr.mxu0 0.0
  %598 = vmatpush1.msra.mxu0 %v245
  %599 = vmatprep.subr.mxu0 0.0
  %600 = vmatpush1.msra.mxu0 %v246
  %601 = vmatprep.subr.mxu0 0.0
  %602 = vmatpush1.msra.mxu0 %v247
  %603 = vmatprep.subr.mxu0 0.0
  %604 = vmatpush1.msra.mxu0 %v248
  %605 = vmatprep.subr.mxu0 0.0
  %606 = vmatpush1.msra.mxu0 %v249
  %607 = vmatprep.subr.mxu0 0.0
  %608 = vmatpush1.msra.mxu0 %v250
  %609 = vmatprep.subr.mxu0 0.0
  %610 = vmatpush1.msra.mxu0 %v251
  %611 = vmatprep.subr.mxu0 0.0
  %612 = vmatpush1.msra.mxu0 %v252
  %613 = vmatprep.subr.mxu0 0.0
  %614 = vmatpush1.msra.mxu0 %v253
  %615 = vmatprep.subr.mxu0 0.0
  %616 = vmatpush1.msra.mxu0 %v254
  %617 = vmatprep.subr.mxu0 0.0
  %618 = vmatpush1.msra.mxu0 %v255
  %619 = vmatprep.subr.mxu0 0.0
  %620 = vmatpush1.msra.mxu0 %v256
  %621 = vmatprep.subr.mxu0 0.0
  %622 = vmatpush1.msra.mxu0 %v257
  %623 = vmatprep.subr.mxu0 0.0
  %624 = vmatpush1.msra.mxu0 %v258
  %625 = vmatprep.subr.mxu0 0.0
  %626 = vmatpush1.msra.mxu0 %v259
  %627 = vmatprep.subr.mxu0 0.0
  %628 = vmatpush1.msra.mxu0 %v260
  %629 = vmatprep.subr.mxu0 0.0
  %630 = vmatpush1.msra.mxu0 %v261
  %631 = vmatprep.subr.mxu0 0.0
  %632 = vmatpush1.msra.mxu0 %v262
  %633 = vmatprep.subr.mxu0 0.0
  %634 = vmatpush1.msra.mxu0 %v263
  %635 = vmatprep.subr.mxu0 0.0
  %636 = vmatpush1.msra.mxu0 %v264
  %637 = vmatprep.subr.mxu0 0.0
  %638 = vmatpush1.msra.mxu0 %v265
  %639 = vmatprep.subr.mxu0 0.0
  %640 = vmatpush1.msra.mxu0 %v266
  %641 = vmatprep.subr.mxu0 0.0
  %642 = vmatpush1.msra.mxu0 %v267
  %643 = vmatprep.subr.mxu0 0.0
  %644 = vmatpush1.msra.mxu0 %v268
  %645 = vmatprep.subr.mxu0 0.0
  %646 = vmatpush1.msra.mxu0 %v269
  %647 = vmatprep.subr.mxu0 0.0
  %648 = vmatpush1.msra.mxu0 %v270
  %649 = vmatprep.subr.mxu0 0.0
  %650 = vmatpush1.msra.mxu0 %v271
  %651 = vmatprep.subr.mxu0 0.0
  %652 = vmatpush1.msra.mxu0 %v272
  %653 = vmatprep.subr.mxu0 0.0
  %654 = vmatpush1.msra.mxu0 %v273
  %655 = vmatprep.mubr.f32.mxu0 %v17
  %656 = vmatmul.mubr.f32.gmra.mrb[0].mxu0 %v16
  %v657 = vpop.f32.mrb[0].mxu0
  %v658 = vadd.f32 %v348, %v657
  %v659 = vpop.f32.mrb[0].mxu0
  %660 = vmatprep.mubr.f32.mxu0 %v21
  %661 = vmatmul.mubr.f32.gmra.mrb[0].mxu0 %v20
  %v662 = vpop.f32.mrb[0].mxu0
  %v663 = vadd.f32 %v353, %v662
  %v664 = vpop.f32.mrb[0].mxu0
  %665 = vmatprep.mubr.f32.mxu0 %v25
  %666 = vmatmul.mubr.f32.gmra.mrb[0].mxu0 %v24
  %v667 = vpop.f32.mrb[0].mxu0
  %v668 = vadd.f32 %v358, %v667
  %v669 = vpop.f32.mrb[0].mxu0
  %670 = vmatprep.mubr.f32.mxu0 %v29
  %671 = vmatmul.mubr.f32.gmra.mrb[0].mxu0 %v28
  %v672 = vpop.f32.mrb[0].mxu0
  %v673 = vadd.f32 %v363, %v672
  %v674 = vpop.f32.mrb[0].mxu0
  %675 = vmatprep.mubr.f32.mxu0 %v33
  %676 = vmatmul.mubr.f32.gmra.mrb[0].mxu0 %v32
  %v677 = vpop.f32.mrb[0].mxu0
  %v678 = vadd.f32 %v368, %v677
  %v679 = vpop.f32.mrb[0].mxu0
  %680 = vmatprep.mubr.f32.mxu0 %v37
  %681 = vmatmul.mubr.f32.gmra.mrb[0].mxu0 %v36
  %v682 = vpop.f32.mrb[0].mxu0
  %v683 = vadd.f32 %v373, %v682
  %v684 = vpop.f32.mrb[0].mxu0
  %685 = vmatprep.mubr.f32.mxu0 %v41
  %686 = vmatmul.mubr.f32.gmra.mrb[0].mxu0 %v40
  %v687 = vpop.f32.mrb[0].mxu0
  %v688 = vadd.f32 %v378, %v687
  %v689 = vpop.f32.mrb[0].mxu0
  %690 = vmatprep.mubr.f32.mxu0 %v45
  %691 = vmatmul.mubr.f32.gmra.mrb[0].mxu0 %v44
  %v692 = vpop.f32.mrb[0].mxu0
  %v693 = vadd.f32 %v383, %v692
  %v694 = vpop.f32.mrb[0].mxu0
  %695 = vmatprep.mubr.f32.mxu0 %v49
  %696 = vmatmul.mubr.f32.gmra.mrb[0].mxu0 %v48
  %v697 = vpop.f32.mrb[0].mxu0
  %v698 = vadd.f32 %v388, %v697
  %v699 = vpop.f32.mrb[0].mxu0
  %700 = vmatprep.mubr.f32.mxu0 %v53
  %701 = vmatmul.mubr.f32.gmra.mrb[0].mxu0 %v52
  %v702 = vpop.f32.mrb[0].mxu0
  %v703 = vadd.f32 %v393, %v702
  %v704 = vpop.f32.mrb[0].mxu0
  %705 = vmatprep.mubr.f32.mxu0 %v57
  %706 = vmatmul.mubr.f32.gmra.mrb[0].mxu0 %v56
  %v707 = vpop.f32.mrb[0].mxu0
  %v708 = vadd.f32 %v398, %v707
  %v709 = vpop.f32.mrb[0].mxu0
  %710 = vmatprep.mubr.f32.mxu0 %v61
  %711 = vmatmul.mubr.f32.gmra.mrb[0].mxu0 %v60
  %v712 = vpop.f32.mrb[0].mxu0
  %v713 = vadd.f32 %v403, %v712
  %v714 = vpop.f32.mrb[0].mxu0
  %715 = vmatprep.mubr.f32.mxu0 %v65
  %716 = vmatmul.mubr.f32.gmra.mrb[0].mxu0 %v64
  %v717 = vpop.f32.mrb[0].mxu0
  %v718 = vadd.f32 %v408, %v717
  %v719 = vpop.f32.mrb[0].mxu0
  %720 = vmatprep.mubr.f32.mxu0 %v69
  %721 = vmatmul.mubr.f32.gmra.mrb[0].mxu0 %v68
  %v722 = vpop.f32.mrb[0].mxu0
  %v723 = vadd.f32 %v413, %v722
  %v724 = vpop.f32.mrb[0].mxu0
  %725 = vmatprep.mubr.f32.mxu0 %v73
  %726 = vmatmul.mubr.f32.gmra.mrb[0].mxu0 %v72
  %v727 = vpop.f32.mrb[0].mxu0
  %v728 = vadd.f32 %v418, %v727
  %v729 = vpop.f32.mrb[0].mxu0
  %730 = vmatprep.mubr.f32.mxu0 %v77
  %731 = vmatmul.mubr.f32.gmra.mrb[0].mxu0 %v76
  %v732 = vpop.f32.mrb[0].mxu0
  %v733 = vadd.f32 %v423, %v732
  %v734 = vpop.f32.mrb[0].mxu0
  %735 = vmatprep.mubr.f32.mxu0 %v81
  %736 = vmatmul.mubr.f32.gmra.mrb[0].mxu0 %v80
  %v737 = vpop.f32.mrb[0].mxu0
  %v738 = vadd.f32 %v428, %v737
  %v739 = vpop.f32.mrb[0].mxu0
  %740 = vmatprep.mubr.f32.mxu0 %v85
  %741 = vmatmul.mubr.f32.gmra.mrb[0].mxu0 %v84
  %v742 = vpop.f32.mrb[0].mxu0
  %v743 = vadd.f32 %v433, %v742
  %v744 = vpop.f32.mrb[0].mxu0
  %745 = vmatprep.mubr.f32.mxu0 %v89
  %746 = vmatmul.mubr.f32.gmra.mrb[0].mxu0 %v88
  %v747 = vpop.f32.mrb[0].mxu0
  %v748 = vadd.f32 %v438, %v747
  %v749 = vpop.f32.mrb[0].mxu0
  %750 = vmatprep.mubr.f32.mxu0 %v93
  %751 = vmatmul.mubr.f32.gmra.mrb[0].mxu0 %v92
  %v752 = vpop.f32.mrb[0].mxu0
  %v753 = vadd.f32 %v443, %v752
  %v754 = vpop.f32.mrb[0].mxu0
  %755 = vmatprep.mubr.f32.mxu0 %v97
  %756 = vmatmul.mubr.f32.gmra.mrb[0].mxu0 %v96
  %v757 = vpop.f32.mrb[0].mxu0
  %v758 = vadd.f32 %v448, %v757
  %v759 = vpop.f32.mrb[0].mxu0
  %760 = vmatprep.mubr.f32.mxu0 %v101
  %761 = vmatmul.mubr.f32.gmra.mrb[0].mxu0 %v100
  %v762 = vpop.f32.mrb[0].mxu0
  %v763 = vadd.f32 %v453, %v762
  %v764 = vpop.f32.mrb[0].mxu0
  %765 = vmatprep.mubr.f32.mxu0 %v105
  %766 = vmatmul.mubr.f32.gmra.mrb[0].mxu0 %v104
  %v767 = vpop.f32.mrb[0].mxu0
  %v768 = vadd.f32 %v458, %v767
  %v769 = vpop.f32.mrb[0].mxu0
  %770 = vmatprep.mubr.f32.mxu0 %v109
  %771 = vmatmul.mubr.f32.gmra.mrb[0].mxu0 %v108
  %v772 = vpop.f32.mrb[0].mxu0
  %v773 = vadd.f32 %v463, %v772
  %v774 = vpop.f32.mrb[0].mxu0
  %775 = vmatprep.mubr.f32.mxu0 %v113
  %776 = vmatmul.mubr.f32.gmra.mrb[0].mxu0 %v112
  %v777 = vpop.f32.mrb[0].mxu0
  %v778 = vadd.f32 %v468, %v777
  %v779 = vpop.f32.mrb[0].mxu0
  %780 = vmatprep.mubr.f32.mxu0 %v117
  %781 = vmatmul.mubr.f32.gmra.mrb[0].mxu0 %v116
  %v782 = vpop.f32.mrb[0].mxu0
  %v783 = vadd.f32 %v473, %v782
  %v784 = vpop.f32.mrb[0].mxu0
  %785 = vmatprep.mubr.f32.mxu0 %v121
  %786 = vmatmul.mubr.f32.gmra.mrb[0].mxu0 %v120
  %v787 = vpop.f32.mrb[0].mxu0
  %v788 = vadd.f32 %v478, %v787
  %v789 = vpop.f32.mrb[0].mxu0
  %790 = vmatprep.mubr.f32.mxu0 %v125
  %791 = vmatmul.mubr.f32.gmra.mrb[0].mxu0 %v124
  %v792 = vpop.f32.mrb[0].mxu0
  %v793 = vadd.f32 %v483, %v792
  %v794 = vpop.f32.mrb[0].mxu0
  %795 = vmatprep.mubr.f32.mxu0 %v129
  %796 = vmatmul.mubr.f32.gmra.mrb[0].mxu0 %v128
  %v797 = vpop.f32.mrb[0].mxu0
  %v798 = vadd.f32 %v488, %v797
  %v799 = vpop.f32.mrb[0].mxu0
  %800 = vmatprep.mubr.f32.mxu0 %v133
  %801 = vmatmul.mubr.f32.gmra.mrb[0].mxu0 %v132
  %v802 = vpop.f32.mrb[0].mxu0
  %v803 = vadd.f32 %v493, %v802
  %v804 = vpop.f32.mrb[0].mxu0
  %805 = vmatprep.mubr.f32.mxu0 %v137
  %806 = vmatmul.mubr.f32.gmra.mrb[0].mxu0 %v136
  %v807 = vpop.f32.mrb[0].mxu0
  %v808 = vadd.f32 %v498, %v807
  %v809 = vpop.f32.mrb[0].mxu0
  %810 = vmatprep.mubr.f32.mxu0 %v141
  %811 = vmatmul.mubr.f32.gmra.mrb[0].mxu0 %v140
  %v812 = vpop.f32.mrb[0].mxu0
  %v813 = vadd.f32 %v503, %v812
  %v814 = vpop.f32.mrb[0].mxu0
  %815 = vmatprep.mubr.f32.mxu0 %v145
  %816 = vmatmul.mubr.f32.gmra.mrb[0].mxu0 %v144
  %v817 = vpop.f32.mrb[0].mxu0
  %v818 = vadd.f32 %v508, %v817
  %v819 = vpop.f32.mrb[0].mxu0
  %820 = vmatprep.mubr.f32.mxu0 %v149
  %821 = vmatmul.mubr.f32.gmra.mrb[0].mxu0 %v148
  %v822 = vpop.f32.mrb[0].mxu0
  %v823 = vadd.f32 %v513, %v822
  %v824 = vpop.f32.mrb[0].mxu0
  %825 = vmatprep.mubr.f32.mxu0 %v153
  %826 = vmatmul.mubr.f32.gmra.mrb[0].mxu0 %v152
  %v827 = vpop.f32.mrb[0].mxu0
  %v828 = vadd.f32 %v518, %v827
  %v829 = vpop.f32.mrb[0].mxu0
  %830 = vmatprep.mubr.f32.mxu0 %v157
  %831 = vmatmul.mubr.f32.gmra.mrb[0].mxu0 %v156
  %v832 = vpop.f32.mrb[0].mxu0
  %v833 = vadd.f32 %v523, %v832
  %v834 = vpop.f32.mrb[0].mxu0
  %835 = vmatprep.mubr.f32.mxu0 %v161
  %836 = vmatmul.mubr.f32.gmra.mrb[0].mxu0 %v160
  %v837 = vpop.f32.mrb[0].mxu0
  %v838 = vadd.f32 %v528, %v837
  %v839 = vpop.f32.mrb[0].mxu0
  %840 = vmatprep.mubr.f32.mxu0 %v165
  %841 = vmatmul.mubr.f32.gmra.mrb[0].mxu0 %v164
  %v842 = vpop.f32.mrb[0].mxu0
  %v843 = vadd.f32 %v533, %v842
  %v844 = vpop.f32.mrb[0].mxu0
  %845 = vmatprep.mubr.f32.mxu0 %v169
  %846 = vmatmul.mubr.f32.gmra.mrb[0].mxu0 %v168
  %v847 = vpop.f32.mrb[0].mxu0
  %v848 = vadd.f32 %v538, %v847
  %v849 = vpop.f32.mrb[0].mxu0
  %850 = vmatprep.mubr.f32.mxu0 %v173
  %851 = vmatmul.mubr.f32.gmra.mrb[0].mxu0 %v172
  %v852 = vpop.f32.mrb[0].mxu0
  %v853 = vadd.f32 %v543, %v852
  %v854 = vpop.f32.mrb[0].mxu0
  %855 = vmatprep.mubr.f32.mxu0 %v177
  %856 = vmatmul.mubr.f32.gmra.mrb[0].mxu0 %v176
  %v857 = vpop.f32.mrb[0].mxu0
  %v858 = vadd.f32 %v548, %v857
  %v859 = vpop.f32.mrb[0].mxu0
  %860 = vmatprep.mubr.f32.mxu0 %v181
  %861 = vmatmul.mubr.f32.gmra.mrb[0].mxu0 %v180
  %v862 = vpop.f32.mrb[0].mxu0
  %v863 = vadd.f32 %v553, %v862
  %v864 = vpop.f32.mrb[0].mxu0
  %865 = vmatprep.mubr.f32.mxu0 %v185
  %866 = vmatmul.mubr.f32.gmra.mrb[0].mxu0 %v184
  %v867 = vpop.f32.mrb[0].mxu0
  %v868 = vadd.f32 %v558, %v867
  %v869 = vpop.f32.mrb[0].mxu0
  %870 = vmatprep.mubr.f32.mxu0 %v189
  %871 = vmatmul.mubr.f32.gmra.mrb[0].mxu0 %v188
  %v872 = vpop.f32.mrb[0].mxu0
  %v873 = vadd.f32 %v563, %v872
  %v874 = vpop.f32.mrb[0].mxu0
  %875 = vmatprep.mubr.f32.mxu0 %v193
  %876 = vmatmul.mubr.f32.gmra.mrb[0].mxu0 %v192
  %v877 = vpop.f32.mrb[0].mxu0
  %v878 = vadd.f32 %v568, %v877
  %v879 = vpop.f32.mrb[0].mxu0
  %880 = vmatprep.mubr.f32.mxu0 %v197
  %881 = vmatmul.mubr.f32.gmra.mrb[0].mxu0 %v196
  %v882 = vpop.f32.mrb[0].mxu0
  %v883 = vadd.f32 %v573, %v882
  %v884 = vpop.f32.mrb[0].mxu0
  %885 = vmatprep.mubr.f32.mxu0 %v201
  %886 = vmatmul.mubr.f32.gmra.mrb[0].mxu0 %v200
  %v887 = vpop.f32.mrb[0].mxu0
  %v888 = vadd.f32 %v578, %v887
  %v889 = vpop.f32.mrb[0].mxu0
  %890 = vmatprep.mubr.f32.mxu0 %v205
  %891 = vmatmul.mubr.f32.gmra.mrb[0].mxu0 %v204
  %v892 = vpop.f32.mrb[0].mxu0
  %v893 = vadd.f32 %v583, %v892
  %v894 = vpop.f32.mrb[0].mxu0
  %895 = vmatprep.mubr.f32.mxu0 %v209
  %896 = vmatmul.mubr.f32.gmra.mrb[0].mxu0 %v208
  %v897 = vpop.f32.mrb[0].mxu0
  %v898 = vadd.f32 %v588, %v897
  %v899 = vpop.f32.mrb[0].mxu0
  %900 = vdwg.mxu0
  %v901 = vmax.f32 %v658, 0.0
  %v902 = vmax.f32 %v663, 0.0
  %v903 = vmax.f32 %v668, 0.0
  %v904 = vmax.f32 %v673, 0.0
  %v905 = vmax.f32 %v678, 0.0
  %v906 = vmax.f32 %v683, 0.0
  %v907 = vmax.f32 %v688, 0.0
  %v908 = vmax.f32 %v693, 0.0
  %v909 = vmax.f32 %v698, 0.0
  %v910 = vmax.f32 %v703, 0.0
  %v911 = vmax.f32 %v708, 0.0
  %v912 = vmax.f32 %v713, 0.0
  %v913 = vmax.f32 %v718, 0.0
  %v914 = vmax.f32 %v723, 0.0
  %v915 = vmax.f32 %v728, 0.0
  %v916 = vmax.f32 %v733, 0.0
  %v917 = vmax.f32 %v738, 0.0
  %v918 = vmax.f32 %v743, 0.0
  %v919 = vmax.f32 %v748, 0.0
  %v920 = vmax.f32 %v753, 0.0
  %v921 = vmax.f32 %v758, 0.0
  %v922 = vmax.f32 %v763, 0.0
  %v923 = vmax.f32 %v768, 0.0
  %v924 = vmax.f32 %v773, 0.0
  %v925 = vmax.f32 %v778, 0.0
  %v926 = vmax.f32 %v783, 0.0
  %v927 = vmax.f32 %v788, 0.0
  %v928 = vmax.f32 %v793, 0.0
  %v929 = vmax.f32 %v798, 0.0
  %v930 = vmax.f32 %v803, 0.0
  %v931 = vmax.f32 %v808, 0.0
  %v932 = vmax.f32 %v813, 0.0
  %v933 = vmax.f32 %v818, 0.0
  %v934 = vmax.f32 %v823, 0.0
  %v935 = vmax.f32 %v828, 0.0
  %v936 = vmax.f32 %v833, 0.0
  %v937 = vmax.f32 %v838, 0.0
  %v938 = vmax.f32 %v843, 0.0
  %v939 = vmax.f32 %v848, 0.0
  %v940 = vmax.f32 %v853, 0.0
  %v941 = vmax.f32 %v858, 0.0
  %v942 = vmax.f32 %v863, 0.0
  %v943 = vmax.f32 %v868, 0.0
  %v944 = vmax.f32 %v873, 0.0
  %v945 = vmax.f32 %v878, 0.0
  %v946 = vmax.f32 %v883, 0.0
  %v947 = vmax.f32 %v888, 0.0
  %v948 = vmax.f32 %v893, 0.0
  %v949 = vmax.f32 %v898, 0.0
  %950 = vst [vmem:[%s3] sm:$0xff] %v901
  %951 = vst [vmem:[%s3 + $0x8] sm:$0xff] %v902
  %952 = vst [vmem:[%s3 + $0x10] sm:$0xff] %v903
  %953 = vst [vmem:[%s3 + $0x18] sm:$0xff] %v904
  %954 = vst [vmem:[%s3 + $0x20] sm:$0xff] %v905
  %955 = vst [vmem:[%s3 + $0x28] sm:$0xff] %v906
  %956 = vst [vmem:[%s3 + $0x30] sm:$0xff] %v907
  %957 = vst [vmem:[%s3 + $0x38] sm:$0xff] %v908
  %958 = vst [vmem:[%s3 + $0x40] sm:$0xff] %v909
  %959 = vst [vmem:[%s3 + $0x48] sm:$0xff] %v910
  %960 = vst [vmem:[%s3 + $0x50] sm:$0xff] %v911
  %961 = vst [vmem:[%s3 + $0x58] sm:$0xff] %v912
  %962 = vst [vmem:[%s3 + $0x60] sm:$0xff] %v913
  %963 = vst [vmem:[%s3 + $0x68] sm:$0xff] %v914
  %964 = vst [vmem:[%s3 + $0x70] sm:$0xff] %v915
  %965 = vst [vmem:[%s3 + $0x78] sm:$0xff] %v916
  %966 = vst [vmem:[%s3 + $0x80] sm:$0xff] %v917
  %967 = vst [vmem:[%s3 + $0x88] sm:$0xff] %v918
  %968 = vst [vmem:[%s3 + $0x90] sm:$0xff] %v919
  %969 = vst [vmem:[%s3 + $0x98] sm:$0xff] %v920
  %970 = vst [vmem:[%s3 + $0xa0] sm:$0xff] %v921
  %971 = vst [vmem:[%s3 + $0xa8] sm:$0xff] %v922
  %972 = vst [vmem:[%s3 + $0xb0] sm:$0xff] %v923
  %973 = vst [vmem:[%s3 + $0xb8] sm:$0xff] %v924
  %974 = vst [vmem:[%s3 + $0xc0] sm:$0xff] %v925
  %975 = vst [vmem:[%s3 + $0xc8] sm:$0xff] %v926
  %976 = vst [vmem:[%s3 + $0xd0] sm:$0xff] %v927
  %977 = vst [vmem:[%s3 + $0xd8] sm:$0xff] %v928
  %978 = vst [vmem:[%s3 + $0xe0] sm:$0xff] %v929
  %979 = vst [vmem:[%s3 + $0xe8] sm:$0xff] %v930
  %980 = vst [vmem:[%s3 + $0xf0] sm:$0xff] %v931
  %981 = vst [vmem:[%s3 + $0xf8] sm:$0xff] %v932
  %982 = vst [vmem:[%s3 + $0x100] sm:$0xff] %v933
  %983 = vst [vmem:[%s3 + $0x108] sm:$0xff] %v934
  %984 = vst [vmem:[%s3 + $0x110] sm:$0xff] %v935
  %985 = vst [vmem:[%s3 + $0x118] sm:$0xff] %v936
  %986 = vst [vmem:[%s3 + $0x120] sm:$0xff] %v937
  %987 = vst [vmem:[%s3 + $0x128] sm:$0xff] %v938
  %988 = vst [vmem:[%s3 + $0x130] sm:$0xff] %v939
  %989 = vst [vmem:[%s3 + $0x138] sm:$0xff] %v940
  %990 = vst [vmem:[%s3 + $0x140] sm:$0xff] %v941
  %991 = vst [vmem:[%s3 + $0x148] sm:$0xff] %v942
  %992 = vst [vmem:[%s3 + $0x150] sm:$0xff] %v943
  %993 = vst [vmem:[%s3 + $0x158] sm:$0xff] %v944
  %994 = vst [vmem:[%s3 + $0x160] sm:$0xff] %v945
  %995 = vst [vmem:[%s3 + $0x168] sm:$0xff] %v946
  %996 = vst [vmem:[%s3 + $0x170] sm:$0xff] %v947
  %997 = vst [vmem:[%s3 + $0x178] sm:$0xff] %v948
  %998 = vst [vmem:[%s3 + $0x180] sm:$0xff] %v949
  // Predicated region
  $region14: #{_encoder_forward.6} parent=0 // pred_check
    _
  $region15: #{_encoder_forward.6} parent=0 // pred_check_branch
    %1000 = sbr.rel (0) target = $region17
  $region16: #{_encoder_forward.6} parent=0 // pred_region
    _
  $region17: #{_encoder_forward.6} parent=0 // pred_fallthru
    _
  // Predicated region
  $region18: #{_encoder_forward.6} parent=0 // pred_check
    _
  $region19: #{_encoder_forward.6} parent=0 // pred_check_branch
    %1002 = sbr.rel (0) target = $region21
  $region20: #{_encoder_forward.6} parent=0 // pred_region
    _
  $region21: #{_encoder_forward.6} parent=0 // pred_fallthru
    _

// kernel: _encoder_forward.7
$region0: #{_encoder_forward.7}
  #allocation0 [shape = 'u32[]', space=smem, size = 0x4, offset = 0x4, fixed_abs, tag = 'smem constant byte address 0x4 - core index']
  #allocation1 [shape = 'u32[144,128]{1,0:T(1,128)}', space=vmem, size = 0x12000, scoped, tag = 'internal scratch']
  %s0 = inlined_call_operand.vmem [shape: f32[72,1024], index: 0, kind: input, shape index: {}]
  %s1 = inlined_call_operand.vmem [shape: f32[1024,128], index: 1, kind: input, shape index: {}]
  %s2 = inlined_call_operand.vmem [shape: f32[1,128], index: 2, kind: input, shape index: {}]
  %s3 = inlined_call_operand.vmem [shape: f32[72,128], index: 3, kind: output, shape index: {}]
  %s4 = sld [smem:[#allocation0]]
  $region22: #{_encoder_forward.7} parent=0
    _
  %s6 = ssub.s32 1, %s4
  %s7 = scalar_select 0, %s6, %s4
  // Predicated region
  $region2: #{_encoder_forward.7} parent=0 // pred_check
    _
  $region3: #{_encoder_forward.7} parent=0 // pred_check_branch
    %9 = sbr.rel (0) target = $region5
  $region4: #{_encoder_forward.7} parent=0 // pred_region
    _
  $region5: #{_encoder_forward.7} parent=0 // pred_fallthru
    _
  // Predicated region
  $region6: #{_encoder_forward.7} parent=0 // pred_check
    _
  $region7: #{_encoder_forward.7} parent=0 // pred_check_branch
    %11 = sbr.rel (0) target = $region9
  $region8: #{_encoder_forward.7} parent=0 // pred_region
    _
  $region9: #{_encoder_forward.7} parent=0 // pred_fallthru
    _
  // Predicated region
  $region10: #{_encoder_forward.7} parent=0 // pred_check
    _
  $region11: #{_encoder_forward.7} parent=0 // pred_check_branch
    %13 = sbr.rel (0) target = $region13
  $region12: #{_encoder_forward.7} parent=0 // pred_region
    _
  $region13: #{_encoder_forward.7} parent=0 // pred_fallthru
    _
  %v14 = vld [vmem:[%s0] sm:$0xff]
  %v15 = vld [vmem:[%s0 + $0x8] sm:$0xff]
  %v16 = vld [vmem:[%s0 + $0x10] sm:$0xff]
  %v17 = vld [vmem:[%s0 + $0x18] sm:$0xff]
  %v18 = vld [vmem:[%s0 + $0x20] sm:$0xff]
  %v19 = vld [vmem:[%s0 + $0x28] sm:$0xff]
  %v20 = vld [vmem:[%s0 + $0x30] sm:$0xff]
  %v21 = vld [vmem:[%s0 + $0x38] sm:$0xff]
  %v22 = vld [vmem:[%s0 + $0x40] sm:$0xff]
  %v23 = vld [vmem:[%s0 + $0x48] sm:$0xff]
  %v24 = vld [vmem:[%s0 + $0x50] sm:$0xff]
  %v25 = vld [vmem:[%s0 + $0x58] sm:$0xff]
  %v26 = vld [vmem:[%s0 + $0x60] sm:$0xff]
  %v27 = vld [vmem:[%s0 + $0x68] sm:$0xff]
  %v28 = vld [vmem:[%s0 + $0x70] sm:$0xff]
  %v29 = vld [vmem:[%s0 + $0x78] sm:$0xff]
  %v30 = vld [vmem:[%s0 + $0x80] sm:$0xff]
  %v31 = vld [vmem:[%s0 + $0x88] sm:$0xff]
  %v32 = vld [vmem:[%s0 + $0x90] sm:$0xff]
  %v33 = vld [vmem:[%s0 + $0x98] sm:$0xff]
  %v34 = vld [vmem:[%s0 + $0xa0] sm:$0xff]
  %v35 = vld [vmem:[%s0 + $0xa8] sm:$0xff]
  %v36 = vld [vmem:[%s0 + $0xb0] sm:$0xff]
  %v37 = vld [vmem:[%s0 + $0xb8] sm:$0xff]
  %v38 = vld [vmem:[%s0 + $0xc0] sm:$0xff]
  %v39 = vld [vmem:[%s0 + $0xc8] sm:$0xff]
  %v40 = vld [vmem:[%s0 + $0xd0] sm:$0xff]
  %v41 = vld [vmem:[%s0 + $0xd8] sm:$0xff]
  %v42 = vld [vmem:[%s0 + $0xe0] sm:$0xff]
  %v43 = vld [vmem:[%s0 + $0xe8] sm:$0xff]
  %v44 = vld [vmem:[%s0 + $0xf0] sm:$0xff]
  %v45 = vld [vmem:[%s0 + $0xf8] sm:$0xff]
  %v46 = vld [vmem:[%s0 + $0x100] sm:$0xff]
  %v47 = vld [vmem:[%s0 + $0x108] sm:$0xff]
  %v48 = vld [vmem:[%s0 + $0x110] sm:$0xff]
  %v49 = vld [vmem:[%s0 + $0x118] sm:$0xff]
  %v50 = vld [vmem:[%s0 + $0x120] sm:$0xff]
  %v51 = vld [vmem:[%s0 + $0x128] sm:$0xff]
  %v52 = vld [vmem:[%s0 + $0x130] sm:$0xff]
  %v53 = vld [vmem:[%s0 + $0x138] sm:$0xff]
  %v54 = vld [vmem:[%s0 + $0x140] sm:$0xff]
  %v55 = vld [vmem:[%s0 + $0x148] sm:$0xff]
  %v56 = vld [vmem:[%s0 + $0x150] sm:$0xff]
  %v57 = vld [vmem:[%s0 + $0x158] sm:$0xff]
  %v58 = vld [vmem:[%s0 + $0x160] sm:$0xff]
  %v59 = vld [vmem:[%s0 + $0x168] sm:$0xff]
  %v60 = vld [vmem:[%s0 + $0x170] sm:$0xff]
  %v61 = vld [vmem:[%s0 + $0x178] sm:$0xff]
  %v62 = vld [vmem:[%s0 + $0x180] sm:$0xff]
  %v63 = vld [vmem:[%s0 + $0x188] sm:$0xff]
  %v64 = vld [vmem:[%s0 + $0x190] sm:$0xff]
  %v65 = vld [vmem:[%s0 + $0x198] sm:$0xff]
  %v66 = vld [vmem:[%s0 + $0x1a0] sm:$0xff]
  %v67 = vld [vmem:[%s0 + $0x1a8] sm:$0xff]
  %v68 = vld [vmem:[%s0 + $0x1b0] sm:$0xff]
  %v69 = vld [vmem:[%s0 + $0x1b8] sm:$0xff]
  %v70 = vld [vmem:[%s0 + $0x1c0] sm:$0xff]
  %v71 = vld [vmem:[%s0 + $0x1c8] sm:$0xff]
  %v72 = vld [vmem:[%s0 + $0x1d0] sm:$0xff]
  %v73 = vld [vmem:[%s0 + $0x1d8] sm:$0xff]
  %v74 = vld [vmem:[%s0 + $0x1e0] sm:$0xff]
  %v75 = vld [vmem:[%s0 + $0x1e8] sm:$0xff]
  %v76 = vld [vmem:[%s0 + $0x1f0] sm:$0xff]
  %v77 = vld [vmem:[%s0 + $0x1f8] sm:$0xff]
  %v78 = vld [vmem:[%s0 + $0x200] sm:$0xff]
  %v79 = vld [vmem:[%s0 + $0x208] sm:$0xff]
  %v80 = vld [vmem:[%s0 + $0x210] sm:$0xff]
  %v81 = vld [vmem:[%s0 + $0x218] sm:$0xff]
  %v82 = vld [vmem:[%s0 + $0x220] sm:$0xff]
  %v83 = vld [vmem:[%s0 + $0x228] sm:$0xff]
  %v84 = vld [vmem:[%s0 + $0x230] sm:$0xff]
  %v85 = vld [vmem:[%s0 + $0x238] sm:$0xff]
  %v86 = vld [vmem:[%s1] sm:$0xff]
  %v87 = vld [vmem:[%s1 + $0x8] sm:$0xff]
  %v88 = vld [vmem:[%s1 + $0x10] sm:$0xff]
  %v89 = vld [vmem:[%s1 + $0x18] sm:$0xff]
  %v90 = vld [vmem:[%s1 + $0x20] sm:$0xff]
  %v91 = vld [vmem:[%s1 + $0x28] sm:$0xff]
  %v92 = vld [vmem:[%s1 + $0x30] sm:$0xff]
  %v93 = vld [vmem:[%s1 + $0x38] sm:$0xff]
  %v94 = vld [vmem:[%s1 + $0x40] sm:$0xff]
  %v95 = vld [vmem:[%s1 + $0x48] sm:$0xff]
  %v96 = vld [vmem:[%s1 + $0x50] sm:$0xff]
  %v97 = vld [vmem:[%s1 + $0x58] sm:$0xff]
  %v98 = vld [vmem:[%s1 + $0x60] sm:$0xff]
  %v99 = vld [vmem:[%s1 + $0x68] sm:$0xff]
  %v100 = vld [vmem:[%s1 + $0x70] sm:$0xff]
  %v101 = vld [vmem:[%s1 + $0x78] sm:$0xff]
  %v102 = vld [vmem:[%s1 + $0x80] sm:$0xff]
  %v103 = vld [vmem:[%s1 + $0x88] sm:$0xff]
  %v104 = vld [vmem:[%s1 + $0x90] sm:$0xff]
  %v105 = vld [vmem:[%s1 + $0x98] sm:$0xff]
  %v106 = vld [vmem:[%s1 + $0xa0] sm:$0xff]
  %v107 = vld [vmem:[%s1 + $0xa8] sm:$0xff]
  %v108 = vld [vmem:[%s1 + $0xb0] sm:$0xff]
  %v109 = vld [vmem:[%s1 + $0xb8] sm:$0xff]
  %v110 = vld [vmem:[%s1 + $0xc0] sm:$0xff]
  %v111 = vld [vmem:[%s1 + $0xc8] sm:$0xff]
  %v112 = vld [vmem:[%s1 + $0xd0] sm:$0xff]
  %v113 = vld [vmem:[%s1 + $0xd8] sm:$0xff]
  %v114 = vld [vmem:[%s1 + $0xe0] sm:$0xff]
  %v115 = vld [vmem:[%s1 + $0xe8] sm:$0xff]
  %v116 = vld [vmem:[%s1 + $0xf0] sm:$0xff]
  %v117 = vld [vmem:[%s1 + $0xf8] sm:$0xff]
  %v118 = vld [vmem:[%s1 + $0x100] sm:$0xff]
  %v119 = vld [vmem:[%s1 + $0x108] sm:$0xff]
  %v120 = vld [vmem:[%s1 + $0x110] sm:$0xff]
  %v121 = vld [vmem:[%s1 + $0x118] sm:$0xff]
  %v122 = vld [vmem:[%s1 + $0x120] sm:$0xff]
  %v123 = vld [vmem:[%s1 + $0x128] sm:$0xff]
  %v124 = vld [vmem:[%s1 + $0x130] sm:$0xff]
  %v125 = vld [vmem:[%s1 + $0x138] sm:$0xff]
  %v126 = vld [vmem:[%s1 + $0x140] sm:$0xff]
  %v127 = vld [vmem:[%s1 + $0x148] sm:$0xff]
  %v128 = vld [vmem:[%s1 + $0x150] sm:$0xff]
  %v129 = vld [vmem:[%s1 + $0x158] sm:$0xff]
  %v130 = vld [vmem:[%s1 + $0x160] sm:$0xff]
  %v131 = vld [vmem:[%s1 + $0x168] sm:$0xff]
  %v132 = vld [vmem:[%s1 + $0x170] sm:$0xff]
  %v133 = vld [vmem:[%s1 + $0x178] sm:$0xff]
  %v134 = vld [vmem:[%s1 + $0x180] sm:$0xff]
  %v135 = vld [vmem:[%s1 + $0x188] sm:$0xff]
  %v136 = vld [vmem:[%s1 + $0x190] sm:$0xff]
  %v137 = vld [vmem:[%s1 + $0x198] sm:$0xff]
  %v138 = vld [vmem:[%s1 + $0x1a0] sm:$0xff]
  %v139 = vld [vmem:[%s1 + $0x1a8] sm:$0xff]
  %v140 = vld [vmem:[%s1 + $0x1b0] sm:$0xff]
  %v141 = vld [vmem:[%s1 + $0x1b8] sm:$0xff]
  %v142 = vld [vmem:[%s1 + $0x1c0] sm:$0xff]
  %v143 = vld [vmem:[%s1 + $0x1c8] sm:$0xff]
  %v144 = vld [vmem:[%s1 + $0x1d0] sm:$0xff]
  %v145 = vld [vmem:[%s1 + $0x1d8] sm:$0xff]
  %v146 = vld [vmem:[%s1 + $0x1e0] sm:$0xff]
  %v147 = vld [vmem:[%s1 + $0x1e8] sm:$0xff]
  %v148 = vld [vmem:[%s1 + $0x1f0] sm:$0xff]
  %v149 = vld [vmem:[%s1 + $0x1f8] sm:$0xff]
  %v150 = vld [vmem:[%s1 + $0x200] sm:$0xff]
  %v151 = vld [vmem:[%s1 + $0x208] sm:$0xff]
  %v152 = vld [vmem:[%s1 + $0x210] sm:$0xff]
  %v153 = vld [vmem:[%s1 + $0x218] sm:$0xff]
  %v154 = vld [vmem:[%s1 + $0x220] sm:$0xff]
  %v155 = vld [vmem:[%s1 + $0x228] sm:$0xff]
  %v156 = vld [vmem:[%s1 + $0x230] sm:$0xff]
  %v157 = vld [vmem:[%s1 + $0x238] sm:$0xff]
  %v158 = vld [vmem:[%s1 + $0x240] sm:$0xff]
  %v159 = vld [vmem:[%s1 + $0x248] sm:$0xff]
  %v160 = vld [vmem:[%s1 + $0x250] sm:$0xff]
  %v161 = vld [vmem:[%s1 + $0x258] sm:$0xff]
  %v162 = vld [vmem:[%s1 + $0x260] sm:$0xff]
  %v163 = vld [vmem:[%s1 + $0x268] sm:$0xff]
  %v164 = vld [vmem:[%s1 + $0x270] sm:$0xff]
  %v165 = vld [vmem:[%s1 + $0x278] sm:$0xff]
  %v166 = vld [vmem:[%s1 + $0x280] sm:$0xff]
  %v167 = vld [vmem:[%s1 + $0x288] sm:$0xff]
  %v168 = vld [vmem:[%s1 + $0x290] sm:$0xff]
  %v169 = vld [vmem:[%s1 + $0x298] sm:$0xff]
  %v170 = vld [vmem:[%s1 + $0x2a0] sm:$0xff]
  %v171 = vld [vmem:[%s1 + $0x2a8] sm:$0xff]
  %v172 = vld [vmem:[%s1 + $0x2b0] sm:$0xff]
  %v173 = vld [vmem:[%s1 + $0x2b8] sm:$0xff]
  %v174 = vld [vmem:[%s1 + $0x2c0] sm:$0xff]
  %v175 = vld [vmem:[%s1 + $0x2c8] sm:$0xff]
  %v176 = vld [vmem:[%s1 + $0x2d0] sm:$0xff]
  %v177 = vld [vmem:[%s1 + $0x2d8] sm:$0xff]
  %v178 = vld [vmem:[%s1 + $0x2e0] sm:$0xff]
  %v179 = vld [vmem:[%s1 + $0x2e8] sm:$0xff]
  %v180 = vld [vmem:[%s1 + $0x2f0] sm:$0xff]
  %v181 = vld [vmem:[%s1 + $0x2f8] sm:$0xff]
  %v182 = vld [vmem:[%s1 + $0x300] sm:$0xff]
  %v183 = vld [vmem:[%s1 + $0x308] sm:$0xff]
  %v184 = vld [vmem:[%s1 + $0x310] sm:$0xff]
  %v185 = vld [vmem:[%s1 + $0x318] sm:$0xff]
  %v186 = vld [vmem:[%s1 + $0x320] sm:$0xff]
  %v187 = vld [vmem:[%s1 + $0x328] sm:$0xff]
  %v188 = vld [vmem:[%s1 + $0x330] sm:$0xff]
  %v189 = vld [vmem:[%s1 + $0x338] sm:$0xff]
  %v190 = vld [vmem:[%s1 + $0x340] sm:$0xff]
  %v191 = vld [vmem:[%s1 + $0x348] sm:$0xff]
  %v192 = vld [vmem:[%s1 + $0x350] sm:$0xff]
  %v193 = vld [vmem:[%s1 + $0x358] sm:$0xff]
  %v194 = vld [vmem:[%s1 + $0x360] sm:$0xff]
  %v195 = vld [vmem:[%s1 + $0x368] sm:$0xff]
  %v196 = vld [vmem:[%s1 + $0x370] sm:$0xff]
  %v197 = vld [vmem:[%s1 + $0x378] sm:$0xff]
  %v198 = vld [vmem:[%s1 + $0x380] sm:$0xff]
  %v199 = vld [vmem:[%s1 + $0x388] sm:$0xff]
  %v200 = vld [vmem:[%s1 + $0x390] sm:$0xff]
  %v201 = vld [vmem:[%s1 + $0x398] sm:$0xff]
  %v202 = vld [vmem:[%s1 + $0x3a0] sm:$0xff]
  %v203 = vld [vmem:[%s1 + $0x3a8] sm:$0xff]
  %v204 = vld [vmem:[%s1 + $0x3b0] sm:$0xff]
  %v205 = vld [vmem:[%s1 + $0x3b8] sm:$0xff]
  %v206 = vld [vmem:[%s1 + $0x3c0] sm:$0xff]
  %v207 = vld [vmem:[%s1 + $0x3c8] sm:$0xff]
  %v208 = vld [vmem:[%s1 + $0x3d0] sm:$0xff]
  %v209 = vld [vmem:[%s1 + $0x3d8] sm:$0xff]
  %v210 = vld [vmem:[%s1 + $0x3e0] sm:$0xff]
  %v211 = vld [vmem:[%s1 + $0x3e8] sm:$0xff]
  %v212 = vld [vmem:[%s1 + $0x3f0] sm:$0xff]
  %v213 = vld [vmem:[%s1 + $0x3f8] sm:$0xff]
  %v214 = vld [vmem:[%s2] sm:$0x1]
  %v216 = vlaneseq
  %v217 = vshrl.u32 %v216, 7
  %v218 = vsub.s32 0, %v217
  %v219 = vrot.slane %v214, %v218
  %221 = vmatprep.subr.mxu0 0.0
  %222 = vmatpush1.msra.mxu0 %v86
  %223 = vmatprep.subr.mxu0 0.0
  %224 = vmatpush1.msra.mxu0 %v87
  %225 = vmatprep.subr.mxu0 0.0
  %226 = vmatpush1.msra.mxu0 %v88
  %227 = vmatprep.subr.mxu0 0.0
  %228 = vmatpush1.msra.mxu0 %v89
  %229 = vmatprep.subr.mxu0 0.0
  %230 = vmatpush1.msra.mxu0 %v90
  %231 = vmatprep.subr.mxu0 0.0
  %232 = vmatpush1.msra.mxu0 %v91
  %233 = vmatprep.subr.mxu0 0.0
  %234 = vmatpush1.msra.mxu0 %v92
  %235 = vmatprep.subr.mxu0 0.0
  %236 = vmatpush1.msra.mxu0 %v93
  %237 = vmatprep.subr.mxu0 0.0
  %238 = vmatpush1.msra.mxu0 %v94
  %239 = vmatprep.subr.mxu0 0.0
  %240 = vmatpush1.msra.mxu0 %v95
  %241 = vmatprep.subr.mxu0 0.0
  %242 = vmatpush1.msra.mxu0 %v96
  %243 = vmatprep.subr.mxu0 0.0
  %244 = vmatpush1.msra.mxu0 %v97
  %245 = vmatprep.subr.mxu0 0.0
  %246 = vmatpush1.msra.mxu0 %v98
  %247 = vmatprep.subr.mxu0 0.0
  %248 = vmatpush1.msra.mxu0 %v99
  %249 = vmatprep.subr.mxu0 0.0
  %250 = vmatpush1.msra.mxu0 %v100
  %251 = vmatprep.subr.mxu0 0.0
  %252 = vmatpush1.msra.mxu0 %v101
  %253 = vmatprep.subr.mxu0 0.0
  %254 = vmatpush1.msra.mxu0 %v102
  %255 = vmatprep.subr.mxu0 0.0
  %256 = vmatpush1.msra.mxu0 %v103
  %257 = vmatprep.subr.mxu0 0.0
  %258 = vmatpush1.msra.mxu0 %v104
  %259 = vmatprep.subr.mxu0 0.0
  %260 = vmatpush1.msra.mxu0 %v105
  %261 = vmatprep.subr.mxu0 0.0
  %262 = vmatpush1.msra.mxu0 %v106
  %263 = vmatprep.subr.mxu0 0.0
  %264 = vmatpush1.msra.mxu0 %v107
  %265 = vmatprep.subr.mxu0 0.0
  %266 = vmatpush1.msra.mxu0 %v108
  %267 = vmatprep.subr.mxu0 0.0
  %268 = vmatpush1.msra.mxu0 %v109
  %269 = vmatprep.subr.mxu0 0.0
  %270 = vmatpush1.msra.mxu0 %v110
  %271 = vmatprep.subr.mxu0 0.0
  %272 = vmatpush1.msra.mxu0 %v111
  %273 = vmatprep.subr.mxu0 0.0
  %274 = vmatpush1.msra.mxu0 %v112
  %275 = vmatprep.subr.mxu0 0.0
  %276 = vmatpush1.msra.mxu0 %v113
  %277 = vmatprep.subr.mxu0 0.0
  %278 = vmatpush1.msra.mxu0 %v114
  %279 = vmatprep.subr.mxu0 0.0
  %280 = vmatpush1.msra.mxu0 %v115
  %281 = vmatprep.subr.mxu0 0.0
  %282 = vmatpush1.msra.mxu0 %v116
  %283 = vmatprep.subr.mxu0 0.0
  %284 = vmatpush1.msra.mxu0 %v117
  %285 = vmatprep.mubr.f32.mxu0 %v15
  %286 = vmatmul.mubr.f32.gmra.mrb[0].mxu0 %v14
  %v287 = vpop.f32.mrb[0].mxu0
  %v288 = vadd.f32 %v219, %v287
  %v289 = vpop.f32.mrb[0].mxu0
  %290 = vmatprep.mubr.f32.mxu0 %v23
  %291 = vmatmul.mubr.f32.gmra.mrb[0].mxu0 %v22
  %v292 = vpop.f32.mrb[0].mxu0
  %v293 = vadd.f32 %v219, %v292
  %v294 = vpop.f32.mrb[0].mxu0
  %295 = vmatprep.mubr.f32.mxu0 %v31
  %296 = vmatmul.mubr.f32.gmra.mrb[0].mxu0 %v30
  %v297 = vpop.f32.mrb[0].mxu0
  %v298 = vadd.f32 %v219, %v297
  %v299 = vpop.f32.mrb[0].mxu0
  %300 = vmatprep.mubr.f32.mxu0 %v39
  %301 = vmatmul.mubr.f32.gmra.mrb[0].mxu0 %v38
  %v302 = vpop.f32.mrb[0].mxu0
  %v303 = vadd.f32 %v219, %v302
  %v304 = vpop.f32.mrb[0].mxu0
  %305 = vmatprep.mubr.f32.mxu0 %v47
  %306 = vmatmul.mubr.f32.gmra.mrb[0].mxu0 %v46
  %v307 = vpop.f32.mrb[0].mxu0
  %v308 = vadd.f32 %v219, %v307
  %v309 = vpop.f32.mrb[0].mxu0
  %310 = vmatprep.mubr.f32.mxu0 %v55
  %311 = vmatmul.mubr.f32.gmra.mrb[0].mxu0 %v54
  %v312 = vpop.f32.mrb[0].mxu0
  %v313 = vadd.f32 %v219, %v312
  %v314 = vpop.f32.mrb[0].mxu0
  %315 = vmatprep.mubr.f32.mxu0 %v63
  %316 = vmatmul.mubr.f32.gmra.mrb[0].mxu0 %v62
  %v317 = vpop.f32.mrb[0].mxu0
  %v318 = vadd.f32 %v219, %v317
  %v319 = vpop.f32.mrb[0].mxu0
  %320 = vmatprep.mubr.f32.mxu0 %v71
  %321 = vmatmul.mubr.f32.gmra.mrb[0].mxu0 %v70
  %v322 = vpop.f32.mrb[0].mxu0
  %v323 = vadd.f32 %v219, %v322
  %v324 = vpop.f32.mrb[0].mxu0
  %325 = vmatprep.mubr.f32.mxu0 %v79
  %326 = vmatmul.mubr.f32.gmra.mrb[0].mxu0 %v78
  %v327 = vpop.f32.mrb[0].mxu0
  %v328 = vadd.f32 %v219, %v327
  %v329 = vpop.f32.mrb[0].mxu0
  %330 = vdwg.mxu0
  %331 = vmatprep.subr.mxu0 0.0
  %332 = vmatpush1.msra.mxu0 %v118
  %333 = vmatprep.subr.mxu0 0.0
  %334 = vmatpush1.msra.mxu0 %v119
  %335 = vmatprep.subr.mxu0 0.0
  %336 = vmatpush1.msra.mxu0 %v120
  %337 = vmatprep.subr.mxu0 0.0
  %338 = vmatpush1.msra.mxu0 %v121
  %339 = vmatprep.subr.mxu0 0.0
  %340 = vmatpush1.msra.mxu0 %v122
  %341 = vmatprep.subr.mxu0 0.0
  %342 = vmatpush1.msra.mxu0 %v123
  %343 = vmatprep.subr.mxu0 0.0
  %344 = vmatpush1.msra.mxu0 %v124
  %345 = vmatprep.subr.mxu0 0.0
  %346 = vmatpush1.msra.mxu0 %v125
  %347 = vmatprep.subr.mxu0 0.0
  %348 = vmatpush1.msra.mxu0 %v126
  %349 = vmatprep.subr.mxu0 0.0
  %350 = vmatpush1.msra.mxu0 %v127
  %351 = vmatprep.subr.mxu0 0.0
  %352 = vmatpush1.msra.mxu0 %v128
  %353 = vmatprep.subr.mxu0 0.0
  %354 = vmatpush1.msra.mxu0 %v129
  %355 = vmatprep.subr.mxu0 0.0
  %356 = vmatpush1.msra.mxu0 %v130
  %357 = vmatprep.subr.mxu0 0.0
  %358 = vmatpush1.msra.mxu0 %v131
  %359 = vmatprep.subr.mxu0 0.0
  %360 = vmatpush1.msra.mxu0 %v132
  %361 = vmatprep.subr.mxu0 0.0
  %362 = vmatpush1.msra.mxu0 %v133
  %363 = vmatprep.subr.mxu0 0.0
  %364 = vmatpush1.msra.mxu0 %v134
  %365 = vmatprep.subr.mxu0 0.0
  %366 = vmatpush1.msra.mxu0 %v135
  %367 = vmatprep.subr.mxu0 0.0
  %368 = vmatpush1.msra.mxu0 %v136
  %369 = vmatprep.subr.mxu0 0.0
  %370 = vmatpush1.msra.mxu0 %v137
  %371 = vmatprep.subr.mxu0 0.0
  %372 = vmatpush1.msra.mxu0 %v138
  %373 = vmatprep.subr.mxu0 0.0
  %374 = vmatpush1.msra.mxu0 %v139
  %375 = vmatprep.subr.mxu0 0.0
  %376 = vmatpush1.msra.mxu0 %v140
  %377 = vmatprep.subr.mxu0 0.0
  %378 = vmatpush1.msra.mxu0 %v141
  %379 = vmatprep.subr.mxu0 0.0
  %380 = vmatpush1.msra.mxu0 %v142
  %381 = vmatprep.subr.mxu0 0.0
  %382 = vmatpush1.msra.mxu0 %v143
  %383 = vmatprep.subr.mxu0 0.0
  %384 = vmatpush1.msra.mxu0 %v144
  %385 = vmatprep.subr.mxu0 0.0
  %386 = vmatpush1.msra.mxu0 %v145
  %387 = vmatprep.subr.mxu0 0.0
  %388 = vmatpush1.msra.mxu0 %v146
  %389 = vmatprep.subr.mxu0 0.0
  %390 = vmatpush1.msra.mxu0 %v147
  %391 = vmatprep.subr.mxu0 0.0
  %392 = vmatpush1.msra.mxu0 %v148
  %393 = vmatprep.subr.mxu0 0.0
  %394 = vmatpush1.msra.mxu0 %v149
  %395 = vmatprep.mubr.f32.mxu0 %v17
  %396 = vmatmul.mubr.f32.gmra.mrb[0].mxu0 %v16
  %v397 = vpop.f32.mrb[0].mxu0
  %v398 = vadd.f32 %v288, %v397
  %v399 = vpop.f32.mrb[0].mxu0
  %400 = vmatprep.mubr.f32.mxu0 %v25
  %401 = vmatmul.mubr.f32.gmra.mrb[0].mxu0 %v24
  %v402 = vpop.f32.mrb[0].mxu0
  %v403 = vadd.f32 %v293, %v402
  %v404 = vpop.f32.mrb[0].mxu0
  %405 = vmatprep.mubr.f32.mxu0 %v33
  %406 = vmatmul.mubr.f32.gmra.mrb[0].mxu0 %v32
  %v407 = vpop.f32.mrb[0].mxu0
  %v408 = vadd.f32 %v298, %v407
  %v409 = vpop.f32.mrb[0].mxu0
  %410 = vmatprep.mubr.f32.mxu0 %v41
  %411 = vmatmul.mubr.f32.gmra.mrb[0].mxu0 %v40
  %v412 = vpop.f32.mrb[0].mxu0
  %v413 = vadd.f32 %v303, %v412
  %v414 = vpop.f32.mrb[0].mxu0
  %415 = vmatprep.mubr.f32.mxu0 %v49
  %416 = vmatmul.mubr.f32.gmra.mrb[0].mxu0 %v48
  %v417 = vpop.f32.mrb[0].mxu0
  %v418 = vadd.f32 %v308, %v417
  %v419 = vpop.f32.mrb[0].mxu0
  %420 = vmatprep.mubr.f32.mxu0 %v57
  %421 = vmatmul.mubr.f32.gmra.mrb[0].mxu0 %v56
  %v422 = vpop.f32.mrb[0].mxu0
  %v423 = vadd.f32 %v313, %v422
  %v424 = vpop.f32.mrb[0].mxu0
  %425 = vmatprep.mubr.f32.mxu0 %v65
  %426 = vmatmul.mubr.f32.gmra.mrb[0].mxu0 %v64
  %v427 = vpop.f32.mrb[0].mxu0
  %v428 = vadd.f32 %v318, %v427
  %v429 = vpop.f32.mrb[0].mxu0
  %430 = vmatprep.mubr.f32.mxu0 %v73
  %431 = vmatmul.mubr.f32.gmra.mrb[0].mxu0 %v72
  %v432 = vpop.f32.mrb[0].mxu0
  %v433 = vadd.f32 %v323, %v432
  %v434 = vpop.f32.mrb[0].mxu0
  %435 = vmatprep.mubr.f32.mxu0 %v81
  %436 = vmatmul.mubr.f32.gmra.mrb[0].mxu0 %v80
  %v437 = vpop.f32.mrb[0].mxu0
  %v438 = vadd.f32 %v328, %v437
  %v439 = vpop.f32.mrb[0].mxu0
  %440 = vdwg.mxu0
  %441 = vmatprep.subr.mxu0 0.0
  %442 = vmatpush1.msra.mxu0 %v150
  %443 = vmatprep.subr.mxu0 0.0
  %444 = vmatpush1.msra.mxu0 %v151
  %445 = vmatprep.subr.mxu0 0.0
  %446 = vmatpush1.msra.mxu0 %v152
  %447 = vmatprep.subr.mxu0 0.0
  %448 = vmatpush1.msra.mxu0 %v153
  %449 = vmatprep.subr.mxu0 0.0
  %450 = vmatpush1.msra.mxu0 %v154
  %451 = vmatprep.subr.mxu0 0.0
  %452 = vmatpush1.msra.mxu0 %v155
  %453 = vmatprep.subr.mxu0 0.0
  %454 = vmatpush1.msra.mxu0 %v156
  %455 = vmatprep.subr.mxu0 0.0
  %456 = vmatpush1.msra.mxu0 %v157
  %457 = vmatprep.subr.mxu0 0.0
  %458 = vmatpush1.msra.mxu0 %v158
  %459 = vmatprep.subr.mxu0 0.0
  %460 = vmatpush1.msra.mxu0 %v159
  %461 = vmatprep.subr.mxu0 0.0
  %462 = vmatpush1.msra.mxu0 %v160
  %463 = vmatprep.subr.mxu0 0.0
  %464 = vmatpush1.msra.mxu0 %v161
  %465 = vmatprep.subr.mxu0 0.0
  %466 = vmatpush1.msra.mxu0 %v162
  %467 = vmatprep.subr.mxu0 0.0
  %468 = vmatpush1.msra.mxu0 %v163
  %469 = vmatprep.subr.mxu0 0.0
  %470 = vmatpush1.msra.mxu0 %v164
  %471 = vmatprep.subr.mxu0 0.0
  %472 = vmatpush1.msra.mxu0 %v165
  %473 = vmatprep.subr.mxu0 0.0
  %474 = vmatpush1.msra.mxu0 %v166
  %475 = vmatprep.subr.mxu0 0.0
  %476 = vmatpush1.msra.mxu0 %v167
  %477 = vmatprep.subr.mxu0 0.0
  %478 = vmatpush1.msra.mxu0 %v168
  %479 = vmatprep.subr.mxu0 0.0
  %480 = vmatpush1.msra.mxu0 %v169
  %481 = vmatprep.subr.mxu0 0.0
  %482 = vmatpush1.msra.mxu0 %v170
  %483 = vmatprep.subr.mxu0 0.0
  %484 = vmatpush1.msra.mxu0 %v171
  %485 = vmatprep.subr.mxu0 0.0
  %486 = vmatpush1.msra.mxu0 %v172
  %487 = vmatprep.subr.mxu0 0.0
  %488 = vmatpush1.msra.mxu0 %v173
  %489 = vmatprep.subr.mxu0 0.0
  %490 = vmatpush1.msra.mxu0 %v174
  %491 = vmatprep.subr.mxu0 0.0
  %492 = vmatpush1.msra.mxu0 %v175
  %493 = vmatprep.subr.mxu0 0.0
  %494 = vmatpush1.msra.mxu0 %v176
  %495 = vmatprep.subr.mxu0 0.0
  %496 = vmatpush1.msra.mxu0 %v177
  %497 = vmatprep.subr.mxu0 0.0
  %498 = vmatpush1.msra.mxu0 %v178
  %499 = vmatprep.subr.mxu0 0.0
  %500 = vmatpush1.msra.mxu0 %v179
  %501 = vmatprep.subr.mxu0 0.0
  %502 = vmatpush1.msra.mxu0 %v180
  %503 = vmatprep.subr.mxu0 0.0
  %504 = vmatpush1.msra.mxu0 %v181
  %505 = vmatprep.mubr.f32.mxu0 %v19
  %506 = vmatmul.mubr.f32.gmra.mrb[0].mxu0 %v18
  %v507 = vpop.f32.mrb[0].mxu0
  %v508 = vadd.f32 %v398, %v507
  %v509 = vpop.f32.mrb[0].mxu0
  %510 = vmatprep.mubr.f32.mxu0 %v27
  %511 = vmatmul.mubr.f32.gmra.mrb[0].mxu0 %v26
  %v512 = vpop.f32.mrb[0].mxu0
  %v513 = vadd.f32 %v403, %v512
  %v514 = vpop.f32.mrb[0].mxu0
  %515 = vmatprep.mubr.f32.mxu0 %v35
  %516 = vmatmul.mubr.f32.gmra.mrb[0].mxu0 %v34
  %v517 = vpop.f32.mrb[0].mxu0
  %v518 = vadd.f32 %v408, %v517
  %v519 = vpop.f32.mrb[0].mxu0
  %520 = vmatprep.mubr.f32.mxu0 %v43
  %521 = vmatmul.mubr.f32.gmra.mrb[0].mxu0 %v42
  %v522 = vpop.f32.mrb[0].mxu0
  %v523 = vadd.f32 %v413, %v522
  %v524 = vpop.f32.mrb[0].mxu0
  %525 = vmatprep.mubr.f32.mxu0 %v51
  %526 = vmatmul.mubr.f32.gmra.mrb[0].mxu0 %v50
  %v527 = vpop.f32.mrb[0].mxu0
  %v528 = vadd.f32 %v418, %v527
  %v529 = vpop.f32.mrb[0].mxu0
  %530 = vmatprep.mubr.f32.mxu0 %v59
  %531 = vmatmul.mubr.f32.gmra.mrb[0].mxu0 %v58
  %v532 = vpop.f32.mrb[0].mxu0
  %v533 = vadd.f32 %v423, %v532
  %v534 = vpop.f32.mrb[0].mxu0
  %535 = vmatprep.mubr.f32.mxu0 %v67
  %536 = vmatmul.mubr.f32.gmra.mrb[0].mxu0 %v66
  %v537 = vpop.f32.mrb[0].mxu0
  %v538 = vadd.f32 %v428, %v537
  %v539 = vpop.f32.mrb[0].mxu0
  %540 = vmatprep.mubr.f32.mxu0 %v75
  %541 = vmatmul.mubr.f32.gmra.mrb[0].mxu0 %v74
  %v542 = vpop.f32.mrb[0].mxu0
  %v543 = vadd.f32 %v433, %v542
  %v544 = vpop.f32.mrb[0].mxu0
  %545 = vmatprep.mubr.f32.mxu0 %v83
  %546 = vmatmul.mubr.f32.gmra.mrb[0].mxu0 %v82
  %v547 = vpop.f32.mrb[0].mxu0
  %v548 = vadd.f32 %v438, %v547
  %v549 = vpop.f32.mrb[0].mxu0
  %550 = vdwg.mxu0
  %551 = vmatprep.subr.mxu0 0.0
  %552 = vmatpush1.msra.mxu0 %v182
  %553 = vmatprep.subr.mxu0 0.0
  %554 = vmatpush1.msra.mxu0 %v183
  %555 = vmatprep.subr.mxu0 0.0
  %556 = vmatpush1.msra.mxu0 %v184
  %557 = vmatprep.subr.mxu0 0.0
  %558 = vmatpush1.msra.mxu0 %v185
  %559 = vmatprep.subr.mxu0 0.0
  %560 = vmatpush1.msra.mxu0 %v186
  %561 = vmatprep.subr.mxu0 0.0
  %562 = vmatpush1.msra.mxu0 %v187
  %563 = vmatprep.subr.mxu0 0.0
  %564 = vmatpush1.msra.mxu0 %v188
  %565 = vmatprep.subr.mxu0 0.0
  %566 = vmatpush1.msra.mxu0 %v189
  %567 = vmatprep.subr.mxu0 0.0
  %568 = vmatpush1.msra.mxu0 %v190
  %569 = vmatprep.subr.mxu0 0.0
  %570 = vmatpush1.msra.mxu0 %v191
  %571 = vmatprep.subr.mxu0 0.0
  %572 = vmatpush1.msra.mxu0 %v192
  %573 = vmatprep.subr.mxu0 0.0
  %574 = vmatpush1.msra.mxu0 %v193
  %575 = vmatprep.subr.mxu0 0.0
  %576 = vmatpush1.msra.mxu0 %v194
  %577 = vmatprep.subr.mxu0 0.0
  %578 = vmatpush1.msra.mxu0 %v195
  %579 = vmatprep.subr.mxu0 0.0
  %580 = vmatpush1.msra.mxu0 %v196
  %581 = vmatprep.subr.mxu0 0.0
  %582 = vmatpush1.msra.mxu0 %v197
  %583 = vmatprep.subr.mxu0 0.0
  %584 = vmatpush1.msra.mxu0 %v198
  %585 = vmatprep.subr.mxu0 0.0
  %586 = vmatpush1.msra.mxu0 %v199
  %587 = vmatprep.subr.mxu0 0.0
  %588 = vmatpush1.msra.mxu0 %v200
  %589 = vmatprep.subr.mxu0 0.0
  %590 = vmatpush1.msra.mxu0 %v201
  %591 = vmatprep.subr.mxu0 0.0
  %592 = vmatpush1.msra.mxu0 %v202
  %593 = vmatprep.subr.mxu0 0.0
  %594 = vmatpush1.msra.mxu0 %v203
  %595 = vmatprep.subr.mxu0 0.0
  %596 = vmatpush1.msra.mxu0 %v204
  %597 = vmatprep.subr.mxu0 0.0
  %598 = vmatpush1.msra.mxu0 %v205
  %599 = vmatprep.subr.mxu0 0.0
  %600 = vmatpush1.msra.mxu0 %v206
  %601 = vmatprep.subr.mxu0 0.0
  %602 = vmatpush1.msra.mxu0 %v207
  %603 = vmatprep.subr.mxu0 0.0
  %604 = vmatpush1.msra.mxu0 %v208
  %605 = vmatprep.subr.mxu0 0.0
  %606 = vmatpush1.msra.mxu0 %v209
  %607 = vmatprep.subr.mxu0 0.0
  %608 = vmatpush1.msra.mxu0 %v210
  %609 = vmatprep.subr.mxu0 0.0
  %610 = vmatpush1.msra.mxu0 %v211
  %611 = vmatprep.subr.mxu0 0.0
  %612 = vmatpush1.msra.mxu0 %v212
  %613 = vmatprep.subr.mxu0 0.0
  %614 = vmatpush1.msra.mxu0 %v213
  %615 = vmatprep.mubr.f32.mxu0 %v21
  %616 = vmatmul.mubr.f32.gmra.mrb[0].mxu0 %v20
  %v617 = vpop.f32.mrb[0].mxu0
  %v618 = vadd.f32 %v508, %v617
  %v619 = vpop.f32.mrb[0].mxu0
  %620 = vmatprep.mubr.f32.mxu0 %v29
  %621 = vmatmul.mubr.f32.gmra.mrb[0].mxu0 %v28
  %v622 = vpop.f32.mrb[0].mxu0
  %v623 = vadd.f32 %v513, %v622
  %v624 = vpop.f32.mrb[0].mxu0
  %625 = vmatprep.mubr.f32.mxu0 %v37
  %626 = vmatmul.mubr.f32.gmra.mrb[0].mxu0 %v36
  %v627 = vpop.f32.mrb[0].mxu0
  %v628 = vadd.f32 %v518, %v627
  %v629 = vpop.f32.mrb[0].mxu0
  %630 = vmatprep.mubr.f32.mxu0 %v45
  %631 = vmatmul.mubr.f32.gmra.mrb[0].mxu0 %v44
  %v632 = vpop.f32.mrb[0].mxu0
  %v633 = vadd.f32 %v523, %v632
  %v634 = vpop.f32.mrb[0].mxu0
  %635 = vmatprep.mubr.f32.mxu0 %v53
  %636 = vmatmul.mubr.f32.gmra.mrb[0].mxu0 %v52
  %v637 = vpop.f32.mrb[0].mxu0
  %v638 = vadd.f32 %v528, %v637
  %v639 = vpop.f32.mrb[0].mxu0
  %640 = vmatprep.mubr.f32.mxu0 %v61
  %641 = vmatmul.mubr.f32.gmra.mrb[0].mxu0 %v60
  %v642 = vpop.f32.mrb[0].mxu0
  %v643 = vadd.f32 %v533, %v642
  %v644 = vpop.f32.mrb[0].mxu0
  %645 = vmatprep.mubr.f32.mxu0 %v69
  %646 = vmatmul.mubr.f32.gmra.mrb[0].mxu0 %v68
  %v647 = vpop.f32.mrb[0].mxu0
  %v648 = vadd.f32 %v538, %v647
  %v649 = vpop.f32.mrb[0].mxu0
  %650 = vmatprep.mubr.f32.mxu0 %v77
  %651 = vmatmul.mubr.f32.gmra.mrb[0].mxu0 %v76
  %v652 = vpop.f32.mrb[0].mxu0
  %v653 = vadd.f32 %v543, %v652
  %v654 = vpop.f32.mrb[0].mxu0
  %655 = vmatprep.mubr.f32.mxu0 %v85
  %656 = vmatmul.mubr.f32.gmra.mrb[0].mxu0 %v84
  %v657 = vpop.f32.mrb[0].mxu0
  %v658 = vadd.f32 %v548, %v657
  %v659 = vpop.f32.mrb[0].mxu0
  %660 = vdwg.mxu0
  %v661 = vmax.f32 %v618, 0.0
  %v662 = vmax.f32 %v623, 0.0
  %v663 = vmax.f32 %v628, 0.0
  %v664 = vmax.f32 %v633, 0.0
  %v665 = vmax.f32 %v638, 0.0
  %v666 = vmax.f32 %v643, 0.0
  %v667 = vmax.f32 %v648, 0.0
  %v668 = vmax.f32 %v653, 0.0
  %v669 = vmax.f32 %v658, 0.0
  %670 = vst [vmem:[%s3] sm:$0xff] %v661
  %671 = vst [vmem:[%s3 + $0x8] sm:$0xff] %v662
  %672 = vst [vmem:[%s3 + $0x10] sm:$0xff] %v663
  %673 = vst [vmem:[%s3 + $0x18] sm:$0xff] %v664
  %674 = vst [vmem:[%s3 + $0x20] sm:$0xff] %v665
  %675 = vst [vmem:[%s3 + $0x28] sm:$0xff] %v666
  %676 = vst [vmem:[%s3 + $0x30] sm:$0xff] %v667
  %677 = vst [vmem:[%s3 + $0x38] sm:$0xff] %v668
  %678 = vst [vmem:[%s3 + $0x40] sm:$0xff] %v669
  // Predicated region
  $region14: #{_encoder_forward.7} parent=0 // pred_check
    _
  $region15: #{_encoder_forward.7} parent=0 // pred_check_branch
    %680 = sbr.rel (0) target = $region17
  $region16: #{_encoder_forward.7} parent=0 // pred_region
    _
  $region17: #{_encoder_forward.7} parent=0 // pred_fallthru
    _
  // Predicated region
  $region18: #{_encoder_forward.7} parent=0 // pred_check
    _
  $region19: #{_encoder_forward.7} parent=0 // pred_check_branch
    %682 = sbr.rel (0) target = $region21
  $region20: #{_encoder_forward.7} parent=0 // pred_region
    _
  $region21: #{_encoder_forward.7} parent=0 // pred_fallthru
    _

// kernel: _encoder_forward.9
$region0: #{_encoder_forward.9}
  #allocation0 [shape = 'u32[]', space=smem, size = 0x4, offset = 0x4, fixed_abs, tag = 'smem constant byte address 0x4 - core index']
  #allocation1 [shape = 'u32[144,128]{1,0:T(1,128)}', space=vmem, size = 0x12000, scoped, tag = 'internal scratch']
  %s0 = inlined_call_operand.vmem [shape: f32[8,1024], index: 0, kind: input, shape index: {}]
  %s1 = inlined_call_operand.vmem [shape: f32[1024,128], index: 1, kind: input, shape index: {}]
  %s2 = inlined_call_operand.vmem [shape: f32[1,128], index: 2, kind: input, shape index: {}]
  %s3 = inlined_call_operand.vmem [shape: f32[8,128], index: 3, kind: output, shape index: {}]
  %s4 = sld [smem:[#allocation0]]
  $region22: #{_encoder_forward.9} parent=0
    _
  %s6 = ssub.s32 1, %s4
  %s7 = scalar_select 0, %s6, %s4
  // Predicated region
  $region2: #{_encoder_forward.9} parent=0 // pred_check
    _
  $region3: #{_encoder_forward.9} parent=0 // pred_check_branch
    %9 = sbr.rel (0) target = $region5
  $region4: #{_encoder_forward.9} parent=0 // pred_region
    _
  $region5: #{_encoder_forward.9} parent=0 // pred_fallthru
    _
  // Predicated region
  $region6: #{_encoder_forward.9} parent=0 // pred_check
    _
  $region7: #{_encoder_forward.9} parent=0 // pred_check_branch
    %11 = sbr.rel (0) target = $region9
  $region8: #{_encoder_forward.9} parent=0 // pred_region
    _
  $region9: #{_encoder_forward.9} parent=0 // pred_fallthru
    _
  // Predicated region
  $region10: #{_encoder_forward.9} parent=0 // pred_check
    _
  $region11: #{_encoder_forward.9} parent=0 // pred_check_branch
    %13 = sbr.rel (0) target = $region13
  $region12: #{_encoder_forward.9} parent=0 // pred_region
    _
  $region13: #{_encoder_forward.9} parent=0 // pred_fallthru
    _
  %v14 = vld [vmem:[%s0] sm:$0xff]
  %v15 = vld [vmem:[%s0 + $0x8] sm:$0xff]
  %v16 = vld [vmem:[%s0 + $0x10] sm:$0xff]
  %v17 = vld [vmem:[%s0 + $0x18] sm:$0xff]
  %v18 = vld [vmem:[%s0 + $0x20] sm:$0xff]
  %v19 = vld [vmem:[%s0 + $0x28] sm:$0xff]
  %v20 = vld [vmem:[%s0 + $0x30] sm:$0xff]
  %v21 = vld [vmem:[%s0 + $0x38] sm:$0xff]
  %v22 = vld [vmem:[%s1] sm:$0xff]
  %v23 = vld [vmem:[%s1 + $0x8] sm:$0xff]
  %v24 = vld [vmem:[%s1 + $0x10] sm:$0xff]
  %v25 = vld [vmem:[%s1 + $0x18] sm:$0xff]
  %v26 = vld [vmem:[%s1 + $0x20] sm:$0xff]
  %v27 = vld [vmem:[%s1 + $0x28] sm:$0xff]
  %v28 = vld [vmem:[%s1 + $0x30] sm:$0xff]
  %v29 = vld [vmem:[%s1 + $0x38] sm:$0xff]
  %v30 = vld [vmem:[%s1 + $0x40] sm:$0xff]
  %v31 = vld [vmem:[%s1 + $0x48] sm:$0xff]
  %v32 = vld [vmem:[%s1 + $0x50] sm:$0xff]
  %v33 = vld [vmem:[%s1 + $0x58] sm:$0xff]
  %v34 = vld [vmem:[%s1 + $0x60] sm:$0xff]
  %v35 = vld [vmem:[%s1 + $0x68] sm:$0xff]
  %v36 = vld [vmem:[%s1 + $0x70] sm:$0xff]
  %v37 = vld [vmem:[%s1 + $0x78] sm:$0xff]
  %v38 = vld [vmem:[%s1 + $0x80] sm:$0xff]
  %v39 = vld [vmem:[%s1 + $0x88] sm:$0xff]
  %v40 = vld [vmem:[%s1 + $0x90] sm:$0xff]
  %v41 = vld [vmem:[%s1 + $0x98] sm:$0xff]
  %v42 = vld [vmem:[%s1 + $0xa0] sm:$0xff]
  %v43 = vld [vmem:[%s1 + $0xa8] sm:$0xff]
  %v44 = vld [vmem:[%s1 + $0xb0] sm:$0xff]
  %v45 = vld [vmem:[%s1 + $0xb8] sm:$0xff]
  %v46 = vld [vmem:[%s1 + $0xc0] sm:$0xff]
  %v47 = vld [vmem:[%s1 + $0xc8] sm:$0xff]
  %v48 = vld [vmem:[%s1 + $0xd0] sm:$0xff]
  %v49 = vld [vmem:[%s1 + $0xd8] sm:$0xff]
  %v50 = vld [vmem:[%s1 + $0xe0] sm:$0xff]
  %v51 = vld [vmem:[%s1 + $0xe8] sm:$0xff]
  %v52 = vld [vmem:[%s1 + $0xf0] sm:$0xff]
  %v53 = vld [vmem:[%s1 + $0xf8] sm:$0xff]
  %v54 = vld [vmem:[%s1 + $0x100] sm:$0xff]
  %v55 = vld [vmem:[%s1 + $0x108] sm:$0xff]
  %v56 = vld [vmem:[%s1 + $0x110] sm:$0xff]
  %v57 = vld [vmem:[%s1 + $0x118] sm:$0xff]
  %v58 = vld [vmem:[%s1 + $0x120] sm:$0xff]
  %v59 = vld [vmem:[%s1 + $0x128] sm:$0xff]
  %v60 = vld [vmem:[%s1 + $0x130] sm:$0xff]
  %v61 = vld [vmem:[%s1 + $0x138] sm:$0xff]
  %v62 = vld [vmem:[%s1 + $0x140] sm:$0xff]
  %v63 = vld [vmem:[%s1 + $0x148] sm:$0xff]
  %v64 = vld [vmem:[%s1 + $0x150] sm:$0xff]
  %v65 = vld [vmem:[%s1 + $0x158] sm:$0xff]
  %v66 = vld [vmem:[%s1 + $0x160] sm:$0xff]
  %v67 = vld [vmem:[%s1 + $0x168] sm:$0xff]
  %v68 = vld [vmem:[%s1 + $0x170] sm:$0xff]
  %v69 = vld [vmem:[%s1 + $0x178] sm:$0xff]
  %v70 = vld [vmem:[%s1 + $0x180] sm:$0xff]
  %v71 = vld [vmem:[%s1 + $0x188] sm:$0xff]
  %v72 = vld [vmem:[%s1 + $0x190] sm:$0xff]
  %v73 = vld [vmem:[%s1 + $0x198] sm:$0xff]
  %v74 = vld [vmem:[%s1 + $0x1a0] sm:$0xff]
  %v75 = vld [vmem:[%s1 + $0x1a8] sm:$0xff]
  %v76 = vld [vmem:[%s1 + $0x1b0] sm:$0xff]
  %v77 = vld [vmem:[%s1 + $0x1b8] sm:$0xff]
  %v78 = vld [vmem:[%s1 + $0x1c0] sm:$0xff]
  %v79 = vld [vmem:[%s1 + $0x1c8] sm:$0xff]
  %v80 = vld [vmem:[%s1 + $0x1d0] sm:$0xff]
  %v81 = vld [vmem:[%s1 + $0x1d8] sm:$0xff]
  %v82 = vld [vmem:[%s1 + $0x1e0] sm:$0xff]
  %v83 = vld [vmem:[%s1 + $0x1e8] sm:$0xff]
  %v84 = vld [vmem:[%s1 + $0x1f0] sm:$0xff]
  %v85 = vld [vmem:[%s1 + $0x1f8] sm:$0xff]
  %v86 = vld [vmem:[%s1 + $0x200] sm:$0xff]
  %v87 = vld [vmem:[%s1 + $0x208] sm:$0xff]
  %v88 = vld [vmem:[%s1 + $0x210] sm:$0xff]
  %v89 = vld [vmem:[%s1 + $0x218] sm:$0xff]
  %v90 = vld [vmem:[%s1 + $0x220] sm:$0xff]
  %v91 = vld [vmem:[%s1 + $0x228] sm:$0xff]
  %v92 = vld [vmem:[%s1 + $0x230] sm:$0xff]
  %v93 = vld [vmem:[%s1 + $0x238] sm:$0xff]
  %v94 = vld [vmem:[%s1 + $0x240] sm:$0xff]
  %v95 = vld [vmem:[%s1 + $0x248] sm:$0xff]
  %v96 = vld [vmem:[%s1 + $0x250] sm:$0xff]
  %v97 = vld [vmem:[%s1 + $0x258] sm:$0xff]
  %v98 = vld [vmem:[%s1 + $0x260] sm:$0xff]
  %v99 = vld [vmem:[%s1 + $0x268] sm:$0xff]
  %v100 = vld [vmem:[%s1 + $0x270] sm:$0xff]
  %v101 = vld [vmem:[%s1 + $0x278] sm:$0xff]
  %v102 = vld [vmem:[%s1 + $0x280] sm:$0xff]
  %v103 = vld [vmem:[%s1 + $0x288] sm:$0xff]
  %v104 = vld [vmem:[%s1 + $0x290] sm:$0xff]
  %v105 = vld [vmem:[%s1 + $0x298] sm:$0xff]
  %v106 = vld [vmem:[%s1 + $0x2a0] sm:$0xff]
  %v107 = vld [vmem:[%s1 + $0x2a8] sm:$0xff]
  %v108 = vld [vmem:[%s1 + $0x2b0] sm:$0xff]
  %v109 = vld [vmem:[%s1 + $0x2b8] sm:$0xff]
  %v110 = vld [vmem:[%s1 + $0x2c0] sm:$0xff]
  %v111 = vld [vmem:[%s1 + $0x2c8] sm:$0xff]
  %v112 = vld [vmem:[%s1 + $0x2d0] sm:$0xff]
  %v113 = vld [vmem:[%s1 + $0x2d8] sm:$0xff]
  %v114 = vld [vmem:[%s1 + $0x2e0] sm:$0xff]
  %v115 = vld [vmem:[%s1 + $0x2e8] sm:$0xff]
  %v116 = vld [vmem:[%s1 + $0x2f0] sm:$0xff]
  %v117 = vld [vmem:[%s1 + $0x2f8] sm:$0xff]
  %v118 = vld [vmem:[%s1 + $0x300] sm:$0xff]
  %v119 = vld [vmem:[%s1 + $0x308] sm:$0xff]
  %v120 = vld [vmem:[%s1 + $0x310] sm:$0xff]
  %v121 = vld [vmem:[%s1 + $0x318] sm:$0xff]
  %v122 = vld [vmem:[%s1 + $0x320] sm:$0xff]
  %v123 = vld [vmem:[%s1 + $0x328] sm:$0xff]
  %v124 = vld [vmem:[%s1 + $0x330] sm:$0xff]
  %v125 = vld [vmem:[%s1 + $0x338] sm:$0xff]
  %v126 = vld [vmem:[%s1 + $0x340] sm:$0xff]
  %v127 = vld [vmem:[%s1 + $0x348] sm:$0xff]
  %v128 = vld [vmem:[%s1 + $0x350] sm:$0xff]
  %v129 = vld [vmem:[%s1 + $0x358] sm:$0xff]
  %v130 = vld [vmem:[%s1 + $0x360] sm:$0xff]
  %v131 = vld [vmem:[%s1 + $0x368] sm:$0xff]
  %v132 = vld [vmem:[%s1 + $0x370] sm:$0xff]
  %v133 = vld [vmem:[%s1 + $0x378] sm:$0xff]
  %v134 = vld [vmem:[%s1 + $0x380] sm:$0xff]
  %v135 = vld [vmem:[%s1 + $0x388] sm:$0xff]
  %v136 = vld [vmem:[%s1 + $0x390] sm:$0xff]
  %v137 = vld [vmem:[%s1 + $0x398] sm:$0xff]
  %v138 = vld [vmem:[%s1 + $0x3a0] sm:$0xff]
  %v139 = vld [vmem:[%s1 + $0x3a8] sm:$0xff]
  %v140 = vld [vmem:[%s1 + $0x3b0] sm:$0xff]
  %v141 = vld [vmem:[%s1 + $0x3b8] sm:$0xff]
  %v142 = vld [vmem:[%s1 + $0x3c0] sm:$0xff]
  %v143 = vld [vmem:[%s1 + $0x3c8] sm:$0xff]
  %v144 = vld [vmem:[%s1 + $0x3d0] sm:$0xff]
  %v145 = vld [vmem:[%s1 + $0x3d8] sm:$0xff]
  %v146 = vld [vmem:[%s1 + $0x3e0] sm:$0xff]
  %v147 = vld [vmem:[%s1 + $0x3e8] sm:$0xff]
  %v148 = vld [vmem:[%s1 + $0x3f0] sm:$0xff]
  %v149 = vld [vmem:[%s1 + $0x3f8] sm:$0xff]
  %v150 = vld [vmem:[%s2] sm:$0x1]
  %v152 = vlaneseq
  %v153 = vshrl.u32 %v152, 7
  %v154 = vsub.s32 0, %v153
  %v155 = vrot.slane %v150, %v154
  %157 = vmatprep.subr.mxu0 0.0
  %158 = vmatpush1.msra.mxu0 %v22
  %159 = vmatprep.subr.mxu0 0.0
  %160 = vmatpush1.msra.mxu0 %v23
  %161 = vmatprep.subr.mxu0 0.0
  %162 = vmatpush1.msra.mxu0 %v24
  %163 = vmatprep.subr.mxu0 0.0
  %164 = vmatpush1.msra.mxu0 %v25
  %165 = vmatprep.subr.mxu0 0.0
  %166 = vmatpush1.msra.mxu0 %v26
  %167 = vmatprep.subr.mxu0 0.0
  %168 = vmatpush1.msra.mxu0 %v27
  %169 = vmatprep.subr.mxu0 0.0
  %170 = vmatpush1.msra.mxu0 %v28
  %171 = vmatprep.subr.mxu0 0.0
  %172 = vmatpush1.msra.mxu0 %v29
  %173 = vmatprep.subr.mxu0 0.0
  %174 = vmatpush1.msra.mxu0 %v30
  %175 = vmatprep.subr.mxu0 0.0
  %176 = vmatpush1.msra.mxu0 %v31
  %177 = vmatprep.subr.mxu0 0.0
  %178 = vmatpush1.msra.mxu0 %v32
  %179 = vmatprep.subr.mxu0 0.0
  %180 = vmatpush1.msra.mxu0 %v33
  %181 = vmatprep.subr.mxu0 0.0
  %182 = vmatpush1.msra.mxu0 %v34
  %183 = vmatprep.subr.mxu0 0.0
  %184 = vmatpush1.msra.mxu0 %v35
  %185 = vmatprep.subr.mxu0 0.0
  %186 = vmatpush1.msra.mxu0 %v36
  %187 = vmatprep.subr.mxu0 0.0
  %188 = vmatpush1.msra.mxu0 %v37
  %189 = vmatprep.subr.mxu0 0.0
  %190 = vmatpush1.msra.mxu0 %v38
  %191 = vmatprep.subr.mxu0 0.0
  %192 = vmatpush1.msra.mxu0 %v39
  %193 = vmatprep.subr.mxu0 0.0
  %194 = vmatpush1.msra.mxu0 %v40
  %195 = vmatprep.subr.mxu0 0.0
  %196 = vmatpush1.msra.mxu0 %v41
  %197 = vmatprep.subr.mxu0 0.0
  %198 = vmatpush1.msra.mxu0 %v42
  %199 = vmatprep.subr.mxu0 0.0
  %200 = vmatpush1.msra.mxu0 %v43
  %201 = vmatprep.subr.mxu0 0.0
  %202 = vmatpush1.msra.mxu0 %v44
  %203 = vmatprep.subr.mxu0 0.0
  %204 = vmatpush1.msra.mxu0 %v45
  %205 = vmatprep.subr.mxu0 0.0
  %206 = vmatpush1.msra.mxu0 %v46
  %207 = vmatprep.subr.mxu0 0.0
  %208 = vmatpush1.msra.mxu0 %v47
  %209 = vmatprep.subr.mxu0 0.0
  %210 = vmatpush1.msra.mxu0 %v48
  %211 = vmatprep.subr.mxu0 0.0
  %212 = vmatpush1.msra.mxu0 %v49
  %213 = vmatprep.subr.mxu0 0.0
  %214 = vmatpush1.msra.mxu0 %v50
  %215 = vmatprep.subr.mxu0 0.0
  %216 = vmatpush1.msra.mxu0 %v51
  %217 = vmatprep.subr.mxu0 0.0
  %218 = vmatpush1.msra.mxu0 %v52
  %219 = vmatprep.subr.mxu0 0.0
  %220 = vmatpush1.msra.mxu0 %v53
  %221 = vmatprep.mubr.f32.mxu0 %v15
  %222 = vmatmul.mubr.f32.gmra.mrb[0].mxu0 %v14
  %v223 = vpop.f32.mrb[0].mxu0
  %v224 = vadd.f32 %v155, %v223
  %v225 = vpop.f32.mrb[0].mxu0
  %226 = vdwg.mxu0
  %227 = vmatprep.subr.mxu0 0.0
  %228 = vmatpush1.msra.mxu0 %v54
  %229 = vmatprep.subr.mxu0 0.0
  %230 = vmatpush1.msra.mxu0 %v55
  %231 = vmatprep.subr.mxu0 0.0
  %232 = vmatpush1.msra.mxu0 %v56
  %233 = vmatprep.subr.mxu0 0.0
  %234 = vmatpush1.msra.mxu0 %v57
  %235 = vmatprep.subr.mxu0 0.0
  %236 = vmatpush1.msra.mxu0 %v58
  %237 = vmatprep.subr.mxu0 0.0
  %238 = vmatpush1.msra.mxu0 %v59
  %239 = vmatprep.subr.mxu0 0.0
  %240 = vmatpush1.msra.mxu0 %v60
  %241 = vmatprep.subr.mxu0 0.0
  %242 = vmatpush1.msra.mxu0 %v61
  %243 = vmatprep.subr.mxu0 0.0
  %244 = vmatpush1.msra.mxu0 %v62
  %245 = vmatprep.subr.mxu0 0.0
  %246 = vmatpush1.msra.mxu0 %v63
  %247 = vmatprep.subr.mxu0 0.0
  %248 = vmatpush1.msra.mxu0 %v64
  %249 = vmatprep.subr.mxu0 0.0
  %250 = vmatpush1.msra.mxu0 %v65
  %251 = vmatprep.subr.mxu0 0.0
  %252 = vmatpush1.msra.mxu0 %v66
  %253 = vmatprep.subr.mxu0 0.0
  %254 = vmatpush1.msra.mxu0 %v67
  %255 = vmatprep.subr.mxu0 0.0
  %256 = vmatpush1.msra.mxu0 %v68
  %257 = vmatprep.subr.mxu0 0.0
  %258 = vmatpush1.msra.mxu0 %v69
  %259 = vmatprep.subr.mxu0 0.0
  %260 = vmatpush1.msra.mxu0 %v70
  %261 = vmatprep.subr.mxu0 0.0
  %262 = vmatpush1.msra.mxu0 %v71
  %263 = vmatprep.subr.mxu0 0.0
  %264 = vmatpush1.msra.mxu0 %v72
  %265 = vmatprep.subr.mxu0 0.0
  %266 = vmatpush1.msra.mxu0 %v73
  %267 = vmatprep.subr.mxu0 0.0
  %268 = vmatpush1.msra.mxu0 %v74
  %269 = vmatprep.subr.mxu0 0.0
  %270 = vmatpush1.msra.mxu0 %v75
  %271 = vmatprep.subr.mxu0 0.0
  %272 = vmatpush1.msra.mxu0 %v76
  %273 = vmatprep.subr.mxu0 0.0
  %274 = vmatpush1.msra.mxu0 %v77
  %275 = vmatprep.subr.mxu0 0.0
  %276 = vmatpush1.msra.mxu0 %v78
  %277 = vmatprep.subr.mxu0 0.0
  %278 = vmatpush1.msra.mxu0 %v79
  %279 = vmatprep.subr.mxu0 0.0
  %280 = vmatpush1.msra.mxu0 %v80
  %281 = vmatprep.subr.mxu0 0.0
  %282 = vmatpush1.msra.mxu0 %v81
  %283 = vmatprep.subr.mxu0 0.0
  %284 = vmatpush1.msra.mxu0 %v82
  %285 = vmatprep.subr.mxu0 0.0
  %286 = vmatpush1.msra.mxu0 %v83
  %287 = vmatprep.subr.mxu0 0.0
  %288 = vmatpush1.msra.mxu0 %v84
  %289 = vmatprep.subr.mxu0 0.0
  %290 = vmatpush1.msra.mxu0 %v85
  %291 = vmatprep.mubr.f32.mxu0 %v17
  %292 = vmatmul.mubr.f32.gmra.mrb[0].mxu0 %v16
  %v293 = vpop.f32.mrb[0].mxu0
  %v294 = vadd.f32 %v224, %v293
  %v295 = vpop.f32.mrb[0].mxu0
  %296 = vdwg.mxu0
  %297 = vmatprep.subr.mxu0 0.0
  %298 = vmatpush1.msra.mxu0 %v86
  %299 = vmatprep.subr.mxu0 0.0
  %300 = vmatpush1.msra.mxu0 %v87
  %301 = vmatprep.subr.mxu0 0.0
  %302 = vmatpush1.msra.mxu0 %v88
  %303 = vmatprep.subr.mxu0 0.0
  %304 = vmatpush1.msra.mxu0 %v89
  %305 = vmatprep.subr.mxu0 0.0
  %306 = vmatpush1.msra.mxu0 %v90
  %307 = vmatprep.subr.mxu0 0.0
  %308 = vmatpush1.msra.mxu0 %v91
  %309 = vmatprep.subr.mxu0 0.0
  %310 = vmatpush1.msra.mxu0 %v92
  %311 = vmatprep.subr.mxu0 0.0
  %312 = vmatpush1.msra.mxu0 %v93
  %313 = vmatprep.subr.mxu0 0.0
  %314 = vmatpush1.msra.mxu0 %v94
  %315 = vmatprep.subr.mxu0 0.0
  %316 = vmatpush1.msra.mxu0 %v95
  %317 = vmatprep.subr.mxu0 0.0
  %318 = vmatpush1.msra.mxu0 %v96
  %319 = vmatprep.subr.mxu0 0.0
  %320 = vmatpush1.msra.mxu0 %v97
  %321 = vmatprep.subr.mxu0 0.0
  %322 = vmatpush1.msra.mxu0 %v98
  %323 = vmatprep.subr.mxu0 0.0
  %324 = vmatpush1.msra.mxu0 %v99
  %325 = vmatprep.subr.mxu0 0.0
  %326 = vmatpush1.msra.mxu0 %v100
  %327 = vmatprep.subr.mxu0 0.0
  %328 = vmatpush1.msra.mxu0 %v101
  %329 = vmatprep.subr.mxu0 0.0
  %330 = vmatpush1.msra.mxu0 %v102
  %331 = vmatprep.subr.mxu0 0.0
  %332 = vmatpush1.msra.mxu0 %v103
  %333 = vmatprep.subr.mxu0 0.0
  %334 = vmatpush1.msra.mxu0 %v104
  %335 = vmatprep.subr.mxu0 0.0
  %336 = vmatpush1.msra.mxu0 %v105
  %337 = vmatprep.subr.mxu0 0.0
  %338 = vmatpush1.msra.mxu0 %v106
  %339 = vmatprep.subr.mxu0 0.0
  %340 = vmatpush1.msra.mxu0 %v107
  %341 = vmatprep.subr.mxu0 0.0
  %342 = vmatpush1.msra.mxu0 %v108
  %343 = vmatprep.subr.mxu0 0.0
  %344 = vmatpush1.msra.mxu0 %v109
  %345 = vmatprep.subr.mxu0 0.0
  %346 = vmatpush1.msra.mxu0 %v110
  %347 = vmatprep.subr.mxu0 0.0
  %348 = vmatpush1.msra.mxu0 %v111
  %349 = vmatprep.subr.mxu0 0.0
  %350 = vmatpush1.msra.mxu0 %v112
  %351 = vmatprep.subr.mxu0 0.0
  %352 = vmatpush1.msra.mxu0 %v113
  %353 = vmatprep.subr.mxu0 0.0
  %354 = vmatpush1.msra.mxu0 %v114
  %355 = vmatprep.subr.mxu0 0.0
  %356 = vmatpush1.msra.mxu0 %v115
  %357 = vmatprep.subr.mxu0 0.0
  %358 = vmatpush1.msra.mxu0 %v116
  %359 = vmatprep.subr.mxu0 0.0
  %360 = vmatpush1.msra.mxu0 %v117
  %361 = vmatprep.mubr.f32.mxu0 %v19
  %362 = vmatmul.mubr.f32.gmra.mrb[0].mxu0 %v18
  %v363 = vpop.f32.mrb[0].mxu0
  %v364 = vadd.f32 %v294, %v363
  %v365 = vpop.f32.mrb[0].mxu0
  %366 = vdwg.mxu0
  %367 = vmatprep.subr.mxu0 0.0
  %368 = vmatpush1.msra.mxu0 %v118
  %369 = vmatprep.subr.mxu0 0.0
  %370 = vmatpush1.msra.mxu0 %v119
  %371 = vmatprep.subr.mxu0 0.0
  %372 = vmatpush1.msra.mxu0 %v120
  %373 = vmatprep.subr.mxu0 0.0
  %374 = vmatpush1.msra.mxu0 %v121
  %375 = vmatprep.subr.mxu0 0.0
  %376 = vmatpush1.msra.mxu0 %v122
  %377 = vmatprep.subr.mxu0 0.0
  %378 = vmatpush1.msra.mxu0 %v123
  %379 = vmatprep.subr.mxu0 0.0
  %380 = vmatpush1.msra.mxu0 %v124
  %381 = vmatprep.subr.mxu0 0.0
  %382 = vmatpush1.msra.mxu0 %v125
  %383 = vmatprep.subr.mxu0 0.0
  %384 = vmatpush1.msra.mxu0 %v126
  %385 = vmatprep.subr.mxu0 0.0
  %386 = vmatpush1.msra.mxu0 %v127
  %387 = vmatprep.subr.mxu0 0.0
  %388 = vmatpush1.msra.mxu0 %v128
  %389 = vmatprep.subr.mxu0 0.0
  %390 = vmatpush1.msra.mxu0 %v129
  %391 = vmatprep.subr.mxu0 0.0
  %392 = vmatpush1.msra.mxu0 %v130
  %393 = vmatprep.subr.mxu0 0.0
  %394 = vmatpush1.msra.mxu0 %v131
  %395 = vmatprep.subr.mxu0 0.0
  %396 = vmatpush1.msra.mxu0 %v132
  %397 = vmatprep.subr.mxu0 0.0
  %398 = vmatpush1.msra.mxu0 %v133
  %399 = vmatprep.subr.mxu0 0.0
  %400 = vmatpush1.msra.mxu0 %v134
  %401 = vmatprep.subr.mxu0 0.0
  %402 = vmatpush1.msra.mxu0 %v135
  %403 = vmatprep.subr.mxu0 0.0
  %404 = vmatpush1.msra.mxu0 %v136
  %405 = vmatprep.subr.mxu0 0.0
  %406 = vmatpush1.msra.mxu0 %v137
  %407 = vmatprep.subr.mxu0 0.0
  %408 = vmatpush1.msra.mxu0 %v138
  %409 = vmatprep.subr.mxu0 0.0
  %410 = vmatpush1.msra.mxu0 %v139
  %411 = vmatprep.subr.mxu0 0.0
  %412 = vmatpush1.msra.mxu0 %v140
  %413 = vmatprep.subr.mxu0 0.0
  %414 = vmatpush1.msra.mxu0 %v141
  %415 = vmatprep.subr.mxu0 0.0
  %416 = vmatpush1.msra.mxu0 %v142
  %417 = vmatprep.subr.mxu0 0.0
  %418 = vmatpush1.msra.mxu0 %v143
  %419 = vmatprep.subr.mxu0 0.0
  %420 = vmatpush1.msra.mxu0 %v144
  %421 = vmatprep.subr.mxu0 0.0
  %422 = vmatpush1.msra.mxu0 %v145
  %423 = vmatprep.subr.mxu0 0.0
  %424 = vmatpush1.msra.mxu0 %v146
  %425 = vmatprep.subr.mxu0 0.0
  %426 = vmatpush1.msra.mxu0 %v147
  %427 = vmatprep.subr.mxu0 0.0
  %428 = vmatpush1.msra.mxu0 %v148
  %429 = vmatprep.subr.mxu0 0.0
  %430 = vmatpush1.msra.mxu0 %v149
  %431 = vmatprep.mubr.f32.mxu0 %v21
  %432 = vmatmul.mubr.f32.gmra.mrb[0].mxu0 %v20
  %v433 = vpop.f32.mrb[0].mxu0
  %v434 = vadd.f32 %v364, %v433
  %v435 = vpop.f32.mrb[0].mxu0
  %436 = vdwg.mxu0
  %437 = vst [vmem:[%s3] sm:$0xff] %v434
  // Predicated region
  $region14: #{_encoder_forward.9} parent=0 // pred_check
    _
  $region15: #{_encoder_forward.9} parent=0 // pred_check_branch
    %439 = sbr.rel (0) target = $region17
  $region16: #{_encoder_forward.9} parent=0 // pred_region
    _
  $region17: #{_encoder_forward.9} parent=0 // pred_fallthru
    _
  // Predicated region
  $region18: #{_encoder_forward.9} parent=0 // pred_check
    _
  $region19: #{_encoder_forward.9} parent=0 // pred_check_branch
    %441 = sbr.rel (0) target = $region21
  $region20: #{_encoder_forward.9} parent=0 // pred_region
    _
  $region21: #{_encoder_forward.9} parent=0 // pred_fallthru
    _

// kernel: _encoder_forward.8
$region0: #{_encoder_forward.8}
  #allocation0 [shape = 'u32[]', space=smem, size = 0x4, offset = 0x4, fixed_abs, tag = 'smem constant byte address 0x4 - core index']
  #allocation1 [shape = 'u32[144,128]{1,0:T(1,128)}', space=vmem, size = 0x12000, scoped, tag = 'internal scratch']
  %s0 = inlined_call_operand.vmem [shape: f32[8,2048], index: 0, kind: input, shape index: {}]
  %s1 = inlined_call_operand.vmem [shape: f32[2048,256], index: 1, kind: input, shape index: {}]
  %s2 = inlined_call_operand.vmem [shape: f32[1,256], index: 2, kind: input, shape index: {}]
  %s3 = inlined_call_operand.vmem [shape: f32[8,256], index: 3, kind: output, shape index: {}]
  %s4 = sld [smem:[#allocation0]]
  $region22: #{_encoder_forward.8} parent=0
    _
  %s6 = ssub.s32 1, %s4
  %s7 = scalar_select 0, %s6, %s4
  // Predicated region
  $region2: #{_encoder_forward.8} parent=0 // pred_check
    _
  $region3: #{_encoder_forward.8} parent=0 // pred_check_branch
    %9 = sbr.rel (0) target = $region5
  $region4: #{_encoder_forward.8} parent=0 // pred_region
    _
  $region5: #{_encoder_forward.8} parent=0 // pred_fallthru
    _
  // Predicated region
  $region6: #{_encoder_forward.8} parent=0 // pred_check
    _
  $region7: #{_encoder_forward.8} parent=0 // pred_check_branch
    %11 = sbr.rel (0) target = $region9
  $region8: #{_encoder_forward.8} parent=0 // pred_region
    _
  $region9: #{_encoder_forward.8} parent=0 // pred_fallthru
    _
  // Predicated region
  $region10: #{_encoder_forward.8} parent=0 // pred_check
    _
  $region11: #{_encoder_forward.8} parent=0 // pred_check_branch
    %13 = sbr.rel (0) target = $region13
  $region12: #{_encoder_forward.8} parent=0 // pred_region
    _
  $region13: #{_encoder_forward.8} parent=0 // pred_fallthru
    _
  %v14 = vld [vmem:[%s0] sm:$0xff]
  %v15 = vld [vmem:[%s0 + $0x8] sm:$0xff]
  %v16 = vld [vmem:[%s0 + $0x10] sm:$0xff]
  %v17 = vld [vmem:[%s0 + $0x18] sm:$0xff]
  %v18 = vld [vmem:[%s0 + $0x20] sm:$0xff]
  %v19 = vld [vmem:[%s0 + $0x28] sm:$0xff]
  %v20 = vld [vmem:[%s0 + $0x30] sm:$0xff]
  %v21 = vld [vmem:[%s0 + $0x38] sm:$0xff]
  %v22 = vld [vmem:[%s0 + $0x40] sm:$0xff]
  %v23 = vld [vmem:[%s0 + $0x48] sm:$0xff]
  %v24 = vld [vmem:[%s0 + $0x50] sm:$0xff]
  %v25 = vld [vmem:[%s0 + $0x58] sm:$0xff]
  %v26 = vld [vmem:[%s0 + $0x60] sm:$0xff]
  %v27 = vld [vmem:[%s0 + $0x68] sm:$0xff]
  %v28 = vld [vmem:[%s0 + $0x70] sm:$0xff]
  %v29 = vld [vmem:[%s0 + $0x78] sm:$0xff]
  %v30 = vld [vmem:[%s1] sm:$0xff]
  %v31 = vld [vmem:[%s1 + $0x8] sm:$0xff]
  %v32 = vld [vmem:[%s1 + $0x10] sm:$0xff]
  %v33 = vld [vmem:[%s1 + $0x18] sm:$0xff]
  %v34 = vld [vmem:[%s1 + $0x20] sm:$0xff]
  %v35 = vld [vmem:[%s1 + $0x28] sm:$0xff]
  %v36 = vld [vmem:[%s1 + $0x30] sm:$0xff]
  %v37 = vld [vmem:[%s1 + $0x38] sm:$0xff]
  %v38 = vld [vmem:[%s1 + $0x40] sm:$0xff]
  %v39 = vld [vmem:[%s1 + $0x48] sm:$0xff]
  %v40 = vld [vmem:[%s1 + $0x50] sm:$0xff]
  %v41 = vld [vmem:[%s1 + $0x58] sm:$0xff]
  %v42 = vld [vmem:[%s1 + $0x60] sm:$0xff]
  %v43 = vld [vmem:[%s1 + $0x68] sm:$0xff]
  %v44 = vld [vmem:[%s1 + $0x70] sm:$0xff]
  %v45 = vld [vmem:[%s1 + $0x78] sm:$0xff]
  %v46 = vld [vmem:[%s1 + $0x80] sm:$0xff]
  %v47 = vld [vmem:[%s1 + $0x88] sm:$0xff]
  %v48 = vld [vmem:[%s1 + $0x90] sm:$0xff]
  %v49 = vld [vmem:[%s1 + $0x98] sm:$0xff]
  %v50 = vld [vmem:[%s1 + $0xa0] sm:$0xff]
  %v51 = vld [vmem:[%s1 + $0xa8] sm:$0xff]
  %v52 = vld [vmem:[%s1 + $0xb0] sm:$0xff]
  %v53 = vld [vmem:[%s1 + $0xb8] sm:$0xff]
  %v54 = vld [vmem:[%s1 + $0xc0] sm:$0xff]
  %v55 = vld [vmem:[%s1 + $0xc8] sm:$0xff]
  %v56 = vld [vmem:[%s1 + $0xd0] sm:$0xff]
  %v57 = vld [vmem:[%s1 + $0xd8] sm:$0xff]
  %v58 = vld [vmem:[%s1 + $0xe0] sm:$0xff]
  %v59 = vld [vmem:[%s1 + $0xe8] sm:$0xff]
  %v60 = vld [vmem:[%s1 + $0xf0] sm:$0xff]
  %v61 = vld [vmem:[%s1 + $0xf8] sm:$0xff]
  %v62 = vld [vmem:[%s1 + $0x100] sm:$0xff]
  %v63 = vld [vmem:[%s1 + $0x108] sm:$0xff]
  %v64 = vld [vmem:[%s1 + $0x110] sm:$0xff]
  %v65 = vld [vmem:[%s1 + $0x118] sm:$0xff]
  %v66 = vld [vmem:[%s1 + $0x120] sm:$0xff]
  %v67 = vld [vmem:[%s1 + $0x128] sm:$0xff]
  %v68 = vld [vmem:[%s1 + $0x130] sm:$0xff]
  %v69 = vld [vmem:[%s1 + $0x138] sm:$0xff]
  %v70 = vld [vmem:[%s1 + $0x140] sm:$0xff]
  %v71 = vld [vmem:[%s1 + $0x148] sm:$0xff]
  %v72 = vld [vmem:[%s1 + $0x150] sm:$0xff]
  %v73 = vld [vmem:[%s1 + $0x158] sm:$0xff]
  %v74 = vld [vmem:[%s1 + $0x160] sm:$0xff]
  %v75 = vld [vmem:[%s1 + $0x168] sm:$0xff]
  %v76 = vld [vmem:[%s1 + $0x170] sm:$0xff]
  %v77 = vld [vmem:[%s1 + $0x178] sm:$0xff]
  %v78 = vld [vmem:[%s1 + $0x180] sm:$0xff]
  %v79 = vld [vmem:[%s1 + $0x188] sm:$0xff]
  %v80 = vld [vmem:[%s1 + $0x190] sm:$0xff]
  %v81 = vld [vmem:[%s1 + $0x198] sm:$0xff]
  %v82 = vld [vmem:[%s1 + $0x1a0] sm:$0xff]
  %v83 = vld [vmem:[%s1 + $0x1a8] sm:$0xff]
  %v84 = vld [vmem:[%s1 + $0x1b0] sm:$0xff]
  %v85 = vld [vmem:[%s1 + $0x1b8] sm:$0xff]
  %v86 = vld [vmem:[%s1 + $0x1c0] sm:$0xff]
  %v87 = vld [vmem:[%s1 + $0x1c8] sm:$0xff]
  %v88 = vld [vmem:[%s1 + $0x1d0] sm:$0xff]
  %v89 = vld [vmem:[%s1 + $0x1d8] sm:$0xff]
  %v90 = vld [vmem:[%s1 + $0x1e0] sm:$0xff]
  %v91 = vld [vmem:[%s1 + $0x1e8] sm:$0xff]
  %v92 = vld [vmem:[%s1 + $0x1f0] sm:$0xff]
  %v93 = vld [vmem:[%s1 + $0x1f8] sm:$0xff]
  %v94 = vld [vmem:[%s1 + $0x200] sm:$0xff]
  %v95 = vld [vmem:[%s1 + $0x208] sm:$0xff]
  %v96 = vld [vmem:[%s1 + $0x210] sm:$0xff]
  %v97 = vld [vmem:[%s1 + $0x218] sm:$0xff]
  %v98 = vld [vmem:[%s1 + $0x220] sm:$0xff]
  %v99 = vld [vmem:[%s1 + $0x228] sm:$0xff]
  %v100 = vld [vmem:[%s1 + $0x230] sm:$0xff]
  %v101 = vld [vmem:[%s1 + $0x238] sm:$0xff]
  %v102 = vld [vmem:[%s1 + $0x240] sm:$0xff]
  %v103 = vld [vmem:[%s1 + $0x248] sm:$0xff]
  %v104 = vld [vmem:[%s1 + $0x250] sm:$0xff]
  %v105 = vld [vmem:[%s1 + $0x258] sm:$0xff]
  %v106 = vld [vmem:[%s1 + $0x260] sm:$0xff]
  %v107 = vld [vmem:[%s1 + $0x268] sm:$0xff]
  %v108 = vld [vmem:[%s1 + $0x270] sm:$0xff]
  %v109 = vld [vmem:[%s1 + $0x278] sm:$0xff]
  %v110 = vld [vmem:[%s1 + $0x280] sm:$0xff]
  %v111 = vld [vmem:[%s1 + $0x288] sm:$0xff]
  %v112 = vld [vmem:[%s1 + $0x290] sm:$0xff]
  %v113 = vld [vmem:[%s1 + $0x298] sm:$0xff]
  %v114 = vld [vmem:[%s1 + $0x2a0] sm:$0xff]
  %v115 = vld [vmem:[%s1 + $0x2a8] sm:$0xff]
  %v116 = vld [vmem:[%s1 + $0x2b0] sm:$0xff]
  %v117 = vld [vmem:[%s1 + $0x2b8] sm:$0xff]
  %v118 = vld [vmem:[%s1 + $0x2c0] sm:$0xff]
  %v119 = vld [vmem:[%s1 + $0x2c8] sm:$0xff]
  %v120 = vld [vmem:[%s1 + $0x2d0] sm:$0xff]
  %v121 = vld [vmem:[%s1 + $0x2d8] sm:$0xff]
  %v122 = vld [vmem:[%s1 + $0x2e0] sm:$0xff]
  %v123 = vld [vmem:[%s1 + $0x2e8] sm:$0xff]
  %v124 = vld [vmem:[%s1 + $0x2f0] sm:$0xff]
  %v125 = vld [vmem:[%s1 + $0x2f8] sm:$0xff]
  %v126 = vld [vmem:[%s1 + $0x300] sm:$0xff]
  %v127 = vld [vmem:[%s1 + $0x308] sm:$0xff]
  %v128 = vld [vmem:[%s1 + $0x310] sm:$0xff]
  %v129 = vld [vmem:[%s1 + $0x318] sm:$0xff]
  %v130 = vld [vmem:[%s1 + $0x320] sm:$0xff]
  %v131 = vld [vmem:[%s1 + $0x328] sm:$0xff]
  %v132 = vld [vmem:[%s1 + $0x330] sm:$0xff]
  %v133 = vld [vmem:[%s1 + $0x338] sm:$0xff]
  %v134 = vld [vmem:[%s1 + $0x340] sm:$0xff]
  %v135 = vld [vmem:[%s1 + $0x348] sm:$0xff]
  %v136 = vld [vmem:[%s1 + $0x350] sm:$0xff]
  %v137 = vld [vmem:[%s1 + $0x358] sm:$0xff]
  %v138 = vld [vmem:[%s1 + $0x360] sm:$0xff]
  %v139 = vld [vmem:[%s1 + $0x368] sm:$0xff]
  %v140 = vld [vmem:[%s1 + $0x370] sm:$0xff]
  %v141 = vld [vmem:[%s1 + $0x378] sm:$0xff]
  %v142 = vld [vmem:[%s1 + $0x380] sm:$0xff]
  %v143 = vld [vmem:[%s1 + $0x388] sm:$0xff]
  %v144 = vld [vmem:[%s1 + $0x390] sm:$0xff]
  %v145 = vld [vmem:[%s1 + $0x398] sm:$0xff]
  %v146 = vld [vmem:[%s1 + $0x3a0] sm:$0xff]
  %v147 = vld [vmem:[%s1 + $0x3a8] sm:$0xff]
  %v148 = vld [vmem:[%s1 + $0x3b0] sm:$0xff]
  %v149 = vld [vmem:[%s1 + $0x3b8] sm:$0xff]
  %v150 = vld [vmem:[%s1 + $0x3c0] sm:$0xff]
  %v151 = vld [vmem:[%s1 + $0x3c8] sm:$0xff]
  %v152 = vld [vmem:[%s1 + $0x3d0] sm:$0xff]
  %v153 = vld [vmem:[%s1 + $0x3d8] sm:$0xff]
  %v154 = vld [vmem:[%s1 + $0x3e0] sm:$0xff]
  %v155 = vld [vmem:[%s1 + $0x3e8] sm:$0xff]
  %v156 = vld [vmem:[%s1 + $0x3f0] sm:$0xff]
  %v157 = vld [vmem:[%s1 + $0x3f8] sm:$0xff]
  %v158 = vld [vmem:[%s1 + $0x400] sm:$0xff]
  %v159 = vld [vmem:[%s1 + $0x408] sm:$0xff]
  %v160 = vld [vmem:[%s1 + $0x410] sm:$0xff]
  %v161 = vld [vmem:[%s1 + $0x418] sm:$0xff]
  %v162 = vld [vmem:[%s1 + $0x420] sm:$0xff]
  %v163 = vld [vmem:[%s1 + $0x428] sm:$0xff]
  %v164 = vld [vmem:[%s1 + $0x430] sm:$0xff]
  %v165 = vld [vmem:[%s1 + $0x438] sm:$0xff]
  %v166 = vld [vmem:[%s1 + $0x440] sm:$0xff]
  %v167 = vld [vmem:[%s1 + $0x448] sm:$0xff]
  %v168 = vld [vmem:[%s1 + $0x450] sm:$0xff]
  %v169 = vld [vmem:[%s1 + $0x458] sm:$0xff]
  %v170 = vld [vmem:[%s1 + $0x460] sm:$0xff]
  %v171 = vld [vmem:[%s1 + $0x468] sm:$0xff]
  %v172 = vld [vmem:[%s1 + $0x470] sm:$0xff]
  %v173 = vld [vmem:[%s1 + $0x478] sm:$0xff]
  %v174 = vld [vmem:[%s1 + $0x480] sm:$0xff]
  %v175 = vld [vmem:[%s1 + $0x488] sm:$0xff]
  %v176 = vld [vmem:[%s1 + $0x490] sm:$0xff]
  %v177 = vld [vmem:[%s1 + $0x498] sm:$0xff]
  %v178 = vld [vmem:[%s1 + $0x4a0] sm:$0xff]
  %v179 = vld [vmem:[%s1 + $0x4a8] sm:$0xff]
  %v180 = vld [vmem:[%s1 + $0x4b0] sm:$0xff]
  %v181 = vld [vmem:[%s1 + $0x4b8] sm:$0xff]
  %v182 = vld [vmem:[%s1 + $0x4c0] sm:$0xff]
  %v183 = vld [vmem:[%s1 + $0x4c8] sm:$0xff]
  %v184 = vld [vmem:[%s1 + $0x4d0] sm:$0xff]
  %v185 = vld [vmem:[%s1 + $0x4d8] sm:$0xff]
  %v186 = vld [vmem:[%s1 + $0x4e0] sm:$0xff]
  %v187 = vld [vmem:[%s1 + $0x4e8] sm:$0xff]
  %v188 = vld [vmem:[%s1 + $0x4f0] sm:$0xff]
  %v189 = vld [vmem:[%s1 + $0x4f8] sm:$0xff]
  %v190 = vld [vmem:[%s1 + $0x500] sm:$0xff]
  %v191 = vld [vmem:[%s1 + $0x508] sm:$0xff]
  %v192 = vld [vmem:[%s1 + $0x510] sm:$0xff]
  %v193 = vld [vmem:[%s1 + $0x518] sm:$0xff]
  %v194 = vld [vmem:[%s1 + $0x520] sm:$0xff]
  %v195 = vld [vmem:[%s1 + $0x528] sm:$0xff]
  %v196 = vld [vmem:[%s1 + $0x530] sm:$0xff]
  %v197 = vld [vmem:[%s1 + $0x538] sm:$0xff]
  %v198 = vld [vmem:[%s1 + $0x540] sm:$0xff]
  %v199 = vld [vmem:[%s1 + $0x548] sm:$0xff]
  %v200 = vld [vmem:[%s1 + $0x550] sm:$0xff]
  %v201 = vld [vmem:[%s1 + $0x558] sm:$0xff]
  %v202 = vld [vmem:[%s1 + $0x560] sm:$0xff]
  %v203 = vld [vmem:[%s1 + $0x568] sm:$0xff]
  %v204 = vld [vmem:[%s1 + $0x570] sm:$0xff]
  %v205 = vld [vmem:[%s1 + $0x578] sm:$0xff]
  %v206 = vld [vmem:[%s1 + $0x580] sm:$0xff]
  %v207 = vld [vmem:[%s1 + $0x588] sm:$0xff]
  %v208 = vld [vmem:[%s1 + $0x590] sm:$0xff]
  %v209 = vld [vmem:[%s1 + $0x598] sm:$0xff]
  %v210 = vld [vmem:[%s1 + $0x5a0] sm:$0xff]
  %v211 = vld [vmem:[%s1 + $0x5a8] sm:$0xff]
  %v212 = vld [vmem:[%s1 + $0x5b0] sm:$0xff]
  %v213 = vld [vmem:[%s1 + $0x5b8] sm:$0xff]
  %v214 = vld [vmem:[%s1 + $0x5c0] sm:$0xff]
  %v215 = vld [vmem:[%s1 + $0x5c8] sm:$0xff]
  %v216 = vld [vmem:[%s1 + $0x5d0] sm:$0xff]
  %v217 = vld [vmem:[%s1 + $0x5d8] sm:$0xff]
  %v218 = vld [vmem:[%s1 + $0x5e0] sm:$0xff]
  %v219 = vld [vmem:[%s1 + $0x5e8] sm:$0xff]
  %v220 = vld [vmem:[%s1 + $0x5f0] sm:$0xff]
  %v221 = vld [vmem:[%s1 + $0x5f8] sm:$0xff]
  %v222 = vld [vmem:[%s1 + $0x600] sm:$0xff]
  %v223 = vld [vmem:[%s1 + $0x608] sm:$0xff]
  %v224 = vld [vmem:[%s1 + $0x610] sm:$0xff]
  %v225 = vld [vmem:[%s1 + $0x618] sm:$0xff]
  %v226 = vld [vmem:[%s1 + $0x620] sm:$0xff]
  %v227 = vld [vmem:[%s1 + $0x628] sm:$0xff]
  %v228 = vld [vmem:[%s1 + $0x630] sm:$0xff]
  %v229 = vld [vmem:[%s1 + $0x638] sm:$0xff]
  %v230 = vld [vmem:[%s1 + $0x640] sm:$0xff]
  %v231 = vld [vmem:[%s1 + $0x648] sm:$0xff]
  %v232 = vld [vmem:[%s1 + $0x650] sm:$0xff]
  %v233 = vld [vmem:[%s1 + $0x658] sm:$0xff]
  %v234 = vld [vmem:[%s1 + $0x660] sm:$0xff]
  %v235 = vld [vmem:[%s1 + $0x668] sm:$0xff]
  %v236 = vld [vmem:[%s1 + $0x670] sm:$0xff]
  %v237 = vld [vmem:[%s1 + $0x678] sm:$0xff]
  %v238 = vld [vmem:[%s1 + $0x680] sm:$0xff]
  %v239 = vld [vmem:[%s1 + $0x688] sm:$0xff]
  %v240 = vld [vmem:[%s1 + $0x690] sm:$0xff]
  %v241 = vld [vmem:[%s1 + $0x698] sm:$0xff]
  %v242 = vld [vmem:[%s1 + $0x6a0] sm:$0xff]
  %v243 = vld [vmem:[%s1 + $0x6a8] sm:$0xff]
  %v244 = vld [vmem:[%s1 + $0x6b0] sm:$0xff]
  %v245 = vld [vmem:[%s1 + $0x6b8] sm:$0xff]
  %v246 = vld [vmem:[%s1 + $0x6c0] sm:$0xff]
  %v247 = vld [vmem:[%s1 + $0x6c8] sm:$0xff]
  %v248 = vld [vmem:[%s1 + $0x6d0] sm:$0xff]
  %v249 = vld [vmem:[%s1 + $0x6d8] sm:$0xff]
  %v250 = vld [vmem:[%s1 + $0x6e0] sm:$0xff]
  %v251 = vld [vmem:[%s1 + $0x6e8] sm:$0xff]
  %v252 = vld [vmem:[%s1 + $0x6f0] sm:$0xff]
  %v253 = vld [vmem:[%s1 + $0x6f8] sm:$0xff]
  %v254 = vld [vmem:[%s1 + $0x700] sm:$0xff]
  %v255 = vld [vmem:[%s1 + $0x708] sm:$0xff]
  %v256 = vld [vmem:[%s1 + $0x710] sm:$0xff]
  %v257 = vld [vmem:[%s1 + $0x718] sm:$0xff]
  %v258 = vld [vmem:[%s1 + $0x720] sm:$0xff]
  %v259 = vld [vmem:[%s1 + $0x728] sm:$0xff]
  %v260 = vld [vmem:[%s1 + $0x730] sm:$0xff]
  %v261 = vld [vmem:[%s1 + $0x738] sm:$0xff]
  %v262 = vld [vmem:[%s1 + $0x740] sm:$0xff]
  %v263 = vld [vmem:[%s1 + $0x748] sm:$0xff]
  %v264 = vld [vmem:[%s1 + $0x750] sm:$0xff]
  %v265 = vld [vmem:[%s1 + $0x758] sm:$0xff]
  %v266 = vld [vmem:[%s1 + $0x760] sm:$0xff]
  %v267 = vld [vmem:[%s1 + $0x768] sm:$0xff]
  %v268 = vld [vmem:[%s1 + $0x770] sm:$0xff]
  %v269 = vld [vmem:[%s1 + $0x778] sm:$0xff]
  %v270 = vld [vmem:[%s1 + $0x780] sm:$0xff]
  %v271 = vld [vmem:[%s1 + $0x788] sm:$0xff]
  %v272 = vld [vmem:[%s1 + $0x790] sm:$0xff]
  %v273 = vld [vmem:[%s1 + $0x798] sm:$0xff]
  %v274 = vld [vmem:[%s1 + $0x7a0] sm:$0xff]
  %v275 = vld [vmem:[%s1 + $0x7a8] sm:$0xff]
  %v276 = vld [vmem:[%s1 + $0x7b0] sm:$0xff]
  %v277 = vld [vmem:[%s1 + $0x7b8] sm:$0xff]
  %v278 = vld [vmem:[%s1 + $0x7c0] sm:$0xff]
  %v279 = vld [vmem:[%s1 + $0x7c8] sm:$0xff]
  %v280 = vld [vmem:[%s1 + $0x7d0] sm:$0xff]
  %v281 = vld [vmem:[%s1 + $0x7d8] sm:$0xff]
  %v282 = vld [vmem:[%s1 + $0x7e0] sm:$0xff]
  %v283 = vld [vmem:[%s1 + $0x7e8] sm:$0xff]
  %v284 = vld [vmem:[%s1 + $0x7f0] sm:$0xff]
  %v285 = vld [vmem:[%s1 + $0x7f8] sm:$0xff]
  %v286 = vld [vmem:[%s1 + $0x800] sm:$0xff]
  %v287 = vld [vmem:[%s1 + $0x808] sm:$0xff]
  %v288 = vld [vmem:[%s1 + $0x810] sm:$0xff]
  %v289 = vld [vmem:[%s1 + $0x818] sm:$0xff]
  %v290 = vld [vmem:[%s1 + $0x820] sm:$0xff]
  %v291 = vld [vmem:[%s1 + $0x828] sm:$0xff]
  %v292 = vld [vmem:[%s1 + $0x830] sm:$0xff]
  %v293 = vld [vmem:[%s1 + $0x838] sm:$0xff]
  %v294 = vld [vmem:[%s1 + $0x840] sm:$0xff]
  %v295 = vld [vmem:[%s1 + $0x848] sm:$0xff]
  %v296 = vld [vmem:[%s1 + $0x850] sm:$0xff]
  %v297 = vld [vmem:[%s1 + $0x858] sm:$0xff]
  %v298 = vld [vmem:[%s1 + $0x860] sm:$0xff]
  %v299 = vld [vmem:[%s1 + $0x868] sm:$0xff]
  %v300 = vld [vmem:[%s1 + $0x870] sm:$0xff]
  %v301 = vld [vmem:[%s1 + $0x878] sm:$0xff]
  %v302 = vld [vmem:[%s1 + $0x880] sm:$0xff]
  %v303 = vld [vmem:[%s1 + $0x888] sm:$0xff]
  %v304 = vld [vmem:[%s1 + $0x890] sm:$0xff]
  %v305 = vld [vmem:[%s1 + $0x898] sm:$0xff]
  %v306 = vld [vmem:[%s1 + $0x8a0] sm:$0xff]
  %v307 = vld [vmem:[%s1 + $0x8a8] sm:$0xff]
  %v308 = vld [vmem:[%s1 + $0x8b0] sm:$0xff]
  %v309 = vld [vmem:[%s1 + $0x8b8] sm:$0xff]
  %v310 = vld [vmem:[%s1 + $0x8c0] sm:$0xff]
  %v311 = vld [vmem:[%s1 + $0x8c8] sm:$0xff]
  %v312 = vld [vmem:[%s1 + $0x8d0] sm:$0xff]
  %v313 = vld [vmem:[%s1 + $0x8d8] sm:$0xff]
  %v314 = vld [vmem:[%s1 + $0x8e0] sm:$0xff]
  %v315 = vld [vmem:[%s1 + $0x8e8] sm:$0xff]
  %v316 = vld [vmem:[%s1 + $0x8f0] sm:$0xff]
  %v317 = vld [vmem:[%s1 + $0x8f8] sm:$0xff]
  %v318 = vld [vmem:[%s1 + $0x900] sm:$0xff]
  %v319 = vld [vmem:[%s1 + $0x908] sm:$0xff]
  %v320 = vld [vmem:[%s1 + $0x910] sm:$0xff]
  %v321 = vld [vmem:[%s1 + $0x918] sm:$0xff]
  %v322 = vld [vmem:[%s1 + $0x920] sm:$0xff]
  %v323 = vld [vmem:[%s1 + $0x928] sm:$0xff]
  %v324 = vld [vmem:[%s1 + $0x930] sm:$0xff]
  %v325 = vld [vmem:[%s1 + $0x938] sm:$0xff]
  %v326 = vld [vmem:[%s1 + $0x940] sm:$0xff]
  %v327 = vld [vmem:[%s1 + $0x948] sm:$0xff]
  %v328 = vld [vmem:[%s1 + $0x950] sm:$0xff]
  %v329 = vld [vmem:[%s1 + $0x958] sm:$0xff]
  %v330 = vld [vmem:[%s1 + $0x960] sm:$0xff]
  %v331 = vld [vmem:[%s1 + $0x968] sm:$0xff]
  %v332 = vld [vmem:[%s1 + $0x970] sm:$0xff]
  %v333 = vld [vmem:[%s1 + $0x978] sm:$0xff]
  %v334 = vld [vmem:[%s1 + $0x980] sm:$0xff]
  %v335 = vld [vmem:[%s1 + $0x988] sm:$0xff]
  %v336 = vld [vmem:[%s1 + $0x990] sm:$0xff]
  %v337 = vld [vmem:[%s1 + $0x998] sm:$0xff]
  %v338 = vld [vmem:[%s1 + $0x9a0] sm:$0xff]
  %v339 = vld [vmem:[%s1 + $0x9a8] sm:$0xff]
  %v340 = vld [vmem:[%s1 + $0x9b0] sm:$0xff]
  %v341 = vld [vmem:[%s1 + $0x9b8] sm:$0xff]
  %v342 = vld [vmem:[%s1 + $0x9c0] sm:$0xff]
  %v343 = vld [vmem:[%s1 + $0x9c8] sm:$0xff]
  %v344 = vld [vmem:[%s1 + $0x9d0] sm:$0xff]
  %v345 = vld [vmem:[%s1 + $0x9d8] sm:$0xff]
  %v346 = vld [vmem:[%s1 + $0x9e0] sm:$0xff]
  %v347 = vld [vmem:[%s1 + $0x9e8] sm:$0xff]
  %v348 = vld [vmem:[%s1 + $0x9f0] sm:$0xff]
  %v349 = vld [vmem:[%s1 + $0x9f8] sm:$0xff]
  %v350 = vld [vmem:[%s1 + $0xa00] sm:$0xff]
  %v351 = vld [vmem:[%s1 + $0xa08] sm:$0xff]
  %v352 = vld [vmem:[%s1 + $0xa10] sm:$0xff]
  %v353 = vld [vmem:[%s1 + $0xa18] sm:$0xff]
  %v354 = vld [vmem:[%s1 + $0xa20] sm:$0xff]
  %v355 = vld [vmem:[%s1 + $0xa28] sm:$0xff]
  %v356 = vld [vmem:[%s1 + $0xa30] sm:$0xff]
  %v357 = vld [vmem:[%s1 + $0xa38] sm:$0xff]
  %v358 = vld [vmem:[%s1 + $0xa40] sm:$0xff]
  %v359 = vld [vmem:[%s1 + $0xa48] sm:$0xff]
  %v360 = vld [vmem:[%s1 + $0xa50] sm:$0xff]
  %v361 = vld [vmem:[%s1 + $0xa58] sm:$0xff]
  %v362 = vld [vmem:[%s1 + $0xa60] sm:$0xff]
  %v363 = vld [vmem:[%s1 + $0xa68] sm:$0xff]
  %v364 = vld [vmem:[%s1 + $0xa70] sm:$0xff]
  %v365 = vld [vmem:[%s1 + $0xa78] sm:$0xff]
  %v366 = vld [vmem:[%s1 + $0xa80] sm:$0xff]
  %v367 = vld [vmem:[%s1 + $0xa88] sm:$0xff]
  %v368 = vld [vmem:[%s1 + $0xa90] sm:$0xff]
  %v369 = vld [vmem:[%s1 + $0xa98] sm:$0xff]
  %v370 = vld [vmem:[%s1 + $0xaa0] sm:$0xff]
  %v371 = vld [vmem:[%s1 + $0xaa8] sm:$0xff]
  %v372 = vld [vmem:[%s1 + $0xab0] sm:$0xff]
  %v373 = vld [vmem:[%s1 + $0xab8] sm:$0xff]
  %v374 = vld [vmem:[%s1 + $0xac0] sm:$0xff]
  %v375 = vld [vmem:[%s1 + $0xac8] sm:$0xff]
  %v376 = vld [vmem:[%s1 + $0xad0] sm:$0xff]
  %v377 = vld [vmem:[%s1 + $0xad8] sm:$0xff]
  %v378 = vld [vmem:[%s1 + $0xae0] sm:$0xff]
  %v379 = vld [vmem:[%s1 + $0xae8] sm:$0xff]
  %v380 = vld [vmem:[%s1 + $0xaf0] sm:$0xff]
  %v381 = vld [vmem:[%s1 + $0xaf8] sm:$0xff]
  %v382 = vld [vmem:[%s1 + $0xb00] sm:$0xff]
  %v383 = vld [vmem:[%s1 + $0xb08] sm:$0xff]
  %v384 = vld [vmem:[%s1 + $0xb10] sm:$0xff]
  %v385 = vld [vmem:[%s1 + $0xb18] sm:$0xff]
  %v386 = vld [vmem:[%s1 + $0xb20] sm:$0xff]
  %v387 = vld [vmem:[%s1 + $0xb28] sm:$0xff]
  %v388 = vld [vmem:[%s1 + $0xb30] sm:$0xff]
  %v389 = vld [vmem:[%s1 + $0xb38] sm:$0xff]
  %v390 = vld [vmem:[%s1 + $0xb40] sm:$0xff]
  %v391 = vld [vmem:[%s1 + $0xb48] sm:$0xff]
  %v392 = vld [vmem:[%s1 + $0xb50] sm:$0xff]
  %v393 = vld [vmem:[%s1 + $0xb58] sm:$0xff]
  %v394 = vld [vmem:[%s1 + $0xb60] sm:$0xff]
  %v395 = vld [vmem:[%s1 + $0xb68] sm:$0xff]
  %v396 = vld [vmem:[%s1 + $0xb70] sm:$0xff]
  %v397 = vld [vmem:[%s1 + $0xb78] sm:$0xff]
  %v398 = vld [vmem:[%s1 + $0xb80] sm:$0xff]
  %v399 = vld [vmem:[%s1 + $0xb88] sm:$0xff]
  %v400 = vld [vmem:[%s1 + $0xb90] sm:$0xff]
  %v401 = vld [vmem:[%s1 + $0xb98] sm:$0xff]
  %v402 = vld [vmem:[%s1 + $0xba0] sm:$0xff]
  %v403 = vld [vmem:[%s1 + $0xba8] sm:$0xff]
  %v404 = vld [vmem:[%s1 + $0xbb0] sm:$0xff]
  %v405 = vld [vmem:[%s1 + $0xbb8] sm:$0xff]
  %v406 = vld [vmem:[%s1 + $0xbc0] sm:$0xff]
  %v407 = vld [vmem:[%s1 + $0xbc8] sm:$0xff]
  %v408 = vld [vmem:[%s1 + $0xbd0] sm:$0xff]
  %v409 = vld [vmem:[%s1 + $0xbd8] sm:$0xff]
  %v410 = vld [vmem:[%s1 + $0xbe0] sm:$0xff]
  %v411 = vld [vmem:[%s1 + $0xbe8] sm:$0xff]
  %v412 = vld [vmem:[%s1 + $0xbf0] sm:$0xff]
  %v413 = vld [vmem:[%s1 + $0xbf8] sm:$0xff]
  %v414 = vld [vmem:[%s1 + $0xc00] sm:$0xff]
  %v415 = vld [vmem:[%s1 + $0xc08] sm:$0xff]
  %v416 = vld [vmem:[%s1 + $0xc10] sm:$0xff]
  %v417 = vld [vmem:[%s1 + $0xc18] sm:$0xff]
  %v418 = vld [vmem:[%s1 + $0xc20] sm:$0xff]
  %v419 = vld [vmem:[%s1 + $0xc28] sm:$0xff]
  %v420 = vld [vmem:[%s1 + $0xc30] sm:$0xff]
  %v421 = vld [vmem:[%s1 + $0xc38] sm:$0xff]
  %v422 = vld [vmem:[%s1 + $0xc40] sm:$0xff]
  %v423 = vld [vmem:[%s1 + $0xc48] sm:$0xff]
  %v424 = vld [vmem:[%s1 + $0xc50] sm:$0xff]
  %v425 = vld [vmem:[%s1 + $0xc58] sm:$0xff]
  %v426 = vld [vmem:[%s1 + $0xc60] sm:$0xff]
  %v427 = vld [vmem:[%s1 + $0xc68] sm:$0xff]
  %v428 = vld [vmem:[%s1 + $0xc70] sm:$0xff]
  %v429 = vld [vmem:[%s1 + $0xc78] sm:$0xff]
  %v430 = vld [vmem:[%s1 + $0xc80] sm:$0xff]
  %v431 = vld [vmem:[%s1 + $0xc88] sm:$0xff]
  %v432 = vld [vmem:[%s1 + $0xc90] sm:$0xff]
  %v433 = vld [vmem:[%s1 + $0xc98] sm:$0xff]
  %v434 = vld [vmem:[%s1 + $0xca0] sm:$0xff]
  %v435 = vld [vmem:[%s1 + $0xca8] sm:$0xff]
  %v436 = vld [vmem:[%s1 + $0xcb0] sm:$0xff]
  %v437 = vld [vmem:[%s1 + $0xcb8] sm:$0xff]
  %v438 = vld [vmem:[%s1 + $0xcc0] sm:$0xff]
  %v439 = vld [vmem:[%s1 + $0xcc8] sm:$0xff]
  %v440 = vld [vmem:[%s1 + $0xcd0] sm:$0xff]
  %v441 = vld [vmem:[%s1 + $0xcd8] sm:$0xff]
  %v442 = vld [vmem:[%s1 + $0xce0] sm:$0xff]
  %v443 = vld [vmem:[%s1 + $0xce8] sm:$0xff]
  %v444 = vld [vmem:[%s1 + $0xcf0] sm:$0xff]
  %v445 = vld [vmem:[%s1 + $0xcf8] sm:$0xff]
  %v446 = vld [vmem:[%s1 + $0xd00] sm:$0xff]
  %v447 = vld [vmem:[%s1 + $0xd08] sm:$0xff]
  %v448 = vld [vmem:[%s1 + $0xd10] sm:$0xff]
  %v449 = vld [vmem:[%s1 + $0xd18] sm:$0xff]
  %v450 = vld [vmem:[%s1 + $0xd20] sm:$0xff]
  %v451 = vld [vmem:[%s1 + $0xd28] sm:$0xff]
  %v452 = vld [vmem:[%s1 + $0xd30] sm:$0xff]
  %v453 = vld [vmem:[%s1 + $0xd38] sm:$0xff]
  %v454 = vld [vmem:[%s1 + $0xd40] sm:$0xff]
  %v455 = vld [vmem:[%s1 + $0xd48] sm:$0xff]
  %v456 = vld [vmem:[%s1 + $0xd50] sm:$0xff]
  %v457 = vld [vmem:[%s1 + $0xd58] sm:$0xff]
  %v458 = vld [vmem:[%s1 + $0xd60] sm:$0xff]
  %v459 = vld [vmem:[%s1 + $0xd68] sm:$0xff]
  %v460 = vld [vmem:[%s1 + $0xd70] sm:$0xff]
  %v461 = vld [vmem:[%s1 + $0xd78] sm:$0xff]
  %v462 = vld [vmem:[%s1 + $0xd80] sm:$0xff]
  %v463 = vld [vmem:[%s1 + $0xd88] sm:$0xff]
  %v464 = vld [vmem:[%s1 + $0xd90] sm:$0xff]
  %v465 = vld [vmem:[%s1 + $0xd98] sm:$0xff]
  %v466 = vld [vmem:[%s1 + $0xda0] sm:$0xff]
  %v467 = vld [vmem:[%s1 + $0xda8] sm:$0xff]
  %v468 = vld [vmem:[%s1 + $0xdb0] sm:$0xff]
  %v469 = vld [vmem:[%s1 + $0xdb8] sm:$0xff]
  %v470 = vld [vmem:[%s1 + $0xdc0] sm:$0xff]
  %v471 = vld [vmem:[%s1 + $0xdc8] sm:$0xff]
  %v472 = vld [vmem:[%s1 + $0xdd0] sm:$0xff]
  %v473 = vld [vmem:[%s1 + $0xdd8] sm:$0xff]
  %v474 = vld [vmem:[%s1 + $0xde0] sm:$0xff]
  %v475 = vld [vmem:[%s1 + $0xde8] sm:$0xff]
  %v476 = vld [vmem:[%s1 + $0xdf0] sm:$0xff]
  %v477 = vld [vmem:[%s1 + $0xdf8] sm:$0xff]
  %v478 = vld [vmem:[%s1 + $0xe00] sm:$0xff]
  %v479 = vld [vmem:[%s1 + $0xe08] sm:$0xff]
  %v480 = vld [vmem:[%s1 + $0xe10] sm:$0xff]
  %v481 = vld [vmem:[%s1 + $0xe18] sm:$0xff]
  %v482 = vld [vmem:[%s1 + $0xe20] sm:$0xff]
  %v483 = vld [vmem:[%s1 + $0xe28] sm:$0xff]
  %v484 = vld [vmem:[%s1 + $0xe30] sm:$0xff]
  %v485 = vld [vmem:[%s1 + $0xe38] sm:$0xff]
  %v486 = vld [vmem:[%s1 + $0xe40] sm:$0xff]
  %v487 = vld [vmem:[%s1 + $0xe48] sm:$0xff]
  %v488 = vld [vmem:[%s1 + $0xe50] sm:$0xff]
  %v489 = vld [vmem:[%s1 + $0xe58] sm:$0xff]
  %v490 = vld [vmem:[%s1 + $0xe60] sm:$0xff]
  %v491 = vld [vmem:[%s1 + $0xe68] sm:$0xff]
  %v492 = vld [vmem:[%s1 + $0xe70] sm:$0xff]
  %v493 = vld [vmem:[%s1 + $0xe78] sm:$0xff]
  %v494 = vld [vmem:[%s1 + $0xe80] sm:$0xff]
  %v495 = vld [vmem:[%s1 + $0xe88] sm:$0xff]
  %v496 = vld [vmem:[%s1 + $0xe90] sm:$0xff]
  %v497 = vld [vmem:[%s1 + $0xe98] sm:$0xff]
  %v498 = vld [vmem:[%s1 + $0xea0] sm:$0xff]
  %v499 = vld [vmem:[%s1 + $0xea8] sm:$0xff]
  %v500 = vld [vmem:[%s1 + $0xeb0] sm:$0xff]
  %v501 = vld [vmem:[%s1 + $0xeb8] sm:$0xff]
  %v502 = vld [vmem:[%s1 + $0xec0] sm:$0xff]
  %v503 = vld [vmem:[%s1 + $0xec8] sm:$0xff]
  %v504 = vld [vmem:[%s1 + $0xed0] sm:$0xff]
  %v505 = vld [vmem:[%s1 + $0xed8] sm:$0xff]
  %v506 = vld [vmem:[%s1 + $0xee0] sm:$0xff]
  %v507 = vld [vmem:[%s1 + $0xee8] sm:$0xff]
  %v508 = vld [vmem:[%s1 + $0xef0] sm:$0xff]
  %v509 = vld [vmem:[%s1 + $0xef8] sm:$0xff]
  %v510 = vld [vmem:[%s1 + $0xf00] sm:$0xff]
  %v511 = vld [vmem:[%s1 + $0xf08] sm:$0xff]
  %v512 = vld [vmem:[%s1 + $0xf10] sm:$0xff]
  %v513 = vld [vmem:[%s1 + $0xf18] sm:$0xff]
  %v514 = vld [vmem:[%s1 + $0xf20] sm:$0xff]
  %v515 = vld [vmem:[%s1 + $0xf28] sm:$0xff]
  %v516 = vld [vmem:[%s1 + $0xf30] sm:$0xff]
  %v517 = vld [vmem:[%s1 + $0xf38] sm:$0xff]
  %v518 = vld [vmem:[%s1 + $0xf40] sm:$0xff]
  %v519 = vld [vmem:[%s1 + $0xf48] sm:$0xff]
  %v520 = vld [vmem:[%s1 + $0xf50] sm:$0xff]
  %v521 = vld [vmem:[%s1 + $0xf58] sm:$0xff]
  %v522 = vld [vmem:[%s1 + $0xf60] sm:$0xff]
  %v523 = vld [vmem:[%s1 + $0xf68] sm:$0xff]
  %v524 = vld [vmem:[%s1 + $0xf70] sm:$0xff]
  %v525 = vld [vmem:[%s1 + $0xf78] sm:$0xff]
  %v526 = vld [vmem:[%s1 + $0xf80] sm:$0xff]
  %v527 = vld [vmem:[%s1 + $0xf88] sm:$0xff]
  %v528 = vld [vmem:[%s1 + $0xf90] sm:$0xff]
  %v529 = vld [vmem:[%s1 + $0xf98] sm:$0xff]
  %v530 = vld [vmem:[%s1 + $0xfa0] sm:$0xff]
  %v531 = vld [vmem:[%s1 + $0xfa8] sm:$0xff]
  %v532 = vld [vmem:[%s1 + $0xfb0] sm:$0xff]
  %v533 = vld [vmem:[%s1 + $0xfb8] sm:$0xff]
  %v534 = vld [vmem:[%s1 + $0xfc0] sm:$0xff]
  %v535 = vld [vmem:[%s1 + $0xfc8] sm:$0xff]
  %v536 = vld [vmem:[%s1 + $0xfd0] sm:$0xff]
  %v537 = vld [vmem:[%s1 + $0xfd8] sm:$0xff]
  %v538 = vld [vmem:[%s1 + $0xfe0] sm:$0xff]
  %v539 = vld [vmem:[%s1 + $0xfe8] sm:$0xff]
  %v540 = vld [vmem:[%s1 + $0xff0] sm:$0xff]
  %v541 = vld [vmem:[%s1 + $0xff8] sm:$0xff]
  %v542 = vld [vmem:[%s2] sm:$0x3]
  %v544 = vlaneseq
  %v545 = vshrl.u32 %v544, 7
  %v546 = vsub.s32 0, %v545
  %v547 = vrot.slane %v542, %v546
  %v548 = vlaneseq
  %v549 = vshrl.u32 %v548, 7
  %v550 = vsub.s32 1, %v549
  %v551 = vrot.slane %v542, %v550
  %554 = vmatprep.subr.mxu0 %v31
  %555 = vmatpush1.msra.mxu0 %v30
  %556 = vmatprep.subr.mxu0 %v33
  %557 = vmatpush1.msra.mxu0 %v32
  %558 = vmatprep.subr.mxu0 %v35
  %559 = vmatpush1.msra.mxu0 %v34
  %560 = vmatprep.subr.mxu0 %v37
  %561 = vmatpush1.msra.mxu0 %v36
  %562 = vmatprep.subr.mxu0 %v39
  %563 = vmatpush1.msra.mxu0 %v38
  %564 = vmatprep.subr.mxu0 %v41
  %565 = vmatpush1.msra.mxu0 %v40
  %566 = vmatprep.subr.mxu0 %v43
  %567 = vmatpush1.msra.mxu0 %v42
  %568 = vmatprep.subr.mxu0 %v45
  %569 = vmatpush1.msra.mxu0 %v44
  %570 = vmatprep.subr.mxu0 %v47
  %571 = vmatpush1.msra.mxu0 %v46
  %572 = vmatprep.subr.mxu0 %v49
  %573 = vmatpush1.msra.mxu0 %v48
  %574 = vmatprep.subr.mxu0 %v51
  %575 = vmatpush1.msra.mxu0 %v50
  %576 = vmatprep.subr.mxu0 %v53
  %577 = vmatpush1.msra.mxu0 %v52
  %578 = vmatprep.subr.mxu0 %v55
  %579 = vmatpush1.msra.mxu0 %v54
  %580 = vmatprep.subr.mxu0 %v57
  %581 = vmatpush1.msra.mxu0 %v56
  %582 = vmatprep.subr.mxu0 %v59
  %583 = vmatpush1.msra.mxu0 %v58
  %584 = vmatprep.subr.mxu0 %v61
  %585 = vmatpush1.msra.mxu0 %v60
  %586 = vmatprep.subr.mxu0 %v63
  %587 = vmatpush1.msra.mxu0 %v62
  %588 = vmatprep.subr.mxu0 %v65
  %589 = vmatpush1.msra.mxu0 %v64
  %590 = vmatprep.subr.mxu0 %v67
  %591 = vmatpush1.msra.mxu0 %v66
  %592 = vmatprep.subr.mxu0 %v69
  %593 = vmatpush1.msra.mxu0 %v68
  %594 = vmatprep.subr.mxu0 %v71
  %595 = vmatpush1.msra.mxu0 %v70
  %596 = vmatprep.subr.mxu0 %v73
  %597 = vmatpush1.msra.mxu0 %v72
  %598 = vmatprep.subr.mxu0 %v75
  %599 = vmatpush1.msra.mxu0 %v74
  %600 = vmatprep.subr.mxu0 %v77
  %601 = vmatpush1.msra.mxu0 %v76
  %602 = vmatprep.subr.mxu0 %v79
  %603 = vmatpush1.msra.mxu0 %v78
  %604 = vmatprep.subr.mxu0 %v81
  %605 = vmatpush1.msra.mxu0 %v80
  %606 = vmatprep.subr.mxu0 %v83
  %607 = vmatpush1.msra.mxu0 %v82
  %608 = vmatprep.subr.mxu0 %v85
  %609 = vmatpush1.msra.mxu0 %v84
  %610 = vmatprep.subr.mxu0 %v87
  %611 = vmatpush1.msra.mxu0 %v86
  %612 = vmatprep.subr.mxu0 %v89
  %613 = vmatpush1.msra.mxu0 %v88
  %614 = vmatprep.subr.mxu0 %v91
  %615 = vmatpush1.msra.mxu0 %v90
  %616 = vmatprep.subr.mxu0 %v93
  %617 = vmatpush1.msra.mxu0 %v92
  %618 = vmatprep.mubr.f32.mxu0 %v15
  %619 = vmatmul.mubr.f32.gmra.mrb[0].mxu0 %v14
  %v620 = vpop.f32.mrb[0].mxu0
  %v621 = vadd.f32 %v547, %v620
  %v622 = vpop.f32.mrb[0].mxu0
  %v623 = vadd.f32 %v551, %v622
  %624 = vdwg.mxu0
  %625 = vmatprep.subr.mxu0 %v95
  %626 = vmatpush1.msra.mxu0 %v94
  %627 = vmatprep.subr.mxu0 %v97
  %628 = vmatpush1.msra.mxu0 %v96
  %629 = vmatprep.subr.mxu0 %v99
  %630 = vmatpush1.msra.mxu0 %v98
  %631 = vmatprep.subr.mxu0 %v101
  %632 = vmatpush1.msra.mxu0 %v100
  %633 = vmatprep.subr.mxu0 %v103
  %634 = vmatpush1.msra.mxu0 %v102
  %635 = vmatprep.subr.mxu0 %v105
  %636 = vmatpush1.msra.mxu0 %v104
  %637 = vmatprep.subr.mxu0 %v107
  %638 = vmatpush1.msra.mxu0 %v106
  %639 = vmatprep.subr.mxu0 %v109
  %640 = vmatpush1.msra.mxu0 %v108
  %641 = vmatprep.subr.mxu0 %v111
  %642 = vmatpush1.msra.mxu0 %v110
  %643 = vmatprep.subr.mxu0 %v113
  %644 = vmatpush1.msra.mxu0 %v112
  %645 = vmatprep.subr.mxu0 %v115
  %646 = vmatpush1.msra.mxu0 %v114
  %647 = vmatprep.subr.mxu0 %v117
  %648 = vmatpush1.msra.mxu0 %v116
  %649 = vmatprep.subr.mxu0 %v119
  %650 = vmatpush1.msra.mxu0 %v118
  %651 = vmatprep.subr.mxu0 %v121
  %652 = vmatpush1.msra.mxu0 %v120
  %653 = vmatprep.subr.mxu0 %v123
  %654 = vmatpush1.msra.mxu0 %v122
  %655 = vmatprep.subr.mxu0 %v125
  %656 = vmatpush1.msra.mxu0 %v124
  %657 = vmatprep.subr.mxu0 %v127
  %658 = vmatpush1.msra.mxu0 %v126
  %659 = vmatprep.subr.mxu0 %v129
  %660 = vmatpush1.msra.mxu0 %v128
  %661 = vmatprep.subr.mxu0 %v131
  %662 = vmatpush1.msra.mxu0 %v130
  %663 = vmatprep.subr.mxu0 %v133
  %664 = vmatpush1.msra.mxu0 %v132
  %665 = vmatprep.subr.mxu0 %v135
  %666 = vmatpush1.msra.mxu0 %v134
  %667 = vmatprep.subr.mxu0 %v137
  %668 = vmatpush1.msra.mxu0 %v136
  %669 = vmatprep.subr.mxu0 %v139
  %670 = vmatpush1.msra.mxu0 %v138
  %671 = vmatprep.subr.mxu0 %v141
  %672 = vmatpush1.msra.mxu0 %v140
  %673 = vmatprep.subr.mxu0 %v143
  %674 = vmatpush1.msra.mxu0 %v142
  %675 = vmatprep.subr.mxu0 %v145
  %676 = vmatpush1.msra.mxu0 %v144
  %677 = vmatprep.subr.mxu0 %v147
  %678 = vmatpush1.msra.mxu0 %v146
  %679 = vmatprep.subr.mxu0 %v149
  %680 = vmatpush1.msra.mxu0 %v148
  %681 = vmatprep.subr.mxu0 %v151
  %682 = vmatpush1.msra.mxu0 %v150
  %683 = vmatprep.subr.mxu0 %v153
  %684 = vmatpush1.msra.mxu0 %v152
  %685 = vmatprep.subr.mxu0 %v155
  %686 = vmatpush1.msra.mxu0 %v154
  %687 = vmatprep.subr.mxu0 %v157
  %688 = vmatpush1.msra.mxu0 %v156
  %689 = vmatprep.mubr.f32.mxu0 %v17
  %690 = vmatmul.mubr.f32.gmra.mrb[0].mxu0 %v16
  %v691 = vpop.f32.mrb[0].mxu0
  %v692 = vadd.f32 %v621, %v691
  %v693 = vpop.f32.mrb[0].mxu0
  %v694 = vadd.f32 %v623, %v693
  %695 = vdwg.mxu0
  %696 = vmatprep.subr.mxu0 %v159
  %697 = vmatpush1.msra.mxu0 %v158
  %698 = vmatprep.subr.mxu0 %v161
  %699 = vmatpush1.msra.mxu0 %v160
  %700 = vmatprep.subr.mxu0 %v163
  %701 = vmatpush1.msra.mxu0 %v162
  %702 = vmatprep.subr.mxu0 %v165
  %703 = vmatpush1.msra.mxu0 %v164
  %704 = vmatprep.subr.mxu0 %v167
  %705 = vmatpush1.msra.mxu0 %v166
  %706 = vmatprep.subr.mxu0 %v169
  %707 = vmatpush1.msra.mxu0 %v168
  %708 = vmatprep.subr.mxu0 %v171
  %709 = vmatpush1.msra.mxu0 %v170
  %710 = vmatprep.subr.mxu0 %v173
  %711 = vmatpush1.msra.mxu0 %v172
  %712 = vmatprep.subr.mxu0 %v175
  %713 = vmatpush1.msra.mxu0 %v174
  %714 = vmatprep.subr.mxu0 %v177
  %715 = vmatpush1.msra.mxu0 %v176
  %716 = vmatprep.subr.mxu0 %v179
  %717 = vmatpush1.msra.mxu0 %v178
  %718 = vmatprep.subr.mxu0 %v181
  %719 = vmatpush1.msra.mxu0 %v180
  %720 = vmatprep.subr.mxu0 %v183
  %721 = vmatpush1.msra.mxu0 %v182
  %722 = vmatprep.subr.mxu0 %v185
  %723 = vmatpush1.msra.mxu0 %v184
  %724 = vmatprep.subr.mxu0 %v187
  %725 = vmatpush1.msra.mxu0 %v186
  %726 = vmatprep.subr.mxu0 %v189
  %727 = vmatpush1.msra.mxu0 %v188
  %728 = vmatprep.subr.mxu0 %v191
  %729 = vmatpush1.msra.mxu0 %v190
  %730 = vmatprep.subr.mxu0 %v193
  %731 = vmatpush1.msra.mxu0 %v192
  %732 = vmatprep.subr.mxu0 %v195
  %733 = vmatpush1.msra.mxu0 %v194
  %734 = vmatprep.subr.mxu0 %v197
  %735 = vmatpush1.msra.mxu0 %v196
  %736 = vmatprep.subr.mxu0 %v199
  %737 = vmatpush1.msra.mxu0 %v198
  %738 = vmatprep.subr.mxu0 %v201
  %739 = vmatpush1.msra.mxu0 %v200
  %740 = vmatprep.subr.mxu0 %v203
  %741 = vmatpush1.msra.mxu0 %v202
  %742 = vmatprep.subr.mxu0 %v205
  %743 = vmatpush1.msra.mxu0 %v204
  %744 = vmatprep.subr.mxu0 %v207
  %745 = vmatpush1.msra.mxu0 %v206
  %746 = vmatprep.subr.mxu0 %v209
  %747 = vmatpush1.msra.mxu0 %v208
  %748 = vmatprep.subr.mxu0 %v211
  %749 = vmatpush1.msra.mxu0 %v210
  %750 = vmatprep.subr.mxu0 %v213
  %751 = vmatpush1.msra.mxu0 %v212
  %752 = vmatprep.subr.mxu0 %v215
  %753 = vmatpush1.msra.mxu0 %v214
  %754 = vmatprep.subr.mxu0 %v217
  %755 = vmatpush1.msra.mxu0 %v216
  %756 = vmatprep.subr.mxu0 %v219
  %757 = vmatpush1.msra.mxu0 %v218
  %758 = vmatprep.subr.mxu0 %v221
  %759 = vmatpush1.msra.mxu0 %v220
  %760 = vmatprep.mubr.f32.mxu0 %v19
  %761 = vmatmul.mubr.f32.gmra.mrb[0].mxu0 %v18
  %v762 = vpop.f32.mrb[0].mxu0
  %v763 = vadd.f32 %v692, %v762
  %v764 = vpop.f32.mrb[0].mxu0
  %v765 = vadd.f32 %v694, %v764
  %766 = vdwg.mxu0
  %767 = vmatprep.subr.mxu0 %v223
  %768 = vmatpush1.msra.mxu0 %v222
  %769 = vmatprep.subr.mxu0 %v225
  %770 = vmatpush1.msra.mxu0 %v224
  %771 = vmatprep.subr.mxu0 %v227
  %772 = vmatpush1.msra.mxu0 %v226
  %773 = vmatprep.subr.mxu0 %v229
  %774 = vmatpush1.msra.mxu0 %v228
  %775 = vmatprep.subr.mxu0 %v231
  %776 = vmatpush1.msra.mxu0 %v230
  %777 = vmatprep.subr.mxu0 %v233
  %778 = vmatpush1.msra.mxu0 %v232
  %779 = vmatprep.subr.mxu0 %v235
  %780 = vmatpush1.msra.mxu0 %v234
  %781 = vmatprep.subr.mxu0 %v237
  %782 = vmatpush1.msra.mxu0 %v236
  %783 = vmatprep.subr.mxu0 %v239
  %784 = vmatpush1.msra.mxu0 %v238
  %785 = vmatprep.subr.mxu0 %v241
  %786 = vmatpush1.msra.mxu0 %v240
  %787 = vmatprep.subr.mxu0 %v243
  %788 = vmatpush1.msra.mxu0 %v242
  %789 = vmatprep.subr.mxu0 %v245
  %790 = vmatpush1.msra.mxu0 %v244
  %791 = vmatprep.subr.mxu0 %v247
  %792 = vmatpush1.msra.mxu0 %v246
  %793 = vmatprep.subr.mxu0 %v249
  %794 = vmatpush1.msra.mxu0 %v248
  %795 = vmatprep.subr.mxu0 %v251
  %796 = vmatpush1.msra.mxu0 %v250
  %797 = vmatprep.subr.mxu0 %v253
  %798 = vmatpush1.msra.mxu0 %v252
  %799 = vmatprep.subr.mxu0 %v255
  %800 = vmatpush1.msra.mxu0 %v254
  %801 = vmatprep.subr.mxu0 %v257
  %802 = vmatpush1.msra.mxu0 %v256
  %803 = vmatprep.subr.mxu0 %v259
  %804 = vmatpush1.msra.mxu0 %v258
  %805 = vmatprep.subr.mxu0 %v261
  %806 = vmatpush1.msra.mxu0 %v260
  %807 = vmatprep.subr.mxu0 %v263
  %808 = vmatpush1.msra.mxu0 %v262
  %809 = vmatprep.subr.mxu0 %v265
  %810 = vmatpush1.msra.mxu0 %v264
  %811 = vmatprep.subr.mxu0 %v267
  %812 = vmatpush1.msra.mxu0 %v266
  %813 = vmatprep.subr.mxu0 %v269
  %814 = vmatpush1.msra.mxu0 %v268
  %815 = vmatprep.subr.mxu0 %v271
  %816 = vmatpush1.msra.mxu0 %v270
  %817 = vmatprep.subr.mxu0 %v273
  %818 = vmatpush1.msra.mxu0 %v272
  %819 = vmatprep.subr.mxu0 %v275
  %820 = vmatpush1.msra.mxu0 %v274
  %821 = vmatprep.subr.mxu0 %v277
  %822 = vmatpush1.msra.mxu0 %v276
  %823 = vmatprep.subr.mxu0 %v279
  %824 = vmatpush1.msra.mxu0 %v278
  %825 = vmatprep.subr.mxu0 %v281
  %826 = vmatpush1.msra.mxu0 %v280
  %827 = vmatprep.subr.mxu0 %v283
  %828 = vmatpush1.msra.mxu0 %v282
  %829 = vmatprep.subr.mxu0 %v285
  %830 = vmatpush1.msra.mxu0 %v284
  %831 = vmatprep.mubr.f32.mxu0 %v21
  %832 = vmatmul.mubr.f32.gmra.mrb[0].mxu0 %v20
  %v833 = vpop.f32.mrb[0].mxu0
  %v834 = vadd.f32 %v763, %v833
  %v835 = vpop.f32.mrb[0].mxu0
  %v836 = vadd.f32 %v765, %v835
  %837 = vdwg.mxu0
  %838 = vmatprep.subr.mxu0 %v287
  %839 = vmatpush1.msra.mxu0 %v286
  %840 = vmatprep.subr.mxu0 %v289
  %841 = vmatpush1.msra.mxu0 %v288
  %842 = vmatprep.subr.mxu0 %v291
  %843 = vmatpush1.msra.mxu0 %v290
  %844 = vmatprep.subr.mxu0 %v293
  %845 = vmatpush1.msra.mxu0 %v292
  %846 = vmatprep.subr.mxu0 %v295
  %847 = vmatpush1.msra.mxu0 %v294
  %848 = vmatprep.subr.mxu0 %v297
  %849 = vmatpush1.msra.mxu0 %v296
  %850 = vmatprep.subr.mxu0 %v299
  %851 = vmatpush1.msra.mxu0 %v298
  %852 = vmatprep.subr.mxu0 %v301
  %853 = vmatpush1.msra.mxu0 %v300
  %854 = vmatprep.subr.mxu0 %v303
  %855 = vmatpush1.msra.mxu0 %v302
  %856 = vmatprep.subr.mxu0 %v305
  %857 = vmatpush1.msra.mxu0 %v304
  %858 = vmatprep.subr.mxu0 %v307
  %859 = vmatpush1.msra.mxu0 %v306
  %860 = vmatprep.subr.mxu0 %v309
  %861 = vmatpush1.msra.mxu0 %v308
  %862 = vmatprep.subr.mxu0 %v311
  %863 = vmatpush1.msra.mxu0 %v310
  %864 = vmatprep.subr.mxu0 %v313
  %865 = vmatpush1.msra.mxu0 %v312
  %866 = vmatprep.subr.mxu0 %v315
  %867 = vmatpush1.msra.mxu0 %v314
  %868 = vmatprep.subr.mxu0 %v317
  %869 = vmatpush1.msra.mxu0 %v316
  %870 = vmatprep.subr.mxu0 %v319
  %871 = vmatpush1.msra.mxu0 %v318
  %872 = vmatprep.subr.mxu0 %v321
  %873 = vmatpush1.msra.mxu0 %v320
  %874 = vmatprep.subr.mxu0 %v323
  %875 = vmatpush1.msra.mxu0 %v322
  %876 = vmatprep.subr.mxu0 %v325
  %877 = vmatpush1.msra.mxu0 %v324
  %878 = vmatprep.subr.mxu0 %v327
  %879 = vmatpush1.msra.mxu0 %v326
  %880 = vmatprep.subr.mxu0 %v329
  %881 = vmatpush1.msra.mxu0 %v328
  %882 = vmatprep.subr.mxu0 %v331
  %883 = vmatpush1.msra.mxu0 %v330
  %884 = vmatprep.subr.mxu0 %v333
  %885 = vmatpush1.msra.mxu0 %v332
  %886 = vmatprep.subr.mxu0 %v335
  %887 = vmatpush1.msra.mxu0 %v334
  %888 = vmatprep.subr.mxu0 %v337
  %889 = vmatpush1.msra.mxu0 %v336
  %890 = vmatprep.subr.mxu0 %v339
  %891 = vmatpush1.msra.mxu0 %v338
  %892 = vmatprep.subr.mxu0 %v341
  %893 = vmatpush1.msra.mxu0 %v340
  %894 = vmatprep.subr.mxu0 %v343
  %895 = vmatpush1.msra.mxu0 %v342
  %896 = vmatprep.subr.mxu0 %v345
  %897 = vmatpush1.msra.mxu0 %v344
  %898 = vmatprep.subr.mxu0 %v347
  %899 = vmatpush1.msra.mxu0 %v346
  %900 = vmatprep.subr.mxu0 %v349
  %901 = vmatpush1.msra.mxu0 %v348
  %902 = vmatprep.mubr.f32.mxu0 %v23
  %903 = vmatmul.mubr.f32.gmra.mrb[0].mxu0 %v22
  %v904 = vpop.f32.mrb[0].mxu0
  %v905 = vadd.f32 %v834, %v904
  %v906 = vpop.f32.mrb[0].mxu0
  %v907 = vadd.f32 %v836, %v906
  %908 = vdwg.mxu0
  %909 = vmatprep.subr.mxu0 %v351
  %910 = vmatpush1.msra.mxu0 %v350
  %911 = vmatprep.subr.mxu0 %v353
  %912 = vmatpush1.msra.mxu0 %v352
  %913 = vmatprep.subr.mxu0 %v355
  %914 = vmatpush1.msra.mxu0 %v354
  %915 = vmatprep.subr.mxu0 %v357
  %916 = vmatpush1.msra.mxu0 %v356
  %917 = vmatprep.subr.mxu0 %v359
  %918 = vmatpush1.msra.mxu0 %v358
  %919 = vmatprep.subr.mxu0 %v361
  %920 = vmatpush1.msra.mxu0 %v360
  %921 = vmatprep.subr.mxu0 %v363
  %922 = vmatpush1.msra.mxu0 %v362
  %923 = vmatprep.subr.mxu0 %v365
  %924 = vmatpush1.msra.mxu0 %v364
  %925 = vmatprep.subr.mxu0 %v367
  %926 = vmatpush1.msra.mxu0 %v366
  %927 = vmatprep.subr.mxu0 %v369
  %928 = vmatpush1.msra.mxu0 %v368
  %929 = vmatprep.subr.mxu0 %v371
  %930 = vmatpush1.msra.mxu0 %v370
  %931 = vmatprep.subr.mxu0 %v373
  %932 = vmatpush1.msra.mxu0 %v372
  %933 = vmatprep.subr.mxu0 %v375
  %934 = vmatpush1.msra.mxu0 %v374
  %935 = vmatprep.subr.mxu0 %v377
  %936 = vmatpush1.msra.mxu0 %v376
  %937 = vmatprep.subr.mxu0 %v379
  %938 = vmatpush1.msra.mxu0 %v378
  %939 = vmatprep.subr.mxu0 %v381
  %940 = vmatpush1.msra.mxu0 %v380
  %941 = vmatprep.subr.mxu0 %v383
  %942 = vmatpush1.msra.mxu0 %v382
  %943 = vmatprep.subr.mxu0 %v385
  %944 = vmatpush1.msra.mxu0 %v384
  %945 = vmatprep.subr.mxu0 %v387
  %946 = vmatpush1.msra.mxu0 %v386
  %947 = vmatprep.subr.mxu0 %v389
  %948 = vmatpush1.msra.mxu0 %v388
  %949 = vmatprep.subr.mxu0 %v391
  %950 = vmatpush1.msra.mxu0 %v390
  %951 = vmatprep.subr.mxu0 %v393
  %952 = vmatpush1.msra.mxu0 %v392
  %953 = vmatprep.subr.mxu0 %v395
  %954 = vmatpush1.msra.mxu0 %v394
  %955 = vmatprep.subr.mxu0 %v397
  %956 = vmatpush1.msra.mxu0 %v396
  %957 = vmatprep.subr.mxu0 %v399
  %958 = vmatpush1.msra.mxu0 %v398
  %959 = vmatprep.subr.mxu0 %v401
  %960 = vmatpush1.msra.mxu0 %v400
  %961 = vmatprep.subr.mxu0 %v403
  %962 = vmatpush1.msra.mxu0 %v402
  %963 = vmatprep.subr.mxu0 %v405
  %964 = vmatpush1.msra.mxu0 %v404
  %965 = vmatprep.subr.mxu0 %v407
  %966 = vmatpush1.msra.mxu0 %v406
  %967 = vmatprep.subr.mxu0 %v409
  %968 = vmatpush1.msra.mxu0 %v408
  %969 = vmatprep.subr.mxu0 %v411
  %970 = vmatpush1.msra.mxu0 %v410
  %971 = vmatprep.subr.mxu0 %v413
  %972 = vmatpush1.msra.mxu0 %v412
  %973 = vmatprep.mubr.f32.mxu0 %v25
  %974 = vmatmul.mubr.f32.gmra.mrb[0].mxu0 %v24
  %v975 = vpop.f32.mrb[0].mxu0
  %v976 = vadd.f32 %v905, %v975
  %v977 = vpop.f32.mrb[0].mxu0
  %v978 = vadd.f32 %v907, %v977
  %979 = vdwg.mxu0
  %980 = vmatprep.subr.mxu0 %v415
  %981 = vmatpush1.msra.mxu0 %v414
  %982 = vmatprep.subr.mxu0 %v417
  %983 = vmatpush1.msra.mxu0 %v416
  %984 = vmatprep.subr.mxu0 %v419
  %985 = vmatpush1.msra.mxu0 %v418
  %986 = vmatprep.subr.mxu0 %v421
  %987 = vmatpush1.msra.mxu0 %v420
  %988 = vmatprep.subr.mxu0 %v423
  %989 = vmatpush1.msra.mxu0 %v422
  %990 = vmatprep.subr.mxu0 %v425
  %991 = vmatpush1.msra.mxu0 %v424
  %992 = vmatprep.subr.mxu0 %v427
  %993 = vmatpush1.msra.mxu0 %v426
  %994 = vmatprep.subr.mxu0 %v429
  %995 = vmatpush1.msra.mxu0 %v428
  %996 = vmatprep.subr.mxu0 %v431
  %997 = vmatpush1.msra.mxu0 %v430
  %998 = vmatprep.subr.mxu0 %v433
  %999 = vmatpush1.msra.mxu0 %v432
  %1000 = vmatprep.subr.mxu0 %v435
  %1001 = vmatpush1.msra.mxu0 %v434
  %1002 = vmatprep.subr.mxu0 %v437
  %1003 = vmatpush1.msra.mxu0 %v436
  %1004 = vmatprep.subr.mxu0 %v439
  %1005 = vmatpush1.msra.mxu0 %v438
  %1006 = vmatprep.subr.mxu0 %v441
  %1007 = vmatpush1.msra.mxu0 %v440
  %1008 = vmatprep.subr.mxu0 %v443
  %1009 = vmatpush1.msra.mxu0 %v442
  %1010 = vmatprep.subr.mxu0 %v445
  %1011 = vmatpush1.msra.mxu0 %v444
  %1012 = vmatprep.subr.mxu0 %v447
  %1013 = vmatpush1.msra.mxu0 %v446
  %1014 = vmatprep.subr.mxu0 %v449
  %1015 = vmatpush1.msra.mxu0 %v448
  %1016 = vmatprep.subr.mxu0 %v451
  %1017 = vmatpush1.msra.mxu0 %v450
  %1018 = vmatprep.subr.mxu0 %v453
  %1019 = vmatpush1.msra.mxu0 %v452
  %1020 = vmatprep.subr.mxu0 %v455
  %1021 = vmatpush1.msra.mxu0 %v454
  %1022 = vmatprep.subr.mxu0 %v457
  %1023 = vmatpush1.msra.mxu0 %v456
  %1024 = vmatprep.subr.mxu0 %v459
  %1025 = vmatpush1.msra.mxu0 %v458
  %1026 = vmatprep.subr.mxu0 %v461
  %1027 = vmatpush1.msra.mxu0 %v460
  %1028 = vmatprep.subr.mxu0 %v463
  %1029 = vmatpush1.msra.mxu0 %v462
  %1030 = vmatprep.subr.mxu0 %v465
  %1031 = vmatpush1.msra.mxu0 %v464
  %1032 = vmatprep.subr.mxu0 %v467
  %1033 = vmatpush1.msra.mxu0 %v466
  %1034 = vmatprep.subr.mxu0 %v469
  %1035 = vmatpush1.msra.mxu0 %v468
  %1036 = vmatprep.subr.mxu0 %v471
  %1037 = vmatpush1.msra.mxu0 %v470
  %1038 = vmatprep.subr.mxu0 %v473
  %1039 = vmatpush1.msra.mxu0 %v472
  %1040 = vmatprep.subr.mxu0 %v475
  %1041 = vmatpush1.msra.mxu0 %v474
  %1042 = vmatprep.subr.mxu0 %v477
  %1043 = vmatpush1.msra.mxu0 %v476
  %1044 = vmatprep.mubr.f32.mxu0 %v27
  %1045 = vmatmul.mubr.f32.gmra.mrb[0].mxu0 %v26
  %v1046 = vpop.f32.mrb[0].mxu0
  %v1047 = vadd.f32 %v976, %v1046
  %v1048 = vpop.f32.mrb[0].mxu0
  %v1049 = vadd.f32 %v978, %v1048
  %1050 = vdwg.mxu0
  %1051 = vmatprep.subr.mxu0 %v479
  %1052 = vmatpush1.msra.mxu0 %v478
  %1053 = vmatprep.subr.mxu0 %v481
  %1054 = vmatpush1.msra.mxu0 %v480
  %1055 = vmatprep.subr.mxu0 %v483
  %1056 = vmatpush1.msra.mxu0 %v482
  %1057 = vmatprep.subr.mxu0 %v485
  %1058 = vmatpush1.msra.mxu0 %v484
  %1059 = vmatprep.subr.mxu0 %v487
  %1060 = vmatpush1.msra.mxu0 %v486
  %1061 = vmatprep.subr.mxu0 %v489
  %1062 = vmatpush1.msra.mxu0 %v488
  %1063 = vmatprep.subr.mxu0 %v491
  %1064 = vmatpush1.msra.mxu0 %v490
  %1065 = vmatprep.subr.mxu0 %v493
  %1066 = vmatpush1.msra.mxu0 %v492
  %1067 = vmatprep.subr.mxu0 %v495
  %1068 = vmatpush1.msra.mxu0 %v494
  %1069 = vmatprep.subr.mxu0 %v497
  %1070 = vmatpush1.msra.mxu0 %v496
  %1071 = vmatprep.subr.mxu0 %v499
  %1072 = vmatpush1.msra.mxu0 %v498
  %1073 = vmatprep.subr.mxu0 %v501
  %1074 = vmatpush1.msra.mxu0 %v500
  %1075 = vmatprep.subr.mxu0 %v503
  %1076 = vmatpush1.msra.mxu0 %v502
  %1077 = vmatprep.subr.mxu0 %v505
  %1078 = vmatpush1.msra.mxu0 %v504
  %1079 = vmatprep.subr.mxu0 %v507
  %1080 = vmatpush1.msra.mxu0 %v506
  %1081 = vmatprep.subr.mxu0 %v509
  %1082 = vmatpush1.msra.mxu0 %v508
  %1083 = vmatprep.subr.mxu0 %v511
  %1084 = vmatpush1.msra.mxu0 %v510
  %1085 = vmatprep.subr.mxu0 %v513
  %1086 = vmatpush1.msra.mxu0 %v512
  %1087 = vmatprep.subr.mxu0 %v515
  %1088 = vmatpush1.msra.mxu0 %v514
  %1089 = vmatprep.subr.mxu0 %v517
  %1090 = vmatpush1.msra.mxu0 %v516
  %1091 = vmatprep.subr.mxu0 %v519
  %1092 = vmatpush1.msra.mxu0 %v518
  %1093 = vmatprep.subr.mxu0 %v521
  %1094 = vmatpush1.msra.mxu0 %v520
  %1095 = vmatprep.subr.mxu0 %v523
  %1096 = vmatpush1.msra.mxu0 %v522
  %1097 = vmatprep.subr.mxu0 %v525
  %1098 = vmatpush1.msra.mxu0 %v524
  %1099 = vmatprep.subr.mxu0 %v527
  %1100 = vmatpush1.msra.mxu0 %v526
  %1101 = vmatprep.subr.mxu0 %v529
  %1102 = vmatpush1.msra.mxu0 %v528
  %1103 = vmatprep.subr.mxu0 %v531
  %1104 = vmatpush1.msra.mxu0 %v530
  %1105 = vmatprep.subr.mxu0 %v533
  %1106 = vmatpush1.msra.mxu0 %v532
  %1107 = vmatprep.subr.mxu0 %v535
  %1108 = vmatpush1.msra.mxu0 %v534
  %1109 = vmatprep.subr.mxu0 %v537
  %1110 = vmatpush1.msra.mxu0 %v536
  %1111 = vmatprep.subr.mxu0 %v539
  %1112 = vmatpush1.msra.mxu0 %v538
  %1113 = vmatprep.subr.mxu0 %v541
  %1114 = vmatpush1.msra.mxu0 %v540
  %1115 = vmatprep.mubr.f32.mxu0 %v29
  %1116 = vmatmul.mubr.f32.gmra.mrb[0].mxu0 %v28
  %v1117 = vpop.f32.mrb[0].mxu0
  %v1118 = vadd.f32 %v1047, %v1117
  %v1119 = vpop.f32.mrb[0].mxu0
  %v1120 = vadd.f32 %v1049, %v1119
  %1121 = vdwg.mxu0
  %v1122 = vmax.f32 %v1118, 0.0
  %v1123 = vmax.f32 %v1120, 0.0
  %1124 = vst [vmem:[%s3] sm:$0xff] %v1122
  %1125 = vst [vmem:[%s3 + $0x8] sm:$0xff] %v1123
  // Predicated region
  $region14: #{_encoder_forward.8} parent=0 // pred_check
    _
  $region15: #{_encoder_forward.8} parent=0 // pred_check_branch
    %1127 = sbr.rel (0) target = $region17
  $region16: #{_encoder_forward.8} parent=0 // pred_region
    _
  $region17: #{_encoder_forward.8} parent=0 // pred_fallthru
    _
  // Predicated region
  $region18: #{_encoder_forward.8} parent=0 // pred_check
    _
  $region19: #{_encoder_forward.8} parent=0 // pred_check_branch
    %1129 = sbr.rel (0) target = $region21
  $region20: #{_encoder_forward.8} parent=0 // pred_region
    _
  $region21: #{_encoder_forward.8} parent=0 // pred_fallthru
    _

</llo_original>
